<compile_context>
chip_gen: v7x
topology: tpu7x:2x2x1
jax: 0.10.0
libtpu: 0.0.40
codegen_flags: <defaults>
</compile_context>

<pallas_src>
import functools
import math

import jax
import jax.numpy as jnp
from jax.experimental import pallas as pl
from jax.experimental.pallas import tpu as pltpu

NUM_LAYERS = 16
NUM_HEADS = 4


# ----------------------------- kernel helpers --------------------------------
def _layernorm(x, gamma, beta, eps=1e-5):
    mean = jnp.mean(x, axis=-1, keepdims=True)
    var = jnp.mean((x - mean) ** 2, axis=-1, keepdims=True)
    return (x - mean) * jax.lax.rsqrt(var + eps) * gamma + beta


# --------------------------- fused stack kernel -------------------------------
def fused_stack_kernel(x_ref, tmask_ref, kbias_ref,
                       wqkv_ref, bqkv_ref,
                       wo_ref, bo_ref, ln1g_ref, ln1b_ref,
                       w1_ref, b1_ref, w2_ref, b2_ref, ln2g_ref, ln2b_ref,
                       fng_ref, fnb_ref,
                       out_ref,
                       h_ref, mask_ref,
                       *, num_heads, apply_final_norm):
    # Grid: (batch_tiles, num_layers); layer axis is sequential ("arbitrary").
    layer = pl.program_id(1)
    last_layer = pl.num_programs(1) - 1

    bt, S, D = x_ref.shape
    rows = bt * S
    dh = D // num_heads
    scale = 1.0 / math.sqrt(dh)

    # Layer 0: initialize the VMEM-resident activation and cache the additive
    # attention mask ((S,S) tgt_mask broadcast + (bt,S) key-padding bias).
    @pl.when(layer == 0)
    def _():
        h_ref[...] = x_ref[...].reshape(rows, D).astype(jnp.float32)
        mask_ref[...] = tmask_ref[...][None, :, :] + kbias_ref[...][:, None, :]

    x = h_ref[...]                                     # (B*S, D) f32, carried

    # ----- self-attention: fused QKV projection on the flattened batch -----
    qkv = (jnp.dot(x, wqkv_ref[0], preferred_element_type=jnp.float32)
           + bqkv_ref[0])                              # (rows, 3D)
    q3 = qkv[:, 0 * D:1 * D].reshape(bt, S, D)
    k3 = qkv[:, 1 * D:2 * D].reshape(bt, S, D)
    v3 = qkv[:, 2 * D:3 * D].reshape(bt, S, D)

    mask = mask_ref[...]                               # (bt, S, S), cached

    # Per-head scores/softmax/context; single merged Wo projection afterwards.
    head_ctx = []
    for h in range(num_heads):
        sl = slice(h * dh, (h + 1) * dh)
        s = jnp.einsum('bqd,bkd->bqk', q3[:, :, sl], k3[:, :, sl],
                       preferred_element_type=jnp.float32) * scale + mask
        s = s - jnp.max(s, axis=-1, keepdims=True)
        p = jnp.exp(s)
        p = p * pl.reciprocal(jnp.sum(p, axis=-1, keepdims=True), approx=True)
        head_ctx.append(jnp.einsum('bqk,bkd->bqd', p, v3[:, :, sl],
                                   preferred_element_type=jnp.float32))
    ctx = jnp.concatenate(head_ctx, axis=-1).reshape(rows, D)
    attn = jnp.dot(ctx, wo_ref[0], preferred_element_type=jnp.float32) + bo_ref[0]

    # Residual + LayerNorm 1
    x1 = _layernorm(x + attn, ln1g_ref[0], ln1b_ref[0])

    # Feed-forward (ReLU), residual + LayerNorm 2
    h1 = jnp.maximum(
        jnp.dot(x1, w1_ref[0], preferred_element_type=jnp.float32) + b1_ref[0], 0.0)
    ff = jnp.dot(h1, w2_ref[0], preferred_element_type=jnp.float32) + b2_ref[0]
    x2 = _layernorm(x1 + ff, ln2g_ref[0], ln2b_ref[0])

    # Carry for next layer.
    h_ref[...] = x2

    # Final (optional) norm + single HBM store at the last layer.
    @pl.when(layer == last_layer)
    def _():
        y = x2
        if apply_final_norm:
            y = _layernorm(y, fng_ref[...], fnb_ref[...])
        out_ref[...] = y.reshape(bt, S, D).astype(out_ref.dtype)


# ----------------------------- full decoder stack -----------------------------
def snn_transformer_decoder(tgt, layer_params, norm_params=None,
                            tgt_mask=None, tgt_key_padding_mask=None,
                            *, num_heads=NUM_HEADS):
    """Mirrors SNNTransformerDecoder.forward.  tgt: (B, S, D) float32."""
    B, S, D = tgt.shape
    L = layer_params["wq"].shape[0]
    FF = layer_params["w1"].shape[-1]

    # Small mask components; the (B,S,S) additive mask is never put in HBM.
    tmask = (tgt_mask if tgt_mask is not None
             else jnp.zeros((S, S), jnp.float32)).astype(jnp.float32)
    if tgt_key_padding_mask is not None:       # (B, S) boolean, True = pad
        kbias = jnp.where(tgt_key_padding_mask, -1e9, 0.0).astype(jnp.float32)
    else:
        kbias = jnp.zeros((B, S), jnp.float32)

    apply_final_norm = norm_params is not None
    if apply_final_norm:
        fng, fnb = norm_params["gamma"], norm_params["beta"]
    else:
        fng = jnp.ones((1, D), jnp.float32)
        fnb = jnp.zeros((1, D), jnp.float32)

    # Fused QKV weights: one (D, 3D) matmul per layer instead of three (D, D).
    # (For a production path these would be stored pre-fused at init time.)
    wqkv = jnp.concatenate(
        [layer_params["wq"], layer_params["wk"], layer_params["wv"]], axis=-1)
    bqkv = jnp.concatenate(
        [layer_params["bq"], layer_params["bk"], layer_params["bv"]], axis=-1)

    # Whole batch folded into one block at these sizes; for large B this tile
    # becomes a leading "parallel" axis sharded across TensorCores.
    b_tile = B
    assert B % b_tile == 0
    nb = B // b_tile
    rows = b_tile * S

    kernel = functools.partial(fused_stack_kernel, num_heads=num_heads,
                               apply_final_norm=apply_final_norm)

    def wspec(shape):
        # Per-layer weight block, indexed by the layer grid axis (fetched once
        # per layer, double-buffer prefetched by the pipeline).
        return pl.BlockSpec((1,) + shape, lambda bi, l: (l,) + (0,) * len(shape))

    in_specs = [
        pl.BlockSpec((b_tile, S, D), lambda bi, l: (bi, 0, 0)),   # x
        pl.BlockSpec((S, S), lambda bi, l: (0, 0)),               # tgt_mask
        pl.BlockSpec((b_tile, S), lambda bi, l: (bi, 0)),         # key-padding bias
        wspec((D, 3 * D)), wspec((1, 3 * D)),                     # Wqkv, bqkv
        wspec((D, D)), wspec((1, D)),                             # Wo, bo
        wspec((1, D)), wspec((1, D)),                             # ln1 gamma/beta
        wspec((D, FF)), wspec((1, FF)),                           # W1, b1
        wspec((FF, D)), wspec((1, D)),                            # W2, b2
        wspec((1, D)), wspec((1, D)),                             # ln2 gamma/beta
        pl.BlockSpec((1, D), lambda bi, l: (0, 0)),               # final gamma
        pl.BlockSpec((1, D), lambda bi, l: (0, 0)),               # final beta
    ]

    return pl.pallas_call(
        kernel,
        out_shape=jax.ShapeDtypeStruct((B, S, D), tgt.dtype),
        grid=(nb, L),
        in_specs=in_specs,
        out_specs=pl.BlockSpec((b_tile, S, D), lambda bi, l: (bi, 0, 0)),
        scratch_shapes=[
            pltpu.VMEM((rows, D), jnp.float32),        # carried activation
            pltpu.VMEM((b_tile, S, S), jnp.float32),   # cached additive mask
        ],
        compiler_params=pltpu.CompilerParams(
            dimension_semantics=("parallel", "arbitrary")),
    )(tgt, tmask, kbias,
      wqkv, bqkv,
      layer_params["wo"], layer_params["bo"],
      layer_params["ln1g"], layer_params["ln1b"],
      layer_params["w1"], layer_params["b1"],
      layer_params["w2"], layer_params["b2"],
      layer_params["ln2g"], layer_params["ln2b"],
      fng, fnb)


# ----------------------------- deterministic params ---------------------------
def init_params(key, num_layers, d_model, d_ff):
    """Per-layer weights stacked along a leading layer axis."""
    def dense(k, shape, scale):
        return (scale * jax.random.normal(k, shape)).astype(jnp.float32)

    ks = jax.random.split(key, 6)
    L = num_layers
    s_attn = 1.0 / math.sqrt(d_model)
    s_ff = 1.0 / math.sqrt(d_ff)
    layer_params = {
        "wq": dense(ks[0], (L, d_model, d_model), s_attn),
        "bq": jnp.zeros((L, 1, d_model), jnp.float32),
        "wk": dense(ks[1], (L, d_model, d_model), s_attn),
        "bk": jnp.zeros((L, 1, d_model), jnp.float32),
        "wv": dense(ks[2], (L, d_model, d_model), s_attn),
        "bv": jnp.zeros((L, 1, d_model), jnp.float32),
        "wo": dense(ks[3], (L, d_model, d_model), s_attn),
        "bo": jnp.zeros((L, 1, d_model), jnp.float32),
        "ln1g": jnp.ones((L, 1, d_model), jnp.float32),
        "ln1b": jnp.zeros((L, 1, d_model), jnp.float32),
        "w1": dense(ks[4], (L, d_model, d_ff), s_attn),
        "b1": jnp.zeros((L, 1, d_ff), jnp.float32),
        "w2": dense(ks[5], (L, d_ff, d_model), s_ff),
        "b2": jnp.zeros((L, 1, d_model), jnp.float32),
        "ln2g": jnp.ones((L, 1, d_model), jnp.float32),
        "ln2b": jnp.zeros((L, 1, d_model), jnp.float32),
    }
    norm_params = {"gamma": jnp.ones((1, d_model), jnp.float32),
                   "beta": jnp.zeros((1, d_model), jnp.float32)}
    return layer_params, norm_params


# ----------------------------------- main -------------------------------------
if __name__ == "__main__":
    B, S, D, FF = 2, 8, 32, 64

    key = jax.random.PRNGKey(0)
    k_x, k_p = jax.random.split(key)

    tgt = jax.random.normal(k_x, (B, S, D), dtype=jnp.float32)      # (B, S, D)
    layer_params, norm_params = init_params(k_p, NUM_LAYERS, D, FF)

    # Causal additive mask (S, S) and a key-padding mask (B, S) (last pos of
    # batch element 1 is padding).
    causal = jnp.where(jnp.tril(jnp.ones((S, S), jnp.bool_)), 0.0, -1e9).astype(jnp.float32)
    pad = jnp.zeros((B, S), jnp.bool_).at[1, S - 1].set(True)

    # TODO(synk): the reference passes `layer_outputs` into each (unspecified)
    # decoder_layer; without its definition we do not consume it (the outer
    # module itself only appends to the list), and there is no cross-attention
    # "memory" path.

    out = snn_transformer_decoder(tgt, layer_params, norm_params,
                                  tgt_mask=causal, tgt_key_padding_mask=pad)
    out = jax.block_until_ready(out)

    assert out.shape == (B, S, D)
    assert bool(jnp.all(jnp.isfinite(out)))
    print("KERNEL_OK")
</pallas_src>

<mosaic_0001>
module attributes {stable_mosaic.version = 11 : i64} {
  func.func @fused_stack_kernel(%arg0: i32, %arg1: i32, %arg2: memref<2x8x32xf32, #tpu.memory_space<vmem>>, %arg3: memref<8x8xf32, #tpu.memory_space<vmem>>, %arg4: memref<2x8xf32, #tpu.memory_space<vmem>>, %arg5: memref<1x32x96xf32, #tpu.memory_space<vmem>>, %arg6: memref<1x1x96xf32, #tpu.memory_space<vmem>>, %arg7: memref<1x32x32xf32, #tpu.memory_space<vmem>>, %arg8: memref<1x1x32xf32, #tpu.memory_space<vmem>>, %arg9: memref<1x1x32xf32, #tpu.memory_space<vmem>>, %arg10: memref<1x1x32xf32, #tpu.memory_space<vmem>>, %arg11: memref<1x32x64xf32, #tpu.memory_space<vmem>>, %arg12: memref<1x1x64xf32, #tpu.memory_space<vmem>>, %arg13: memref<1x64x32xf32, #tpu.memory_space<vmem>>, %arg14: memref<1x1x32xf32, #tpu.memory_space<vmem>>, %arg15: memref<1x1x32xf32, #tpu.memory_space<vmem>>, %arg16: memref<1x1x32xf32, #tpu.memory_space<vmem>>, %arg17: memref<1x32xf32, #tpu.memory_space<vmem>>, %arg18: memref<1x32xf32, #tpu.memory_space<vmem>>, %arg19: memref<2x8x32xf32, #tpu.memory_space<vmem>>, %arg20: memref<16x32xf32, #tpu.memory_space<vmem>>, %arg21: memref<2x8x8xf32, #tpu.memory_space<vmem>>) attributes {dimension_semantics = [#tpu.dimension_semantics<parallel>, #tpu.dimension_semantics<arbitrary>], iteration_bounds = array<i64: 1, 16>, scalar_prefetch = 0 : i64, scratch_operands = 2 : i64, tpu.core_type = #tpu.core_type<tc>, window_params = [{transform_indices = @transform_0, window_bounds = array<i64: 2, 8, 32>}, {pipeline_mode = #tpu.pipeline_mode<synchronous>, transform_indices = @transform_1, window_bounds = array<i64: 8, 8>}, {transform_indices = @transform_2, window_bounds = array<i64: 2, 8>}, {transform_indices = @transform_3, window_bounds = array<i64: 1, 32, 96>}, {transform_indices = @transform_4, window_bounds = array<i64: 1, 1, 96>}, {transform_indices = @transform_5, window_bounds = array<i64: 1, 32, 32>}, {transform_indices = @transform_6, window_bounds = array<i64: 1, 1, 32>}, {transform_indices = @transform_7, window_bounds = array<i64: 1, 1, 32>}, {transform_indices = @transform_8, window_bounds = array<i64: 1, 1, 32>}, {transform_indices = @transform_9, window_bounds = array<i64: 1, 32, 64>}, {transform_indices = @transform_10, window_bounds = array<i64: 1, 1, 64>}, {transform_indices = @transform_11, window_bounds = array<i64: 1, 64, 32>}, {transform_indices = @transform_12, window_bounds = array<i64: 1, 1, 32>}, {transform_indices = @transform_13, window_bounds = array<i64: 1, 1, 32>}, {transform_indices = @transform_14, window_bounds = array<i64: 1, 1, 32>}, {pipeline_mode = #tpu.pipeline_mode<synchronous>, transform_indices = @transform_15, window_bounds = array<i64: 1, 32>}, {pipeline_mode = #tpu.pipeline_mode<synchronous>, transform_indices = @transform_16, window_bounds = array<i64: 1, 32>}, {transform_indices = @transform_17, window_bounds = array<i64: 2, 8, 32>}]} {
    %c0_i32 = arith.constant 0 : i32
    %0 = arith.cmpi eq, %arg1, %c0_i32 : i32
    %1 = arith.extui %0 : i1 to i32
    %c0_i32_0 = arith.constant 0 : i32
    %2 = arith.cmpi ne, %1, %c0_i32_0 : i32
    scf.if %2 {
      %c0_78 = arith.constant 0 : index
      %c0_79 = arith.constant 0 : index
      %c0_80 = arith.constant 0 : index
      %173 = vector.load %arg2[%c0_78, %c0_79, %c0_80] : memref<2x8x32xf32, #tpu.memory_space<vmem>>, vector<2x8x32xf32>
      %174 = vector.shape_cast %173 : vector<2x8x32xf32> to vector<16x32xf32>
      %c0_81 = arith.constant 0 : index
      %c0_82 = arith.constant 0 : index
      %175 = vector.load %arg20[%c0_81, %c0_82] : memref<16x32xf32, #tpu.memory_space<vmem>>, vector<16x32xf32>
      tpu.vector_store %arg20[%c0_81, %c0_82], %174 {strides = array<i32>} : memref<16x32xf32, #tpu.memory_space<vmem>>, vector<16x32xf32>,
      %c0_83 = arith.constant 0 : index
      %c0_84 = arith.constant 0 : index
      %176 = vector.load %arg3[%c0_83, %c0_84] : memref<8x8xf32, #tpu.memory_space<vmem>>, vector<8x8xf32>
      %177 = vector.shape_cast %176 : vector<8x8xf32> to vector<1x8x8xf32>
      %c0_85 = arith.constant 0 : index
      %c0_86 = arith.constant 0 : index
      %178 = vector.load %arg4[%c0_85, %c0_86] : memref<2x8xf32, #tpu.memory_space<vmem>>, vector<2x8xf32>
      %179 = vector.shape_cast %178 : vector<2x8xf32> to vector<2x1x8xf32>
      %180 = vector.broadcast %177 : vector<1x8x8xf32> to vector<2x8x8xf32>
      %181 = vector.broadcast %179 : vector<2x1x8xf32> to vector<2x8x8xf32>
      %182 = arith.addf %180, %181 : vector<2x8x8xf32>
      %c0_87 = arith.constant 0 : index
      %c0_88 = arith.constant 0 : index
      %c0_89 = arith.constant 0 : index
      %183 = vector.load %arg21[%c0_87, %c0_88, %c0_89] : memref<2x8x8xf32, #tpu.memory_space<vmem>>, vector<2x8x8xf32>
      tpu.vector_store %arg21[%c0_87, %c0_88, %c0_89], %182 {strides = array<i32>} : memref<2x8x8xf32, #tpu.memory_space<vmem>>, vector<2x8x8xf32>,
    } else {
    }
    %c0 = arith.constant 0 : index
    %c0_1 = arith.constant 0 : index
    %3 = vector.load %arg20[%c0, %c0_1] : memref<16x32xf32, #tpu.memory_space<vmem>>, vector<16x32xf32>
    %c0_2 = arith.constant 0 : index
    %c0_3 = arith.constant 0 : index
    %c0_4 = arith.constant 0 : index
    %4 = vector.load %arg5[%c0_2, %c0_3, %c0_4] : memref<1x32x96xf32, #tpu.memory_space<vmem>>, vector<1x32x96xf32>
    %5 = vector.shape_cast %4 : vector<1x32x96xf32> to vector<32x96xf32>
    %cst = arith.constant dense<0.000000e+00> : vector<16x96xf32>
    %6 = tpu.matmul %3, %5, %cst {dimension_numbers = #tpu.dot_dimension_numbers<[1], [0], [0], [1], [0, 0, 1, 1], [], []>} : vector<16x32xf32>, vector<32x96xf32>, vector<16x96xf32> -> vector<16x96xf32>
    %c0_5 = arith.constant 0 : index
    %c0_6 = arith.constant 0 : index
    %c0_7 = arith.constant 0 : index
    %7 = vector.load %arg6[%c0_5, %c0_6, %c0_7] : memref<1x1x96xf32, #tpu.memory_space<vmem>>, vector<1x1x96xf32>
    %8 = vector.shape_cast %7 : vector<1x1x96xf32> to vector<1x96xf32>
    %9 = vector.broadcast %8 : vector<1x96xf32> to vector<16x96xf32>
    %10 = arith.addf %6, %9 : vector<16x96xf32>
    %11 = vector.extract_strided_slice %10 {offsets = [0, 0], sizes = [16, 32], strides = [1, 1]} : vector<16x96xf32> to vector<16x32xf32>
    %12 = vector.shape_cast %11 : vector<16x32xf32> to vector<2x8x32xf32>
    %13 = vector.extract_strided_slice %10 {offsets = [0, 32], sizes = [16, 32], strides = [1, 1]} : vector<16x96xf32> to vector<16x32xf32>
    %14 = vector.shape_cast %13 : vector<16x32xf32> to vector<2x8x32xf32>
    %15 = vector.extract_strided_slice %10 {offsets = [0, 64], sizes = [16, 32], strides = [1, 1]} : vector<16x96xf32> to vector<16x32xf32>
    %16 = vector.shape_cast %15 : vector<16x32xf32> to vector<2x8x32xf32>
    %c0_8 = arith.constant 0 : index
    %c0_9 = arith.constant 0 : index
    %c0_10 = arith.constant 0 : index
    %17 = vector.load %arg21[%c0_8, %c0_9, %c0_10] : memref<2x8x8xf32, #tpu.memory_space<vmem>>, vector<2x8x8xf32>
    %18 = vector.extract_strided_slice %12 {offsets = [0, 0, 0], sizes = [2, 8, 8], strides = [1, 1, 1]} : vector<2x8x32xf32> to vector<2x8x8xf32>
    %19 = vector.extract_strided_slice %14 {offsets = [0, 0, 0], sizes = [2, 8, 8], strides = [1, 1, 1]} : vector<2x8x32xf32> to vector<2x8x8xf32>
    "tpu.trace_start"() <{level = 10 : i32, message = "bqd,bkd->bqk"}> : () -> ()
    %cst_11 = arith.constant dense<0.000000e+00> : vector<2x8x8xf32>
    %20 = tpu.matmul %18, %19, %cst_11 {dimension_numbers = #tpu.dot_dimension_numbers<[2], [2], [1], [1], [0, 0, 0, 1, 1, 1], [0], [0]>} : vector<2x8x8xf32>, vector<2x8x8xf32>, vector<2x8x8xf32> -> vector<2x8x8xf32>
    "tpu.trace_stop"() : () -> ()
    %cst_12 = arith.constant 0.353553385 : f32
    %21 = vector.broadcast %cst_12 : f32 to vector<2x8x8xf32>
    %22 = arith.mulf %20, %21 : vector<2x8x8xf32>
    %23 = arith.addf %22, %17 : vector<2x8x8xf32>
    %cst_13 = arith.constant dense<0xFF800000> : vector<2x8xf32>
    %24 = vector.multi_reduction <maximumf>, %23, %cst_13 [2] : vector<2x8x8xf32> to vector<2x8xf32>
    %25 = vector.shape_cast %24 : vector<2x8xf32> to vector<2x8x1xf32>
    %26 = vector.broadcast %25 : vector<2x8x1xf32> to vector<2x8x8xf32>
    %27 = arith.subf %23, %26 : vector<2x8x8xf32>
    %28 = math.exp %27 : vector<2x8x8xf32>
    %cst_14 = arith.constant dense<0.000000e+00> : vector<2x8xf32>
    %29 = vector.multi_reduction <add>, %28, %cst_14 [2] : vector<2x8x8xf32> to vector<2x8xf32>
    %30 = vector.shape_cast %29 : vector<2x8xf32> to vector<2x8x1xf32>
    %31 = tpu.reciprocal %30 {approx = true} : vector<2x8x1xf32> -> vector<2x8x1xf32>
    %32 = vector.broadcast %31 : vector<2x8x1xf32> to vector<2x8x8xf32>
    %33 = arith.mulf %28, %32 : vector<2x8x8xf32>
    %34 = vector.extract_strided_slice %16 {offsets = [0, 0, 0], sizes = [2, 8, 8], strides = [1, 1, 1]} : vector<2x8x32xf32> to vector<2x8x8xf32>
    "tpu.trace_start"() <{level = 10 : i32, message = "bqk,bkd->bqd"}> : () -> ()
    %cst_15 = arith.constant dense<0.000000e+00> : vector<2x8x8xf32>
    %35 = tpu.matmul %33, %34, %cst_15 {dimension_numbers = #tpu.dot_dimension_numbers<[2], [1], [1], [2], [0, 0, 0, 1, 1, 2], [0], [0]>} : vector<2x8x8xf32>, vector<2x8x8xf32>, vector<2x8x8xf32> -> vector<2x8x8xf32>
    "tpu.trace_stop"() : () -> ()
    %36 = vector.extract_strided_slice %12 {offsets = [0, 0, 8], sizes = [2, 8, 8], strides = [1, 1, 1]} : vector<2x8x32xf32> to vector<2x8x8xf32>
    %37 = vector.extract_strided_slice %14 {offsets = [0, 0, 8], sizes = [2, 8, 8], strides = [1, 1, 1]} : vector<2x8x32xf32> to vector<2x8x8xf32>
    "tpu.trace_start"() <{level = 10 : i32, message = "bqd,bkd->bqk"}> : () -> ()
    %cst_16 = arith.constant dense<0.000000e+00> : vector<2x8x8xf32>
    %38 = tpu.matmul %36, %37, %cst_16 {dimension_numbers = #tpu.dot_dimension_numbers<[2], [2], [1], [1], [0, 0, 0, 1, 1, 1], [0], [0]>} : vector<2x8x8xf32>, vector<2x8x8xf32>, vector<2x8x8xf32> -> vector<2x8x8xf32>
    "tpu.trace_stop"() : () -> ()
    %cst_17 = arith.constant 0.353553385 : f32
    %39 = vector.broadcast %cst_17 : f32 to vector<2x8x8xf32>
    %40 = arith.mulf %38, %39 : vector<2x8x8xf32>
    %41 = arith.addf %40, %17 : vector<2x8x8xf32>
    %cst_18 = arith.constant dense<0xFF800000> : vector<2x8xf32>
    %42 = vector.multi_reduction <maximumf>, %41, %cst_18 [2] : vector<2x8x8xf32> to vector<2x8xf32>
    %43 = vector.shape_cast %42 : vector<2x8xf32> to vector<2x8x1xf32>
    %44 = vector.broadcast %43 : vector<2x8x1xf32> to vector<2x8x8xf32>
    %45 = arith.subf %41, %44 : vector<2x8x8xf32>
    %46 = math.exp %45 : vector<2x8x8xf32>
    %cst_19 = arith.constant dense<0.000000e+00> : vector<2x8xf32>
    %47 = vector.multi_reduction <add>, %46, %cst_19 [2] : vector<2x8x8xf32> to vector<2x8xf32>
    %48 = vector.shape_cast %47 : vector<2x8xf32> to vector<2x8x1xf32>
    %49 = tpu.reciprocal %48 {approx = true} : vector<2x8x1xf32> -> vector<2x8x1xf32>
    %50 = vector.broadcast %49 : vector<2x8x1xf32> to vector<2x8x8xf32>
    %51 = arith.mulf %46, %50 : vector<2x8x8xf32>
    %52 = vector.extract_strided_slice %16 {offsets = [0, 0, 8], sizes = [2, 8, 8], strides = [1, 1, 1]} : vector<2x8x32xf32> to vector<2x8x8xf32>
    "tpu.trace_start"() <{level = 10 : i32, message = "bqk,bkd->bqd"}> : () -> ()
    %cst_20 = arith.constant dense<0.000000e+00> : vector<2x8x8xf32>
    %53 = tpu.matmul %51, %52, %cst_20 {dimension_numbers = #tpu.dot_dimension_numbers<[2], [1], [1], [2], [0, 0, 0, 1, 1, 2], [0], [0]>} : vector<2x8x8xf32>, vector<2x8x8xf32>, vector<2x8x8xf32> -> vector<2x8x8xf32>
    "tpu.trace_stop"() : () -> ()
    %54 = vector.extract_strided_slice %12 {offsets = [0, 0, 16], sizes = [2, 8, 8], strides = [1, 1, 1]} : vector<2x8x32xf32> to vector<2x8x8xf32>
    %55 = vector.extract_strided_slice %14 {offsets = [0, 0, 16], sizes = [2, 8, 8], strides = [1, 1, 1]} : vector<2x8x32xf32> to vector<2x8x8xf32>
    "tpu.trace_start"() <{level = 10 : i32, message = "bqd,bkd->bqk"}> : () -> ()
    %cst_21 = arith.constant dense<0.000000e+00> : vector<2x8x8xf32>
    %56 = tpu.matmul %54, %55, %cst_21 {dimension_numbers = #tpu.dot_dimension_numbers<[2], [2], [1], [1], [0, 0, 0, 1, 1, 1], [0], [0]>} : vector<2x8x8xf32>, vector<2x8x8xf32>, vector<2x8x8xf32> -> vector<2x8x8xf32>
    "tpu.trace_stop"() : () -> ()
    %cst_22 = arith.constant 0.353553385 : f32
    %57 = vector.broadcast %cst_22 : f32 to vector<2x8x8xf32>
    %58 = arith.mulf %56, %57 : vector<2x8x8xf32>
    %59 = arith.addf %58, %17 : vector<2x8x8xf32>
    %cst_23 = arith.constant dense<0xFF800000> : vector<2x8xf32>
    %60 = vector.multi_reduction <maximumf>, %59, %cst_23 [2] : vector<2x8x8xf32> to vector<2x8xf32>
    %61 = vector.shape_cast %60 : vector<2x8xf32> to vector<2x8x1xf32>
    %62 = vector.broadcast %61 : vector<2x8x1xf32> to vector<2x8x8xf32>
    %63 = arith.subf %59, %62 : vector<2x8x8xf32>
    %64 = math.exp %63 : vector<2x8x8xf32>
    %cst_24 = arith.constant dense<0.000000e+00> : vector<2x8xf32>
    %65 = vector.multi_reduction <add>, %64, %cst_24 [2] : vector<2x8x8xf32> to vector<2x8xf32>
    %66 = vector.shape_cast %65 : vector<2x8xf32> to vector<2x8x1xf32>
    %67 = tpu.reciprocal %66 {approx = true} : vector<2x8x1xf32> -> vector<2x8x1xf32>
    %68 = vector.broadcast %67 : vector<2x8x1xf32> to vector<2x8x8xf32>
    %69 = arith.mulf %64, %68 : vector<2x8x8xf32>
    %70 = vector.extract_strided_slice %16 {offsets = [0, 0, 16], sizes = [2, 8, 8], strides = [1, 1, 1]} : vector<2x8x32xf32> to vector<2x8x8xf32>
    "tpu.trace_start"() <{level = 10 : i32, message = "bqk,bkd->bqd"}> : () -> ()
    %cst_25 = arith.constant dense<0.000000e+00> : vector<2x8x8xf32>
    %71 = tpu.matmul %69, %70, %cst_25 {dimension_numbers = #tpu.dot_dimension_numbers<[2], [1], [1], [2], [0, 0, 0, 1, 1, 2], [0], [0]>} : vector<2x8x8xf32>, vector<2x8x8xf32>, vector<2x8x8xf32> -> vector<2x8x8xf32>
    "tpu.trace_stop"() : () -> ()
    %72 = vector.extract_strided_slice %12 {offsets = [0, 0, 24], sizes = [2, 8, 8], strides = [1, 1, 1]} : vector<2x8x32xf32> to vector<2x8x8xf32>
    %73 = vector.extract_strided_slice %14 {offsets = [0, 0, 24], sizes = [2, 8, 8], strides = [1, 1, 1]} : vector<2x8x32xf32> to vector<2x8x8xf32>
    "tpu.trace_start"() <{level = 10 : i32, message = "bqd,bkd->bqk"}> : () -> ()
    %cst_26 = arith.constant dense<0.000000e+00> : vector<2x8x8xf32>
    %74 = tpu.matmul %72, %73, %cst_26 {dimension_numbers = #tpu.dot_dimension_numbers<[2], [2], [1], [1], [0, 0, 0, 1, 1, 1], [0], [0]>} : vector<2x8x8xf32>, vector<2x8x8xf32>, vector<2x8x8xf32> -> vector<2x8x8xf32>
    "tpu.trace_stop"() : () -> ()
    %cst_27 = arith.constant 0.353553385 : f32
    %75 = vector.broadcast %cst_27 : f32 to vector<2x8x8xf32>
    %76 = arith.mulf %74, %75 : vector<2x8x8xf32>
    %77 = arith.addf %76, %17 : vector<2x8x8xf32>
    %cst_28 = arith.constant dense<0xFF800000> : vector<2x8xf32>
    %78 = vector.multi_reduction <maximumf>, %77, %cst_28 [2] : vector<2x8x8xf32> to vector<2x8xf32>
    %79 = vector.shape_cast %78 : vector<2x8xf32> to vector<2x8x1xf32>
    %80 = vector.broadcast %79 : vector<2x8x1xf32> to vector<2x8x8xf32>
    %81 = arith.subf %77, %80 : vector<2x8x8xf32>
    %82 = math.exp %81 : vector<2x8x8xf32>
    %cst_29 = arith.constant dense<0.000000e+00> : vector<2x8xf32>
    %83 = vector.multi_reduction <add>, %82, %cst_29 [2] : vector<2x8x8xf32> to vector<2x8xf32>
    %84 = vector.shape_cast %83 : vector<2x8xf32> to vector<2x8x1xf32>
    %85 = tpu.reciprocal %84 {approx = true} : vector<2x8x1xf32> -> vector<2x8x1xf32>
    %86 = vector.broadcast %85 : vector<2x8x1xf32> to vector<2x8x8xf32>
    %87 = arith.mulf %82, %86 : vector<2x8x8xf32>
    %88 = vector.extract_strided_slice %16 {offsets = [0, 0, 24], sizes = [2, 8, 8], strides = [1, 1, 1]} : vector<2x8x32xf32> to vector<2x8x8xf32>
    "tpu.trace_start"() <{level = 10 : i32, message = "bqk,bkd->bqd"}> : () -> ()
    %cst_30 = arith.constant dense<0.000000e+00> : vector<2x8x8xf32>
    %89 = tpu.matmul %87, %88, %cst_30 {dimension_numbers = #tpu.dot_dimension_numbers<[2], [1], [1], [2], [0, 0, 0, 1, 1, 2], [0], [0]>} : vector<2x8x8xf32>, vector<2x8x8xf32>, vector<2x8x8xf32> -> vector<2x8x8xf32>
    "tpu.trace_stop"() : () -> ()
    %90 = tpu.concatenate %35, %53, %71, %89 in 2 : vector<2x8x8xf32>, vector<2x8x8xf32>, vector<2x8x8xf32>, vector<2x8x8xf32> -> vector<2x8x32xf32>
    %91 = vector.shape_cast %90 : vector<2x8x32xf32> to vector<16x32xf32>
    %c0_31 = arith.constant 0 : index
    %c0_32 = arith.constant 0 : index
    %c0_33 = arith.constant 0 : index
    %92 = vector.load %arg7[%c0_31, %c0_32, %c0_33] : memref<1x32x32xf32, #tpu.memory_space<vmem>>, vector<1x32x32xf32>
    %93 = vector.shape_cast %92 : vector<1x32x32xf32> to vector<32x32xf32>
    %cst_34 = arith.constant dense<0.000000e+00> : vector<16x32xf32>
    %94 = tpu.matmul %91, %93, %cst_34 {dimension_numbers = #tpu.dot_dimension_numbers<[1], [0], [0], [1], [0, 0, 1, 1], [], []>} : vector<16x32xf32>, vector<32x32xf32>, vector<16x32xf32> -> vector<16x32xf32>
    %c0_35 = arith.constant 0 : index
    %c0_36 = arith.constant 0 : index
    %c0_37 = arith.constant 0 : index
    %95 = vector.load %arg8[%c0_35, %c0_36, %c0_37] : memref<1x1x32xf32, #tpu.memory_space<vmem>>, vector<1x1x32xf32>
    %96 = vector.shape_cast %95 : vector<1x1x32xf32> to vector<1x32xf32>
    %97 = vector.broadcast %96 : vector<1x32xf32> to vector<16x32xf32>
    %98 = arith.addf %94, %97 : vector<16x32xf32>
    %99 = arith.addf %3, %98 : vector<16x32xf32>
    %c0_38 = arith.constant 0 : index
    %c0_39 = arith.constant 0 : index
    %c0_40 = arith.constant 0 : index
    %100 = vector.load %arg9[%c0_38, %c0_39, %c0_40] : memref<1x1x32xf32, #tpu.memory_space<vmem>>, vector<1x1x32xf32>
    %101 = vector.shape_cast %100 : vector<1x1x32xf32> to vector<1x32xf32>
    %c0_41 = arith.constant 0 : index
    %c0_42 = arith.constant 0 : index
    %c0_43 = arith.constant 0 : index
    %102 = vector.load %arg10[%c0_41, %c0_42, %c0_43] : memref<1x1x32xf32, #tpu.memory_space<vmem>>, vector<1x1x32xf32>
    %103 = vector.shape_cast %102 : vector<1x1x32xf32> to vector<1x32xf32>
    %cst_44 = arith.constant dense<0.000000e+00> : vector<16xf32>
    %104 = vector.multi_reduction <add>, %99, %cst_44 [1] : vector<16x32xf32> to vector<16xf32>
    %105 = vector.shape_cast %104 : vector<16xf32> to vector<16x1xf32>
    %cst_45 = arith.constant 3.200000e+01 : f32
    %106 = vector.broadcast %cst_45 : f32 to vector<16x1xf32>
    %107 = arith.divf %105, %106 : vector<16x1xf32>
    %108 = vector.broadcast %107 : vector<16x1xf32> to vector<16x32xf32>
    %109 = arith.subf %99, %108 : vector<16x32xf32>
    %110 = arith.mulf %109, %109 : vector<16x32xf32>
    %cst_46 = arith.constant dense<0.000000e+00> : vector<16xf32>
    %111 = vector.multi_reduction <add>, %110, %cst_46 [1] : vector<16x32xf32> to vector<16xf32>
    %112 = vector.shape_cast %111 : vector<16xf32> to vector<16x1xf32>
    %cst_47 = arith.constant 3.200000e+01 : f32
    %113 = vector.broadcast %cst_47 : f32 to vector<16x1xf32>
    %114 = arith.divf %112, %113 : vector<16x1xf32>
    %115 = vector.broadcast %107 : vector<16x1xf32> to vector<16x32xf32>
    %116 = arith.subf %99, %115 : vector<16x32xf32>
    %cst_48 = arith.constant 9.99999974E-6 : f32
    %117 = vector.broadcast %cst_48 : f32 to vector<16x1xf32>
    %118 = arith.addf %114, %117 : vector<16x1xf32>
    %119 = math.rsqrt %118 : vector<16x1xf32>
    %120 = vector.broadcast %119 : vector<16x1xf32> to vector<16x32xf32>
    %121 = arith.mulf %116, %120 : vector<16x32xf32>
    %122 = vector.broadcast %101 : vector<1x32xf32> to vector<16x32xf32>
    %123 = arith.mulf %121, %122 : vector<16x32xf32>
    %124 = vector.broadcast %103 : vector<1x32xf32> to vector<16x32xf32>
    %125 = arith.addf %123, %124 : vector<16x32xf32>
    %c0_49 = arith.constant 0 : index
    %c0_50 = arith.constant 0 : index
    %c0_51 = arith.constant 0 : index
    %126 = vector.load %arg11[%c0_49, %c0_50, %c0_51] : memref<1x32x64xf32, #tpu.memory_space<vmem>>, vector<1x32x64xf32>
    %127 = vector.shape_cast %126 : vector<1x32x64xf32> to vector<32x64xf32>
    %cst_52 = arith.constant dense<0.000000e+00> : vector<16x64xf32>
    %128 = tpu.matmul %125, %127, %cst_52 {dimension_numbers = #tpu.dot_dimension_numbers<[1], [0], [0], [1], [0, 0, 1, 1], [], []>} : vector<16x32xf32>, vector<32x64xf32>, vector<16x64xf32> -> vector<16x64xf32>
    %c0_53 = arith.constant 0 : index
    %c0_54 = arith.constant 0 : index
    %c0_55 = arith.constant 0 : index
    %129 = vector.load %arg12[%c0_53, %c0_54, %c0_55] : memref<1x1x64xf32, #tpu.memory_space<vmem>>, vector<1x1x64xf32>
    %130 = vector.shape_cast %129 : vector<1x1x64xf32> to vector<1x64xf32>
    %131 = vector.broadcast %130 : vector<1x64xf32> to vector<16x64xf32>
    %132 = arith.addf %128, %131 : vector<16x64xf32>
    %cst_56 = arith.constant 0.000000e+00 : f32
    %133 = vector.broadcast %cst_56 : f32 to vector<16x64xf32>
    %134 = arith.maximumf %132, %133 : vector<16x64xf32>
    %c0_57 = arith.constant 0 : index
    %c0_58 = arith.constant 0 : index
    %c0_59 = arith.constant 0 : index
    %135 = vector.load %arg13[%c0_57, %c0_58, %c0_59] : memref<1x64x32xf32, #tpu.memory_space<vmem>>, vector<1x64x32xf32>
    %136 = vector.shape_cast %135 : vector<1x64x32xf32> to vector<64x32xf32>
    %cst_60 = arith.constant dense<0.000000e+00> : vector<16x32xf32>
    %137 = tpu.matmul %134, %136, %cst_60 {dimension_numbers = #tpu.dot_dimension_numbers<[1], [0], [0], [1], [0, 0, 1, 1], [], []>} : vector<16x64xf32>, vector<64x32xf32>, vector<16x32xf32> -> vector<16x32xf32>
    %c0_61 = arith.constant 0 : index
    %c0_62 = arith.constant 0 : index
    %c0_63 = arith.constant 0 : index
    %138 = vector.load %arg14[%c0_61, %c0_62, %c0_63] : memref<1x1x32xf32, #tpu.memory_space<vmem>>, vector<1x1x32xf32>
    %139 = vector.shape_cast %138 : vector<1x1x32xf32> to vector<1x32xf32>
    %140 = vector.broadcast %139 : vector<1x32xf32> to vector<16x32xf32>
    %141 = arith.addf %137, %140 : vector<16x32xf32>
    %142 = arith.addf %125, %141 : vector<16x32xf32>
    %c0_64 = arith.constant 0 : index
    %c0_65 = arith.constant 0 : index
    %c0_66 = arith.constant 0 : index
    %143 = vector.load %arg15[%c0_64, %c0_65, %c0_66] : memref<1x1x32xf32, #tpu.memory_space<vmem>>, vector<1x1x32xf32>
    %144 = vector.shape_cast %143 : vector<1x1x32xf32> to vector<1x32xf32>
    %c0_67 = arith.constant 0 : index
    %c0_68 = arith.constant 0 : index
    %c0_69 = arith.constant 0 : index
    %145 = vector.load %arg16[%c0_67, %c0_68, %c0_69] : memref<1x1x32xf32, #tpu.memory_space<vmem>>, vector<1x1x32xf32>
    %146 = vector.shape_cast %145 : vector<1x1x32xf32> to vector<1x32xf32>
    %cst_70 = arith.constant dense<0.000000e+00> : vector<16xf32>
    %147 = vector.multi_reduction <add>, %142, %cst_70 [1] : vector<16x32xf32> to vector<16xf32>
    %148 = vector.shape_cast %147 : vector<16xf32> to vector<16x1xf32>
    %cst_71 = arith.constant 3.200000e+01 : f32
    %149 = vector.broadcast %cst_71 : f32 to vector<16x1xf32>
    %150 = arith.divf %148, %149 : vector<16x1xf32>
    %151 = vector.broadcast %150 : vector<16x1xf32> to vector<16x32xf32>
    %152 = arith.subf %142, %151 : vector<16x32xf32>
    %153 = arith.mulf %152, %152 : vector<16x32xf32>
    %cst_72 = arith.constant dense<0.000000e+00> : vector<16xf32>
    %154 = vector.multi_reduction <add>, %153, %cst_72 [1] : vector<16x32xf32> to vector<16xf32>
    %155 = vector.shape_cast %154 : vector<16xf32> to vector<16x1xf32>
    %cst_73 = arith.constant 3.200000e+01 : f32
    %156 = vector.broadcast %cst_73 : f32 to vector<16x1xf32>
    %157 = arith.divf %155, %156 : vector<16x1xf32>
    %158 = vector.broadcast %150 : vector<16x1xf32> to vector<16x32xf32>
    %159 = arith.subf %142, %158 : vector<16x32xf32>
    %cst_74 = arith.constant 9.99999974E-6 : f32
    %160 = vector.broadcast %cst_74 : f32 to vector<16x1xf32>
    %161 = arith.addf %157, %160 : vector<16x1xf32>
    %162 = math.rsqrt %161 : vector<16x1xf32>
    %163 = vector.broadcast %162 : vector<16x1xf32> to vector<16x32xf32>
    %164 = arith.mulf %159, %163 : vector<16x32xf32>
    %165 = vector.broadcast %144 : vector<1x32xf32> to vector<16x32xf32>
    %166 = arith.mulf %164, %165 : vector<16x32xf32>
    %167 = vector.broadcast %146 : vector<1x32xf32> to vector<16x32xf32>
    %168 = arith.addf %166, %167 : vector<16x32xf32>
    %c0_75 = arith.constant 0 : index
    %c0_76 = arith.constant 0 : index
    %169 = vector.load %arg20[%c0_75, %c0_76] : memref<16x32xf32, #tpu.memory_space<vmem>>, vector<16x32xf32>
    tpu.vector_store %arg20[%c0_75, %c0_76], %168 {strides = array<i32>} : memref<16x32xf32, #tpu.memory_space<vmem>>, vector<16x32xf32>,
    %c15_i32 = arith.constant 15 : i32
    %170 = arith.cmpi eq, %arg1, %c15_i32 : i32
    %171 = arith.extui %170 : i1 to i32
    %c0_i32_77 = arith.constant 0 : i32
    %172 = arith.cmpi ne, %171, %c0_i32_77 : i32
    scf.if %172 {
      %c0_78 = arith.constant 0 : index
      %c0_79 = arith.constant 0 : index
      %173 = vector.load %arg17[%c0_78, %c0_79] : memref<1x32xf32, #tpu.memory_space<vmem>>, vector<1x32xf32>
      %c0_80 = arith.constant 0 : index
      %c0_81 = arith.constant 0 : index
      %174 = vector.load %arg18[%c0_80, %c0_81] : memref<1x32xf32, #tpu.memory_space<vmem>>, vector<1x32xf32>
      %cst_82 = arith.constant dense<0.000000e+00> : vector<16xf32>
      %175 = vector.multi_reduction <add>, %168, %cst_82 [1] : vector<16x32xf32> to vector<16xf32>
      %176 = vector.shape_cast %175 : vector<16xf32> to vector<16x1xf32>
      %cst_83 = arith.constant 3.200000e+01 : f32
      %177 = vector.broadcast %cst_83 : f32 to vector<16x1xf32>
      %178 = arith.divf %176, %177 : vector<16x1xf32>
      %179 = vector.broadcast %178 : vector<16x1xf32> to vector<16x32xf32>
      %180 = arith.subf %168, %179 : vector<16x32xf32>
      %181 = arith.mulf %180, %180 : vector<16x32xf32>
      %cst_84 = arith.constant dense<0.000000e+00> : vector<16xf32>
      %182 = vector.multi_reduction <add>, %181, %cst_84 [1] : vector<16x32xf32> to vector<16xf32>
      %183 = vector.shape_cast %182 : vector<16xf32> to vector<16x1xf32>
      %cst_85 = arith.constant 3.200000e+01 : f32
      %184 = vector.broadcast %cst_85 : f32 to vector<16x1xf32>
      %185 = arith.divf %183, %184 : vector<16x1xf32>
      %186 = vector.broadcast %178 : vector<16x1xf32> to vector<16x32xf32>
      %187 = arith.subf %168, %186 : vector<16x32xf32>
      %cst_86 = arith.constant 9.99999974E-6 : f32
      %188 = vector.broadcast %cst_86 : f32 to vector<16x1xf32>
      %189 = arith.addf %185, %188 : vector<16x1xf32>
      %190 = math.rsqrt %189 : vector<16x1xf32>
      %191 = vector.broadcast %190 : vector<16x1xf32> to vector<16x32xf32>
      %192 = arith.mulf %187, %191 : vector<16x32xf32>
      %193 = vector.broadcast %173 : vector<1x32xf32> to vector<16x32xf32>
      %194 = arith.mulf %192, %193 : vector<16x32xf32>
      %195 = vector.broadcast %174 : vector<1x32xf32> to vector<16x32xf32>
      %196 = arith.addf %194, %195 : vector<16x32xf32>
      %197 = vector.shape_cast %196 : vector<16x32xf32> to vector<2x8x32xf32>
      %c0_87 = arith.constant 0 : index
      %c0_88 = arith.constant 0 : index
      %c0_89 = arith.constant 0 : index
      %198 = vector.load %arg19[%c0_87, %c0_88, %c0_89] : memref<2x8x32xf32, #tpu.memory_space<vmem>>, vector<2x8x32xf32>
      tpu.vector_store %arg19[%c0_87, %c0_88, %c0_89], %197 {strides = array<i32>} : memref<2x8x32xf32, #tpu.memory_space<vmem>>, vector<2x8x32xf32>,
    } else {
    }
    return
  }
  func.func @transform_0(%arg0: i32, %arg1: i32) -> (i32, i32, i32) {
    %c0_i32 = arith.constant 0 : i32
    %c0_i32_0 = arith.constant 0 : i32
    %c0_i32_1 = arith.constant 0 : i32
    return %arg0, %c0_i32, %c0_i32_0 : i32, i32, i32
  }
  func.func @transform_1(%arg0: i32, %arg1: i32) -> (i32, i32) {
    %c0_i32 = arith.constant 0 : i32
    %c0_i32_0 = arith.constant 0 : i32
    %c0_i32_1 = arith.constant 0 : i32
    return %c0_i32, %c0_i32_0 : i32, i32
  }
  func.func @transform_2(%arg0: i32, %arg1: i32) -> (i32, i32) {
    %c0_i32 = arith.constant 0 : i32
    %c0_i32_0 = arith.constant 0 : i32
    return %arg0, %c0_i32 : i32, i32
  }
  func.func @transform_3(%arg0: i32, %arg1: i32) -> (i32, i32, i32) {
    %c0_i32 = arith.constant 0 : i32
    %c0_i32_0 = arith.constant 0 : i32
    %c0_i32_1 = arith.constant 0 : i32
    return %arg1, %c0_i32, %c0_i32_0 : i32, i32, i32
  }
  func.func @transform_4(%arg0: i32, %arg1: i32) -> (i32, i32, i32) {
    %c0_i32 = arith.constant 0 : i32
    %c0_i32_0 = arith.constant 0 : i32
    %c0_i32_1 = arith.constant 0 : i32
    return %arg1, %c0_i32, %c0_i32_0 : i32, i32, i32
  }
  func.func @transform_5(%arg0: i32, %arg1: i32) -> (i32, i32, i32) {
    %c0_i32 = arith.constant 0 : i32
    %c0_i32_0 = arith.constant 0 : i32
    %c0_i32_1 = arith.constant 0 : i32
    return %arg1, %c0_i32, %c0_i32_0 : i32, i32, i32
  }
  func.func @transform_6(%arg0: i32, %arg1: i32) -> (i32, i32, i32) {
    %c0_i32 = arith.constant 0 : i32
    %c0_i32_0 = arith.constant 0 : i32
    %c0_i32_1 = arith.constant 0 : i32
    return %arg1, %c0_i32, %c0_i32_0 : i32, i32, i32
  }
  func.func @transform_7(%arg0: i32, %arg1: i32) -> (i32, i32, i32) {
    %c0_i32 = arith.constant 0 : i32
    %c0_i32_0 = arith.constant 0 : i32
    %c0_i32_1 = arith.constant 0 : i32
    return %arg1, %c0_i32, %c0_i32_0 : i32, i32, i32
  }
  func.func @transform_8(%arg0: i32, %arg1: i32) -> (i32, i32, i32) {
    %c0_i32 = arith.constant 0 : i32
    %c0_i32_0 = arith.constant 0 : i32
    %c0_i32_1 = arith.constant 0 : i32
    return %arg1, %c0_i32, %c0_i32_0 : i32, i32, i32
  }
  func.func @transform_9(%arg0: i32, %arg1: i32) -> (i32, i32, i32) {
    %c0_i32 = arith.constant 0 : i32
    %c0_i32_0 = arith.constant 0 : i32
    %c0_i32_1 = arith.constant 0 : i32
    return %arg1, %c0_i32, %c0_i32_0 : i32, i32, i32
  }
  func.func @transform_10(%arg0: i32, %arg1: i32) -> (i32, i32, i32) {
    %c0_i32 = arith.constant 0 : i32
    %c0_i32_0 = arith.constant 0 : i32
    %c0_i32_1 = arith.constant 0 : i32
    return %arg1, %c0_i32, %c0_i32_0 : i32, i32, i32
  }
  func.func @transform_11(%arg0: i32, %arg1: i32) -> (i32, i32, i32) {
    %c0_i32 = arith.constant 0 : i32
    %c0_i32_0 = arith.constant 0 : i32
    %c0_i32_1 = arith.constant 0 : i32
    return %arg1, %c0_i32, %c0_i32_0 : i32, i32, i32
  }
  func.func @transform_12(%arg0: i32, %arg1: i32) -> (i32, i32, i32) {
    %c0_i32 = arith.constant 0 : i32
    %c0_i32_0 = arith.constant 0 : i32
    %c0_i32_1 = arith.constant 0 : i32
    return %arg1, %c0_i32, %c0_i32_0 : i32, i32, i32
  }
  func.func @transform_13(%arg0: i32, %arg1: i32) -> (i32, i32, i32) {
    %c0_i32 = arith.constant 0 : i32
    %c0_i32_0 = arith.constant 0 : i32
    %c0_i32_1 = arith.constant 0 : i32
    return %arg1, %c0_i32, %c0_i32_0 : i32, i32, i32
  }
  func.func @transform_14(%arg0: i32, %arg1: i32) -> (i32, i32, i32) {
    %c0_i32 = arith.constant 0 : i32
    %c0_i32_0 = arith.constant 0 : i32
    %c0_i32_1 = arith.constant 0 : i32
    return %arg1, %c0_i32, %c0_i32_0 : i32, i32, i32
  }
  func.func @transform_15(%arg0: i32, %arg1: i32) -> (i32, i32) {
    %c0_i32 = arith.constant 0 : i32
    %c0_i32_0 = arith.constant 0 : i32
    %c0_i32_1 = arith.constant 0 : i32
    return %c0_i32, %c0_i32_0 : i32, i32
  }
  func.func @transform_16(%arg0: i32, %arg1: i32) -> (i32, i32) {
    %c0_i32 = arith.constant 0 : i32
    %c0_i32_0 = arith.constant 0 : i32
    %c0_i32_1 = arith.constant 0 : i32
    return %c0_i32, %c0_i32_0 : i32, i32
  }
  func.func @transform_17(%arg0: i32, %arg1: i32) -> (i32, i32, i32) {
    %c0_i32 = arith.constant 0 : i32
    %c0_i32_0 = arith.constant 0 : i32
    %c0_i32_1 = arith.constant 0 : i32
    return %arg0, %c0_i32, %c0_i32_0 : i32, i32, i32
  }
}

</mosaic_0001>

<llo_original>
// kernel: tpu_custom_call.1
$region0: #{tpu_custom_call.1}
  #allocation0 [shape = 'u32[]', space=smem, size = 0x4, offset = 0x4, fixed_abs, tag = 'smem constant byte address 0x4 - core index']
  #allocation1 [shape = 'u32[144,128]{1,0:T(1,128)}', space=vmem, size = 0x12000, scoped, tag = 'internal scratch']
  #allocation2 [shape = 'f32[16,32]{1,0:T(8,128)}', space=vmem, size = 0x2000, scoped, tag = 'scratch operand']
  #allocation3 [shape = 'f32[2,8,8]{2,1,0:T(8,128)}', space=vmem, size = 0x2000, scoped, tag = 'scratch operand']
  %s0 = inlined_call_operand.hbm [shape: f32[2,8,32], index: 0, kind: input, shape index: {}]
  %s1 = inlined_call_operand.hbm [shape: f32[8,8], index: 1, kind: input, shape index: {}]
  %s2 = inlined_call_operand.hbm [shape: f32[2,8], index: 2, kind: input, shape index: {}]
  %s3 = inlined_call_operand.vmem [shape: f32[16,32,96], index: 3, kind: input, shape index: {}]
  %s4 = inlined_call_operand.hbm [shape: f32[16,1,96], index: 4, kind: input, shape index: {}]
  %s5 = inlined_call_operand.vmem [shape: f32[16,32,32], index: 5, kind: input, shape index: {}]
  %s6 = inlined_call_operand.vmem [shape: f32[16,1,32], index: 6, kind: input, shape index: {}]
  %s7 = inlined_call_operand.hbm [shape: f32[16,1,32], index: 7, kind: input, shape index: {}]
  %s8 = inlined_call_operand.hbm [shape: f32[16,1,32], index: 8, kind: input, shape index: {}]
  %s9 = inlined_call_operand.vmem [shape: f32[16,32,64], index: 9, kind: input, shape index: {}]
  %s10 = inlined_call_operand.vmem [shape: f32[16,1,64], index: 10, kind: input, shape index: {}]
  %s11 = inlined_call_operand.vmem [shape: f32[16,64,32], index: 11, kind: input, shape index: {}]
  %s12 = inlined_call_operand.hbm [shape: f32[16,1,32], index: 12, kind: input, shape index: {}]
  %s13 = inlined_call_operand.hbm [shape: f32[16,1,32], index: 13, kind: input, shape index: {}]
  %s14 = inlined_call_operand.hbm [shape: f32[16,1,32], index: 14, kind: input, shape index: {}]
  %s15 = inlined_call_operand.vmem [shape: f32[1,32], index: 15, kind: input, shape index: {}]
  %s16 = inlined_call_operand.vmem [shape: f32[1,32], index: 16, kind: input, shape index: {}]
  %s17 = inlined_call_operand.hbm [shape: f32[2,8,32], index: 17, kind: output, shape index: {}]
  %s18 = sld [smem:[#allocation0]]
  $region145: #{tpu_custom_call.1} parent=0
    _
  %s20 = ssub.s32 1, %s18
  %s21 = scalar_select 0, %s20, %s18
  $region1: #{tpu_custom_call.1} parent=0
    #allocation4 [shape = 'u8[8192]{0}', space=vmem, size = 0x2000, scoped, tag = 'input window, operand 0, single buffered']
    #allocation5 [shape = 's32[2]{0}', space=sflag, size = 0x8, scoped, tag = 'scoped memory for tpu_custom_call.1']
    #allocation6 [shape = 's32[2]{0}', space=sflag, size = 0x8, scoped, tag = 'scoped memory for tpu_custom_call.1']
    #allocation7 [shape = 'u8[4096]{0}', space=vmem, size = 0x1000, scoped, tag = 'input window, operand 1, single buffered']
    #allocation8 [shape = 's32[1]{0}', space=sflag, size = 0x4, scoped, tag = 'scoped memory for tpu_custom_call.1']
    #allocation9 [shape = 'u8[1024]{0}', space=vmem, size = 0x400, scoped, tag = 'input window, operand 2, single buffered']
    #allocation10 [shape = 'u8[1024]{0}', space=vmem, size = 0x400, scoped, tag = 'input window, operand 4']
    #allocation11 [shape = 's32[2]{0}', space=sflag, size = 0x8, scoped, tag = 'scoped memory for tpu_custom_call.1']
    #allocation12 [shape = 'u8[1024]{0}', space=vmem, size = 0x400, scoped, tag = 'input window, operand 7']
    #allocation13 [shape = 'u8[1024]{0}', space=vmem, size = 0x400, scoped, tag = 'input window, operand 8']
    #allocation14 [shape = 's32[2]{0}', space=sflag, size = 0x8, scoped, tag = 'scoped memory for tpu_custom_call.1']
    #allocation15 [shape = 'u8[1024]{0}', space=vmem, size = 0x400, scoped, tag = 'input window, operand 12']
    #allocation16 [shape = 'u8[1024]{0}', space=vmem, size = 0x400, scoped, tag = 'input window, operand 13']
    #allocation17 [shape = 's32[2]{0}', space=sflag, size = 0x8, scoped, tag = 'scoped memory for tpu_custom_call.1']
    #allocation18 [shape = 'u8[1024]{0}', space=vmem, size = 0x400, scoped, tag = 'input window, operand 14']
    #allocation19 [shape = 'u8[8192]{0}', space=vmem, size = 0x2000, scoped, tag = 'output window, operand 0, single buffered']
    %22 = vsyncpa [#allocation5], 0
    %23 = vsyncpa [#allocation8], 0
    %24 = vsyncpa [#allocation11], 0
    %s25 = scalar_lea.sflag [#allocation11], 1
    %26 = vsyncpa %s25, 0
    %27 = vsyncpa [#allocation14], 0
    %s28 = scalar_lea.sflag [#allocation14], 1
    %29 = vsyncpa %s28, 0
    %30 = vsyncpa [#allocation17], 0
    %s31 = scalar_lea.sflag [#allocation17], 1
    %32 = vsyncpa %s31, 0
    %33 = vsyncpa [#allocation6], 0
    loop: start=0, step=1, limit=18
    $region2: #{tpu_custom_call.1} parent=1 // loop_pre_header
      _
    $region3: #{tpu_custom_call.1} parent=1 // loop_header
      %s35 = sphi 0, %s39
      %p36 = scmp.ge.s32.totalorder %s35, 18
      %s42 = sphi 0, %s54
      %s43 = sphi 0, %s50
      %s44 = sphi 0, %s42
      %s45 = sphi 0, %s43
      %s46 = sphi 0, %s44
      %s47 = sphi 0, %s45
      %s57 = sphi 0, %s59
      %s60 = sphi 0, %s57
      %s61 = sphi 0, %s60
      %s77 = sphi 0, %s61
      %s81 = sphi 0, %s81
      %s83 = sphi 0, %s81
      %s84 = sphi 0, %s83
      %s98 = sphi 0, %s84
      %s104 = sphi 0, %s106
      %s107 = sphi 0, %s104
      %s108 = sphi 0, %s107
      %s124 = sphi 0, %s108
      %s130 = sphi 0, %s132
      %s133 = sphi 0, %s130
      %s134 = sphi 0, %s133
      %s150 = sphi 0, %s134
      %s156 = sphi 0, %s158
      %s159 = sphi 0, %s156
      %s160 = sphi 0, %s159
      %s176 = sphi 0, %s160
      %s182 = sphi 0, %s184
      %s185 = sphi 0, %s182
      %s186 = sphi 0, %s185
      %s202 = sphi 0, %s186
      %s208 = sphi 0, %s210
      %s211 = sphi 0, %s208
      %s212 = sphi 0, %s211
      %s228 = sphi 0, %s212
      %s234 = sphi 0, %s236
      %s237 = sphi 0, %s234
      %s238 = sphi 0, %s237
      %s254 = sphi 0, %s238
      %s260 = sphi 0, %s262
      %s263 = sphi 0, %s260
      %s264 = sphi 0, %s263
      %s280 = sphi 0, %s264
      %s286 = sphi 0, %s288
      %s289 = sphi 0, %s286
      %s290 = sphi 0, %s289
      %s306 = sphi 0, %s290
      %s312 = sphi 0, %s314
      %s315 = sphi 0, %s312
      %s316 = sphi 0, %s315
      %s332 = sphi 0, %s316
      %s338 = sphi 0, %s340
      %s341 = sphi 0, %s338
      %s342 = sphi 0, %s341
      %s358 = sphi 0, %s342
      %s364 = sphi 0, %s366
      %s367 = sphi 0, %s364
      %s368 = sphi 0, %s367
      %s384 = sphi 0, %s368
      %s390 = sphi 0, %s392
      %s393 = sphi 0, %s390
      %s394 = sphi 0, %s393
      %s410 = sphi 0, %s394
      %s416 = sphi 0, %s418
      %s419 = sphi 0, %s416
      %s420 = sphi 0, %s419
      %s436 = sphi 0, %s420
      %s440 = sphi 0, %s440
      %s442 = sphi 0, %s440
      %s443 = sphi 0, %s442
      %s457 = sphi 0, %s443
      %s461 = sphi 0, %s461
      %s463 = sphi 0, %s461
      %s464 = sphi 0, %s463
      %s478 = sphi 0, %s464
      %s484 = sphi 0, %s486
      %s487 = sphi 0, %s484
      %s488 = sphi 0, %s487
      %s504 = sphi 0, %s488
    $region4: #{tpu_custom_call.1} parent=1 // loop_header_branch
      %38 = sbr.rel (%p36) target = $region8
    $region5: #{tpu_custom_call.1} parent=1 // loop_body
      %s40 = ssub.s32 %s35, 1
      %s41 = ssub.s32 %s35, 2
      %s48 = sadd.s32 1, %s43
      %p49 = scmp.ge.s32.totalorder %s48, 16
      %s50 = scalar_select %p49, 0, %s48
      %s51 = sadd.s32 1, %s42
      %s52 = scalar_select %p49, %s51, %s42
      %p53 = scmp.ge.s32.totalorder %s52, 1
      %s54 = scalar_select %p53, 0, %s52
      %s55 = ssub.s32 %s42, %s54
      %p56 = scmp.eq.s32.totalorder %s55, 0
      %s58 = sadd.s32 %s57, 1
      %s59 = scalar_select %p56, %s57, %s58
      %p62 = pneg %p56
      %p63 = scmp.eq.s32.totalorder %s35, 15
      %p64 = por %p62, %p63
      %p65 = scmp.ne.s32.totalorder %s57, %s60
      %p66 = scmp.eq.s32.totalorder %s35, 0
      %p67 = por %p65, %p66
      %p68 = scmp.ne.s32.totalorder %s57, %s60
      %p69 = scmp.eq.s32.totalorder %s40, 15
      %p70 = por %p68, %p69
      %p71 = scmp.ne.s32.totalorder %s60, %s61
      %p72 = scmp.eq.s32.totalorder %s40, 0
      %p73 = por %p71, %p72
      %p74 = scmp.ne.s32.totalorder %s60, %s61
      %p75 = scmp.eq.s32.totalorder %s41, 15
      %p76 = por %p74, %p75
      %p78 = scmp.ne.s32.totalorder %s61, %s77
      %p79 = scmp.eq.s32.totalorder %s41, 0
      %p80 = por %p78, %p79
      %s82 = sadd.s32 %s81, 1
      %p85 = scmp.eq.s32.totalorder %s35, 15
      %p86 = scmp.ne.s32.totalorder %s81, %s83
      %p87 = scmp.eq.s32.totalorder %s35, 0
      %p88 = por %p86, %p87
      %p89 = scmp.ne.s32.totalorder %s81, %s83
      %p90 = scmp.eq.s32.totalorder %s40, 15
      %p91 = por %p89, %p90
      %p92 = scmp.ne.s32.totalorder %s83, %s84
      %p93 = scmp.eq.s32.totalorder %s40, 0
      %p94 = por %p92, %p93
      %p95 = scmp.ne.s32.totalorder %s83, %s84
      %p96 = scmp.eq.s32.totalorder %s41, 15
      %p97 = por %p95, %p96
      %p99 = scmp.ne.s32.totalorder %s84, %s98
      %p100 = scmp.eq.s32.totalorder %s41, 0
      %p101 = por %p99, %p100
      %s102 = ssub.s32 %s42, %s54
      %p103 = scmp.eq.s32.totalorder %s102, 0
      %s105 = sadd.s32 %s104, 1
      %s106 = scalar_select %p103, %s104, %s105
      %p109 = pneg %p103
      %p110 = scmp.eq.s32.totalorder %s35, 15
      %p111 = por %p109, %p110
      %p112 = scmp.ne.s32.totalorder %s104, %s107
      %p113 = scmp.eq.s32.totalorder %s35, 0
      %p114 = por %p112, %p113
      %p115 = scmp.ne.s32.totalorder %s104, %s107
      %p116 = scmp.eq.s32.totalorder %s40, 15
      %p117 = por %p115, %p116
      %p118 = scmp.ne.s32.totalorder %s107, %s108
      %p119 = scmp.eq.s32.totalorder %s40, 0
      %p120 = por %p118, %p119
      %p121 = scmp.ne.s32.totalorder %s107, %s108
      %p122 = scmp.eq.s32.totalorder %s41, 15
      %p123 = por %p121, %p122
      %p125 = scmp.ne.s32.totalorder %s108, %s124
      %p126 = scmp.eq.s32.totalorder %s41, 0
      %p127 = por %p125, %p126
      %s128 = ssub.s32 %s43, %s50
      %p129 = scmp.eq.s32.totalorder %s128, 0
      %s131 = sadd.s32 %s130, 1
      %s132 = scalar_select %p129, %s130, %s131
      %p135 = pneg %p129
      %p136 = scmp.eq.s32.totalorder %s35, 15
      %p137 = por %p135, %p136
      %p138 = scmp.ne.s32.totalorder %s130, %s133
      %p139 = scmp.eq.s32.totalorder %s35, 0
      %p140 = por %p138, %p139
      %p141 = scmp.ne.s32.totalorder %s130, %s133
      %p142 = scmp.eq.s32.totalorder %s40, 15
      %p143 = por %p141, %p142
      %p144 = scmp.ne.s32.totalorder %s133, %s134
      %p145 = scmp.eq.s32.totalorder %s40, 0
      %p146 = por %p144, %p145
      %p147 = scmp.ne.s32.totalorder %s133, %s134
      %p148 = scmp.eq.s32.totalorder %s41, 15
      %p149 = por %p147, %p148
      %p151 = scmp.ne.s32.totalorder %s134, %s150
      %p152 = scmp.eq.s32.totalorder %s41, 0
      %p153 = por %p151, %p152
      %s154 = ssub.s32 %s43, %s50
      %p155 = scmp.eq.s32.totalorder %s154, 0
      %s157 = sadd.s32 %s156, 1
      %s158 = scalar_select %p155, %s156, %s157
      %p161 = pneg %p155
      %p162 = scmp.eq.s32.totalorder %s35, 15
      %p163 = por %p161, %p162
      %p164 = scmp.ne.s32.totalorder %s156, %s159
      %p165 = scmp.eq.s32.totalorder %s35, 0
      %p166 = por %p164, %p165
      %p167 = scmp.ne.s32.totalorder %s156, %s159
      %p168 = scmp.eq.s32.totalorder %s40, 15
      %p169 = por %p167, %p168
      %p170 = scmp.ne.s32.totalorder %s159, %s160
      %p171 = scmp.eq.s32.totalorder %s40, 0
      %p172 = por %p170, %p171
      %p173 = scmp.ne.s32.totalorder %s159, %s160
      %p174 = scmp.eq.s32.totalorder %s41, 15
      %p175 = por %p173, %p174
      %p177 = scmp.ne.s32.totalorder %s160, %s176
      %p178 = scmp.eq.s32.totalorder %s41, 0
      %p179 = por %p177, %p178
      %s180 = ssub.s32 %s43, %s50
      %p181 = scmp.eq.s32.totalorder %s180, 0
      %s183 = sadd.s32 %s182, 1
      %s184 = scalar_select %p181, %s182, %s183
      %p187 = pneg %p181
      %p188 = scmp.eq.s32.totalorder %s35, 15
      %p189 = por %p187, %p188
      %p190 = scmp.ne.s32.totalorder %s182, %s185
      %p191 = scmp.eq.s32.totalorder %s35, 0
      %p192 = por %p190, %p191
      %p193 = scmp.ne.s32.totalorder %s182, %s185
      %p194 = scmp.eq.s32.totalorder %s40, 15
      %p195 = por %p193, %p194
      %p196 = scmp.ne.s32.totalorder %s185, %s186
      %p197 = scmp.eq.s32.totalorder %s40, 0
      %p198 = por %p196, %p197
      %p199 = scmp.ne.s32.totalorder %s185, %s186
      %p200 = scmp.eq.s32.totalorder %s41, 15
      %p201 = por %p199, %p200
      %p203 = scmp.ne.s32.totalorder %s186, %s202
      %p204 = scmp.eq.s32.totalorder %s41, 0
      %p205 = por %p203, %p204
      %s206 = ssub.s32 %s43, %s50
      %p207 = scmp.eq.s32.totalorder %s206, 0
      %s209 = sadd.s32 %s208, 1
      %s210 = scalar_select %p207, %s208, %s209
      %p213 = pneg %p207
      %p214 = scmp.eq.s32.totalorder %s35, 15
      %p215 = por %p213, %p214
      %p216 = scmp.ne.s32.totalorder %s208, %s211
      %p217 = scmp.eq.s32.totalorder %s35, 0
      %p218 = por %p216, %p217
      %p219 = scmp.ne.s32.totalorder %s208, %s211
      %p220 = scmp.eq.s32.totalorder %s40, 15
      %p221 = por %p219, %p220
      %p222 = scmp.ne.s32.totalorder %s211, %s212
      %p223 = scmp.eq.s32.totalorder %s40, 0
      %p224 = por %p222, %p223
      %p225 = scmp.ne.s32.totalorder %s211, %s212
      %p226 = scmp.eq.s32.totalorder %s41, 15
      %p227 = por %p225, %p226
      %p229 = scmp.ne.s32.totalorder %s212, %s228
      %p230 = scmp.eq.s32.totalorder %s41, 0
      %p231 = por %p229, %p230
      %s232 = ssub.s32 %s43, %s50
      %p233 = scmp.eq.s32.totalorder %s232, 0
      %s235 = sadd.s32 %s234, 1
      %s236 = scalar_select %p233, %s234, %s235
      %p239 = pneg %p233
      %p240 = scmp.eq.s32.totalorder %s35, 15
      %p241 = por %p239, %p240
      %p242 = scmp.ne.s32.totalorder %s234, %s237
      %p243 = scmp.eq.s32.totalorder %s35, 0
      %p244 = por %p242, %p243
      %p245 = scmp.ne.s32.totalorder %s234, %s237
      %p246 = scmp.eq.s32.totalorder %s40, 15
      %p247 = por %p245, %p246
      %p248 = scmp.ne.s32.totalorder %s237, %s238
      %p249 = scmp.eq.s32.totalorder %s40, 0
      %p250 = por %p248, %p249
      %p251 = scmp.ne.s32.totalorder %s237, %s238
      %p252 = scmp.eq.s32.totalorder %s41, 15
      %p253 = por %p251, %p252
      %p255 = scmp.ne.s32.totalorder %s238, %s254
      %p256 = scmp.eq.s32.totalorder %s41, 0
      %p257 = por %p255, %p256
      %s258 = ssub.s32 %s43, %s50
      %p259 = scmp.eq.s32.totalorder %s258, 0
      %s261 = sadd.s32 %s260, 1
      %s262 = scalar_select %p259, %s260, %s261
      %p265 = pneg %p259
      %p266 = scmp.eq.s32.totalorder %s35, 15
      %p267 = por %p265, %p266
      %p268 = scmp.ne.s32.totalorder %s260, %s263
      %p269 = scmp.eq.s32.totalorder %s35, 0
      %p270 = por %p268, %p269
      %p271 = scmp.ne.s32.totalorder %s260, %s263
      %p272 = scmp.eq.s32.totalorder %s40, 15
      %p273 = por %p271, %p272
      %p274 = scmp.ne.s32.totalorder %s263, %s264
      %p275 = scmp.eq.s32.totalorder %s40, 0
      %p276 = por %p274, %p275
      %p277 = scmp.ne.s32.totalorder %s263, %s264
      %p278 = scmp.eq.s32.totalorder %s41, 15
      %p279 = por %p277, %p278
      %p281 = scmp.ne.s32.totalorder %s264, %s280
      %p282 = scmp.eq.s32.totalorder %s41, 0
      %p283 = por %p281, %p282
      %s284 = ssub.s32 %s43, %s50
      %p285 = scmp.eq.s32.totalorder %s284, 0
      %s287 = sadd.s32 %s286, 1
      %s288 = scalar_select %p285, %s286, %s287
      %p291 = pneg %p285
      %p292 = scmp.eq.s32.totalorder %s35, 15
      %p293 = por %p291, %p292
      %p294 = scmp.ne.s32.totalorder %s286, %s289
      %p295 = scmp.eq.s32.totalorder %s35, 0
      %p296 = por %p294, %p295
      %p297 = scmp.ne.s32.totalorder %s286, %s289
      %p298 = scmp.eq.s32.totalorder %s40, 15
      %p299 = por %p297, %p298
      %p300 = scmp.ne.s32.totalorder %s289, %s290
      %p301 = scmp.eq.s32.totalorder %s40, 0
      %p302 = por %p300, %p301
      %p303 = scmp.ne.s32.totalorder %s289, %s290
      %p304 = scmp.eq.s32.totalorder %s41, 15
      %p305 = por %p303, %p304
      %p307 = scmp.ne.s32.totalorder %s290, %s306
      %p308 = scmp.eq.s32.totalorder %s41, 0
      %p309 = por %p307, %p308
      %s310 = ssub.s32 %s43, %s50
      %p311 = scmp.eq.s32.totalorder %s310, 0
      %s313 = sadd.s32 %s312, 1
      %s314 = scalar_select %p311, %s312, %s313
      %p317 = pneg %p311
      %p318 = scmp.eq.s32.totalorder %s35, 15
      %p319 = por %p317, %p318
      %p320 = scmp.ne.s32.totalorder %s312, %s315
      %p321 = scmp.eq.s32.totalorder %s35, 0
      %p322 = por %p320, %p321
      %p323 = scmp.ne.s32.totalorder %s312, %s315
      %p324 = scmp.eq.s32.totalorder %s40, 15
      %p325 = por %p323, %p324
      %p326 = scmp.ne.s32.totalorder %s315, %s316
      %p327 = scmp.eq.s32.totalorder %s40, 0
      %p328 = por %p326, %p327
      %p329 = scmp.ne.s32.totalorder %s315, %s316
      %p330 = scmp.eq.s32.totalorder %s41, 15
      %p331 = por %p329, %p330
      %p333 = scmp.ne.s32.totalorder %s316, %s332
      %p334 = scmp.eq.s32.totalorder %s41, 0
      %p335 = por %p333, %p334
      %s336 = ssub.s32 %s43, %s50
      %p337 = scmp.eq.s32.totalorder %s336, 0
      %s339 = sadd.s32 %s338, 1
      %s340 = scalar_select %p337, %s338, %s339
      %p343 = pneg %p337
      %p344 = scmp.eq.s32.totalorder %s35, 15
      %p345 = por %p343, %p344
      %p346 = scmp.ne.s32.totalorder %s338, %s341
      %p347 = scmp.eq.s32.totalorder %s35, 0
      %p348 = por %p346, %p347
      %p349 = scmp.ne.s32.totalorder %s338, %s341
      %p350 = scmp.eq.s32.totalorder %s40, 15
      %p351 = por %p349, %p350
      %p352 = scmp.ne.s32.totalorder %s341, %s342
      %p353 = scmp.eq.s32.totalorder %s40, 0
      %p354 = por %p352, %p353
      %p355 = scmp.ne.s32.totalorder %s341, %s342
      %p356 = scmp.eq.s32.totalorder %s41, 15
      %p357 = por %p355, %p356
      %p359 = scmp.ne.s32.totalorder %s342, %s358
      %p360 = scmp.eq.s32.totalorder %s41, 0
      %p361 = por %p359, %p360
      %s362 = ssub.s32 %s43, %s50
      %p363 = scmp.eq.s32.totalorder %s362, 0
      %s365 = sadd.s32 %s364, 1
      %s366 = scalar_select %p363, %s364, %s365
      %p369 = pneg %p363
      %p370 = scmp.eq.s32.totalorder %s35, 15
      %p371 = por %p369, %p370
      %p372 = scmp.ne.s32.totalorder %s364, %s367
      %p373 = scmp.eq.s32.totalorder %s35, 0
      %p374 = por %p372, %p373
      %p375 = scmp.ne.s32.totalorder %s364, %s367
      %p376 = scmp.eq.s32.totalorder %s40, 15
      %p377 = por %p375, %p376
      %p378 = scmp.ne.s32.totalorder %s367, %s368
      %p379 = scmp.eq.s32.totalorder %s40, 0
      %p380 = por %p378, %p379
      %p381 = scmp.ne.s32.totalorder %s367, %s368
      %p382 = scmp.eq.s32.totalorder %s41, 15
      %p383 = por %p381, %p382
      %p385 = scmp.ne.s32.totalorder %s368, %s384
      %p386 = scmp.eq.s32.totalorder %s41, 0
      %p387 = por %p385, %p386
      %s388 = ssub.s32 %s43, %s50
      %p389 = scmp.eq.s32.totalorder %s388, 0
      %s391 = sadd.s32 %s390, 1
      %s392 = scalar_select %p389, %s390, %s391
      %p395 = pneg %p389
      %p396 = scmp.eq.s32.totalorder %s35, 15
      %p397 = por %p395, %p396
      %p398 = scmp.ne.s32.totalorder %s390, %s393
      %p399 = scmp.eq.s32.totalorder %s35, 0
      %p400 = por %p398, %p399
      %p401 = scmp.ne.s32.totalorder %s390, %s393
      %p402 = scmp.eq.s32.totalorder %s40, 15
      %p403 = por %p401, %p402
      %p404 = scmp.ne.s32.totalorder %s393, %s394
      %p405 = scmp.eq.s32.totalorder %s40, 0
      %p406 = por %p404, %p405
      %p407 = scmp.ne.s32.totalorder %s393, %s394
      %p408 = scmp.eq.s32.totalorder %s41, 15
      %p409 = por %p407, %p408
      %p411 = scmp.ne.s32.totalorder %s394, %s410
      %p412 = scmp.eq.s32.totalorder %s41, 0
      %p413 = por %p411, %p412
      %s414 = ssub.s32 %s43, %s50
      %p415 = scmp.eq.s32.totalorder %s414, 0
      %s417 = sadd.s32 %s416, 1
      %s418 = scalar_select %p415, %s416, %s417
      %p421 = pneg %p415
      %p422 = scmp.eq.s32.totalorder %s35, 15
      %p423 = por %p421, %p422
      %p424 = scmp.ne.s32.totalorder %s416, %s419
      %p425 = scmp.eq.s32.totalorder %s35, 0
      %p426 = por %p424, %p425
      %p427 = scmp.ne.s32.totalorder %s416, %s419
      %p428 = scmp.eq.s32.totalorder %s40, 15
      %p429 = por %p427, %p428
      %p430 = scmp.ne.s32.totalorder %s419, %s420
      %p431 = scmp.eq.s32.totalorder %s40, 0
      %p432 = por %p430, %p431
      %p433 = scmp.ne.s32.totalorder %s419, %s420
      %p434 = scmp.eq.s32.totalorder %s41, 15
      %p435 = por %p433, %p434
      %p437 = scmp.ne.s32.totalorder %s420, %s436
      %p438 = scmp.eq.s32.totalorder %s41, 0
      %p439 = por %p437, %p438
      %s441 = sadd.s32 %s440, 1
      %p444 = scmp.eq.s32.totalorder %s35, 15
      %p445 = scmp.ne.s32.totalorder %s440, %s442
      %p446 = scmp.eq.s32.totalorder %s35, 0
      %p447 = por %p445, %p446
      %p448 = scmp.ne.s32.totalorder %s440, %s442
      %p449 = scmp.eq.s32.totalorder %s40, 15
      %p450 = por %p448, %p449
      %p451 = scmp.ne.s32.totalorder %s442, %s443
      %p452 = scmp.eq.s32.totalorder %s40, 0
      %p453 = por %p451, %p452
      %p454 = scmp.ne.s32.totalorder %s442, %s443
      %p455 = scmp.eq.s32.totalorder %s41, 15
      %p456 = por %p454, %p455
      %p458 = scmp.ne.s32.totalorder %s443, %s457
      %p459 = scmp.eq.s32.totalorder %s41, 0
      %p460 = por %p458, %p459
      %s462 = sadd.s32 %s461, 1
      %p465 = scmp.eq.s32.totalorder %s35, 15
      %p466 = scmp.ne.s32.totalorder %s461, %s463
      %p467 = scmp.eq.s32.totalorder %s35, 0
      %p468 = por %p466, %p467
      %p469 = scmp.ne.s32.totalorder %s461, %s463
      %p470 = scmp.eq.s32.totalorder %s40, 15
      %p471 = por %p469, %p470
      %p472 = scmp.ne.s32.totalorder %s463, %s464
      %p473 = scmp.eq.s32.totalorder %s40, 0
      %p474 = por %p472, %p473
      %p475 = scmp.ne.s32.totalorder %s463, %s464
      %p476 = scmp.eq.s32.totalorder %s41, 15
      %p477 = por %p475, %p476
      %p479 = scmp.ne.s32.totalorder %s464, %s478
      %p480 = scmp.eq.s32.totalorder %s41, 0
      %p481 = por %p479, %p480
      %s482 = ssub.s32 %s42, %s54
      %p483 = scmp.eq.s32.totalorder %s482, 0
      %s485 = sadd.s32 %s484, 1
      %s486 = scalar_select %p483, %s484, %s485
      %p489 = pneg %p483
      %p490 = scmp.eq.s32.totalorder %s35, 15
      %p491 = por %p489, %p490
      %p492 = scmp.ne.s32.totalorder %s484, %s487
      %p493 = scmp.eq.s32.totalorder %s35, 0
      %p494 = por %p492, %p493
      %p495 = scmp.ne.s32.totalorder %s484, %s487
      %p496 = scmp.eq.s32.totalorder %s40, 15
      %p497 = por %p495, %p496
      %p498 = scmp.ne.s32.totalorder %s487, %s488
      %p499 = scmp.eq.s32.totalorder %s40, 0
      %p500 = por %p498, %p499
      %p501 = scmp.ne.s32.totalorder %s487, %s488
      %p502 = scmp.eq.s32.totalorder %s41, 15
      %p503 = por %p501, %p502
      %p505 = scmp.ne.s32.totalorder %s488, %s504
      %p506 = scmp.eq.s32.totalorder %s41, 0
      %p507 = por %p505, %p506
      %p508 = scmp.le.s32.totalorder 1, %s35
      %p509 = scmp.lt.s32.totalorder %s35, 17
      %p510 = pnand %p508, %p509
      %p511 = pneg %p510
      // Predicated region
      $region9: #{tpu_custom_call.1} parent=5 // pred_check
        _
      $region10: #{tpu_custom_call.1} parent=5 // pred_check_branch
        %513 = sbr.rel (%p510) target = $region12
      $region11: #{tpu_custom_call.1} parent=5 // pred_region
        %s514 = ssub.s32 %s35, 1
        // Predicated region
        $region13: #{tpu_custom_call.1} parent=11 // pred_check
          %p515 = pneg %p73
        $region14: #{tpu_custom_call.1} parent=11 // pred_check_branch
          %517 = sbr.rel (%p515) target = $region16
        $region15: #{tpu_custom_call.1} parent=11 // pred_region
          %s518 = smul.u32 2, %s44
          %s520 = ssub.s32 256, 256
          %521 = vsyncadd [#allocation5], %s520
          %s522 = smul.addr %s518, 128
          %s523 = scalar_lea.hbm %s0, %s522
          %s524 = sshll.u32 [#allocation4], 4
          %s525 = int_to_ptr.vmem [resolvable:$true] %s524
          %530 = dma.hbm_to_vmem [thread:$0]  %s523, 256, %s525, [#allocation5], 128, 128, 8
        $region16: #{tpu_custom_call.1} parent=11 // pred_fallthru
          _
        // Predicated region
        $region17: #{tpu_custom_call.1} parent=11 // pred_check
          %p531 = pneg %p94
        $region18: #{tpu_custom_call.1} parent=11 // pred_check_branch
          %533 = sbr.rel (%p531) target = $region20
        $region19: #{tpu_custom_call.1} parent=11 // pred_region
          %s535 = ssub.s32 128, 128
          %536 = vsyncadd [#allocation8], %s535
          %s538 = sshll.u32 [#allocation7], 4
          %s539 = int_to_ptr.vmem [resolvable:$true] %s538
          %541 = dma.hbm_to_vmem [thread:$0]  %s1, 128, %s539, [#allocation8]
        $region20: #{tpu_custom_call.1} parent=11 // pred_fallthru
          _
        // Predicated region
        $region21: #{tpu_custom_call.1} parent=11 // pred_check
          %p542 = pneg %p120
        $region22: #{tpu_custom_call.1} parent=11 // pred_check_branch
          %544 = sbr.rel (%p542) target = $region24
        $region23: #{tpu_custom_call.1} parent=11 // pred_region
          %s546 = ssub.s32 32, 32
          %547 = vsyncadd [#allocation8], %s546
          %s548 = smul.addr %s44, 32
          %s549 = scalar_lea.hbm %s2, %s548
          %s551 = sshll.u32 [#allocation9], 4
          %s552 = int_to_ptr.vmem [resolvable:$true] %s551
          %554 = dma.hbm_to_vmem [thread:$0]  %s549, 32, %s552, [#allocation8]
        $region24: #{tpu_custom_call.1} parent=11 // pred_fallthru
          _
        // Predicated region
        $region25: #{tpu_custom_call.1} parent=11 // pred_check
          %p555 = pneg %p453
        $region26: #{tpu_custom_call.1} parent=11 // pred_check_branch
          %557 = sbr.rel (%p555) target = $region28
        $region27: #{tpu_custom_call.1} parent=11 // pred_region
          _
        $region28: #{tpu_custom_call.1} parent=11 // pred_fallthru
          _
        // Predicated region
        $region29: #{tpu_custom_call.1} parent=11 // pred_check
          %p558 = pneg %p474
        $region30: #{tpu_custom_call.1} parent=11 // pred_check_branch
          %560 = sbr.rel (%p558) target = $region32
        $region31: #{tpu_custom_call.1} parent=11 // pred_region
          _
        $region32: #{tpu_custom_call.1} parent=11 // pred_fallthru
          _
      $region12: #{tpu_custom_call.1} parent=5 // pred_fallthru
        _
      %p561 = scmp.lt.s32.totalorder %s35, 16
      // Predicated region
      $region33: #{tpu_custom_call.1} parent=5 // pred_check
        %p562 = pneg %p561
      $region34: #{tpu_custom_call.1} parent=5 // pred_check_branch
        %564 = sbr.rel (%p562) target = $region36
      $region35: #{tpu_custom_call.1} parent=5 // pred_region
        // Predicated region
        $region37: #{tpu_custom_call.1} parent=35 // pred_check
          %p565 = pneg %p140
        $region38: #{tpu_custom_call.1} parent=35 // pred_check_branch
          %567 = sbr.rel (%p565) target = $region40
        $region39: #{tpu_custom_call.1} parent=35 // pred_region
          %p568 = scmp.lt.s32.totalorder %s43, 15
          %s569 = scalar_select %p568, %s43, 15
          %s570 = smul.addr %s569, 4
          %s571 = smul.addr %s570, 8
          %s572 = scalar_lea.vmem %s3, %s571
        $region40: #{tpu_custom_call.1} parent=35 // pred_fallthru
          _
        // Predicated region
        $region41: #{tpu_custom_call.1} parent=35 // pred_check
          %p573 = pneg %p166
        $region42: #{tpu_custom_call.1} parent=35 // pred_check_branch
          %575 = sbr.rel (%p573) target = $region44
        $region43: #{tpu_custom_call.1} parent=35 // pred_region
          %s576 = sand.u32 %s35, 1
          %s577 = scalar_lea.sflag [#allocation11], %s576
          %s578 = sand.u32 %s156, 1
          %s579 = scalar_lea.vmem [#allocation10], %s578
          %s581 = ssub.s32 16, 16
          %582 = vsyncadd %s577, %s581
          %s583 = smul.addr %s43, 16
          %s584 = scalar_lea.hbm %s4, %s583
          %s586 = sshll.u32 %s579, 4
          %s587 = int_to_ptr.vmem [resolvable:$true] %s586
          %589 = dma.hbm_to_vmem [thread:$0]  %s584, 16, %s587, %s577
        $region44: #{tpu_custom_call.1} parent=35 // pred_fallthru
          _
        // Predicated region
        $region45: #{tpu_custom_call.1} parent=35 // pred_check
          %p590 = pneg %p192
        $region46: #{tpu_custom_call.1} parent=35 // pred_check_branch
          %592 = sbr.rel (%p590) target = $region48
        $region47: #{tpu_custom_call.1} parent=35 // pred_region
          %p593 = scmp.lt.s32.totalorder %s43, 15
          %s594 = scalar_select %p593, %s43, 15
          %s595 = smul.addr %s594, 4
          %s596 = smul.addr %s595, 8
          %s597 = scalar_lea.vmem %s5, %s596
        $region48: #{tpu_custom_call.1} parent=35 // pred_fallthru
          _
        // Predicated region
        $region49: #{tpu_custom_call.1} parent=35 // pred_check
          %p598 = pneg %p218
        $region50: #{tpu_custom_call.1} parent=35 // pred_check_branch
          %600 = sbr.rel (%p598) target = $region52
        $region51: #{tpu_custom_call.1} parent=35 // pred_region
          %p601 = scmp.lt.s32.totalorder %s43, 15
          %s602 = scalar_select %p601, %s43, 15
          %s603 = scalar_lea.vmem %s6, %s602
        $region52: #{tpu_custom_call.1} parent=35 // pred_fallthru
          _
        // Predicated region
        $region53: #{tpu_custom_call.1} parent=35 // pred_check
          %p604 = pneg %p244
        $region54: #{tpu_custom_call.1} parent=35 // pred_check_branch
          %606 = sbr.rel (%p604) target = $region56
        $region55: #{tpu_custom_call.1} parent=35 // pred_region
          %s607 = sand.u32 %s35, 1
          %s608 = scalar_lea.sflag [#allocation11], %s607
          %s609 = sand.u32 %s234, 1
          %s610 = scalar_lea.vmem [#allocation12], %s609
          %s612 = ssub.s32 16, 16
          %613 = vsyncadd %s608, %s612
          %s614 = smul.addr %s43, 16
          %s615 = scalar_lea.hbm %s7, %s614
          %s617 = sshll.u32 %s610, 4
          %s618 = int_to_ptr.vmem [resolvable:$true] %s617
          %620 = dma.hbm_to_vmem [thread:$0]  %s615, 16, %s618, %s608
        $region56: #{tpu_custom_call.1} parent=35 // pred_fallthru
          _
        // Predicated region
        $region57: #{tpu_custom_call.1} parent=35 // pred_check
          %p621 = pneg %p270
        $region58: #{tpu_custom_call.1} parent=35 // pred_check_branch
          %623 = sbr.rel (%p621) target = $region60
        $region59: #{tpu_custom_call.1} parent=35 // pred_region
          %s624 = sand.u32 %s35, 1
          %s625 = scalar_lea.sflag [#allocation14], %s624
          %s626 = sand.u32 %s260, 1
          %s627 = scalar_lea.vmem [#allocation13], %s626
          %s629 = ssub.s32 16, 16
          %630 = vsyncadd %s625, %s629
          %s631 = smul.addr %s43, 16
          %s632 = scalar_lea.hbm %s8, %s631
          %s634 = sshll.u32 %s627, 4
          %s635 = int_to_ptr.vmem [resolvable:$true] %s634
          %637 = dma.hbm_to_vmem [thread:$0]  %s632, 16, %s635, %s625
        $region60: #{tpu_custom_call.1} parent=35 // pred_fallthru
          _
        // Predicated region
        $region61: #{tpu_custom_call.1} parent=35 // pred_check
          %p638 = pneg %p296
        $region62: #{tpu_custom_call.1} parent=35 // pred_check_branch
          %640 = sbr.rel (%p638) target = $region64
        $region63: #{tpu_custom_call.1} parent=35 // pred_region
          %p641 = scmp.lt.s32.totalorder %s43, 15
          %s642 = scalar_select %p641, %s43, 15
          %s643 = smul.addr %s642, 4
          %s644 = smul.addr %s643, 8
          %s645 = scalar_lea.vmem %s9, %s644
        $region64: #{tpu_custom_call.1} parent=35 // pred_fallthru
          _
        // Predicated region
        $region65: #{tpu_custom_call.1} parent=35 // pred_check
          %p646 = pneg %p322
        $region66: #{tpu_custom_call.1} parent=35 // pred_check_branch
          %648 = sbr.rel (%p646) target = $region68
        $region67: #{tpu_custom_call.1} parent=35 // pred_region
          %p649 = scmp.lt.s32.totalorder %s43, 15
          %s650 = scalar_select %p649, %s43, 15
          %s651 = scalar_lea.vmem %s10, %s650
        $region68: #{tpu_custom_call.1} parent=35 // pred_fallthru
          _
        // Predicated region
        $region69: #{tpu_custom_call.1} parent=35 // pred_check
          %p652 = pneg %p348
        $region70: #{tpu_custom_call.1} parent=35 // pred_check_branch
          %654 = sbr.rel (%p652) target = $region72
        $region71: #{tpu_custom_call.1} parent=35 // pred_region
          %p655 = scmp.lt.s32.totalorder %s43, 15
          %s656 = scalar_select %p655, %s43, 15
          %s657 = smul.addr %s656, 8
          %s658 = smul.addr %s657, 8
          %s659 = scalar_lea.vmem %s11, %s658
        $region72: #{tpu_custom_call.1} parent=35 // pred_fallthru
          _
        // Predicated region
        $region73: #{tpu_custom_call.1} parent=35 // pred_check
          %p660 = pneg %p374
        $region74: #{tpu_custom_call.1} parent=35 // pred_check_branch
          %662 = sbr.rel (%p660) target = $region76
        $region75: #{tpu_custom_call.1} parent=35 // pred_region
          %s663 = sand.u32 %s35, 1
          %s664 = scalar_lea.sflag [#allocation14], %s663
          %s665 = sand.u32 %s364, 1
          %s666 = scalar_lea.vmem [#allocation15], %s665
          %s668 = ssub.s32 16, 16
          %669 = vsyncadd %s664, %s668
          %s670 = smul.addr %s43, 16
          %s671 = scalar_lea.hbm %s12, %s670
          %s673 = sshll.u32 %s666, 4
          %s674 = int_to_ptr.vmem [resolvable:$true] %s673
          %676 = dma.hbm_to_vmem [thread:$0]  %s671, 16, %s674, %s664
        $region76: #{tpu_custom_call.1} parent=35 // pred_fallthru
          _
        // Predicated region
        $region77: #{tpu_custom_call.1} parent=35 // pred_check
          %p677 = pneg %p400
        $region78: #{tpu_custom_call.1} parent=35 // pred_check_branch
          %679 = sbr.rel (%p677) target = $region80
        $region79: #{tpu_custom_call.1} parent=35 // pred_region
          %s680 = sand.u32 %s35, 1
          %s681 = scalar_lea.sflag [#allocation17], %s680
          %s682 = sand.u32 %s390, 1
          %s683 = scalar_lea.vmem [#allocation16], %s682
          %s685 = ssub.s32 16, 16
          %686 = vsyncadd %s681, %s685
          %s687 = smul.addr %s43, 16
          %s688 = scalar_lea.hbm %s13, %s687
          %s690 = sshll.u32 %s683, 4
          %s691 = int_to_ptr.vmem [resolvable:$true] %s690
          %693 = dma.hbm_to_vmem [thread:$0]  %s688, 16, %s691, %s681
        $region80: #{tpu_custom_call.1} parent=35 // pred_fallthru
          _
        // Predicated region
        $region81: #{tpu_custom_call.1} parent=35 // pred_check
          %p694 = pneg %p426
        $region82: #{tpu_custom_call.1} parent=35 // pred_check_branch
          %696 = sbr.rel (%p694) target = $region84
        $region83: #{tpu_custom_call.1} parent=35 // pred_region
          %s697 = sand.u32 %s35, 1
          %s698 = scalar_lea.sflag [#allocation17], %s697
          %s699 = sand.u32 %s416, 1
          %s700 = scalar_lea.vmem [#allocation18], %s699
          %s702 = ssub.s32 16, 16
          %703 = vsyncadd %s698, %s702
          %s704 = smul.addr %s43, 16
          %s705 = scalar_lea.hbm %s14, %s704
          %s707 = sshll.u32 %s700, 4
          %s708 = int_to_ptr.vmem [resolvable:$true] %s707
          %710 = dma.hbm_to_vmem [thread:$0]  %s705, 16, %s708, %s698
        $region84: #{tpu_custom_call.1} parent=35 // pred_fallthru
          _
      $region36: #{tpu_custom_call.1} parent=5 // pred_fallthru
        _
      %p711 = scmp.le.s32.totalorder 1, %s35
      %p712 = scmp.lt.s32.totalorder %s35, 17
      %p713 = pnand %p711, %p712
      %p714 = pneg %p713
      // Predicated region
      $region85: #{tpu_custom_call.1} parent=5 // pred_check
        _
      $region86: #{tpu_custom_call.1} parent=5 // pred_check_branch
        %716 = sbr.rel (%p713) target = $region88
      $region87: #{tpu_custom_call.1} parent=5 // pred_region
        %s717 = ssub.s32 %s35, 1
        // Predicated region
        $region89: #{tpu_custom_call.1} parent=87 // pred_check
          %p718 = pneg %p73
        $region90: #{tpu_custom_call.1} parent=87 // pred_check_branch
          %720 = sbr.rel (%p718) target = $region92
        $region91: #{tpu_custom_call.1} parent=87 // pred_region
          %721 = dma.done [#allocation5], 256
        $region92: #{tpu_custom_call.1} parent=87 // pred_fallthru
          _
        // Predicated region
        $region93: #{tpu_custom_call.1} parent=87 // pred_check
          %p722 = pneg %p94
        $region94: #{tpu_custom_call.1} parent=87 // pred_check_branch
          %724 = sbr.rel (%p722) target = $region96
        $region95: #{tpu_custom_call.1} parent=87 // pred_region
          %725 = dma.done [#allocation8], 128
        $region96: #{tpu_custom_call.1} parent=87 // pred_fallthru
          _
        // Predicated region
        $region97: #{tpu_custom_call.1} parent=87 // pred_check
          %p726 = pneg %p120
        $region98: #{tpu_custom_call.1} parent=87 // pred_check_branch
          %728 = sbr.rel (%p726) target = $region100
        $region99: #{tpu_custom_call.1} parent=87 // pred_region
          %729 = dma.done [#allocation8], 32
        $region100: #{tpu_custom_call.1} parent=87 // pred_fallthru
          _
        %s730 = sand.u32 %s40, 1
        %s731 = scalar_lea.sflag [#allocation11], %s730
        %s732 = sand.u32 %s159, 1
        %s733 = scalar_lea.vmem [#allocation10], %s732
        // Predicated region
        $region101: #{tpu_custom_call.1} parent=87 // pred_check
          %p734 = pneg %p172
        $region102: #{tpu_custom_call.1} parent=87 // pred_check_branch
          %736 = sbr.rel (%p734) target = $region104
        $region103: #{tpu_custom_call.1} parent=87 // pred_region
          %737 = dma.done %s731, 16
        $region104: #{tpu_custom_call.1} parent=87 // pred_fallthru
          _
        %s738 = sand.u32 %s40, 1
        %s739 = scalar_lea.sflag [#allocation11], %s738
        %s740 = sand.u32 %s237, 1
        %s741 = scalar_lea.vmem [#allocation12], %s740
        // Predicated region
        $region105: #{tpu_custom_call.1} parent=87 // pred_check
          %p742 = pneg %p250
        $region106: #{tpu_custom_call.1} parent=87 // pred_check_branch
          %744 = sbr.rel (%p742) target = $region108
        $region107: #{tpu_custom_call.1} parent=87 // pred_region
          %745 = dma.done %s739, 16
        $region108: #{tpu_custom_call.1} parent=87 // pred_fallthru
          _
        %s746 = sand.u32 %s40, 1
        %s747 = scalar_lea.sflag [#allocation14], %s746
        %s748 = sand.u32 %s263, 1
        %s749 = scalar_lea.vmem [#allocation13], %s748
        // Predicated region
        $region109: #{tpu_custom_call.1} parent=87 // pred_check
          %p750 = pneg %p276
        $region110: #{tpu_custom_call.1} parent=87 // pred_check_branch
          %752 = sbr.rel (%p750) target = $region112
        $region111: #{tpu_custom_call.1} parent=87 // pred_region
          %753 = dma.done %s747, 16
        $region112: #{tpu_custom_call.1} parent=87 // pred_fallthru
          _
        %s754 = sand.u32 %s40, 1
        %s755 = scalar_lea.sflag [#allocation14], %s754
        %s756 = sand.u32 %s367, 1
        %s757 = scalar_lea.vmem [#allocation15], %s756
        // Predicated region
        $region113: #{tpu_custom_call.1} parent=87 // pred_check
          %p758 = pneg %p380
        $region114: #{tpu_custom_call.1} parent=87 // pred_check_branch
          %760 = sbr.rel (%p758) target = $region116
        $region115: #{tpu_custom_call.1} parent=87 // pred_region
          %761 = dma.done %s755, 16
        $region116: #{tpu_custom_call.1} parent=87 // pred_fallthru
          _
        %s762 = sand.u32 %s40, 1
        %s763 = scalar_lea.sflag [#allocation17], %s762
        %s764 = sand.u32 %s393, 1
        %s765 = scalar_lea.vmem [#allocation16], %s764
        // Predicated region
        $region117: #{tpu_custom_call.1} parent=87 // pred_check
          %p766 = pneg %p406
        $region118: #{tpu_custom_call.1} parent=87 // pred_check_branch
          %768 = sbr.rel (%p766) target = $region120
        $region119: #{tpu_custom_call.1} parent=87 // pred_region
          %769 = dma.done %s763, 16
        $region120: #{tpu_custom_call.1} parent=87 // pred_fallthru
          _
        %s770 = sand.u32 %s40, 1
        %s771 = scalar_lea.sflag [#allocation17], %s770
        %s772 = sand.u32 %s419, 1
        %s773 = scalar_lea.vmem [#allocation18], %s772
        // Predicated region
        $region121: #{tpu_custom_call.1} parent=87 // pred_check
          %p774 = pneg %p432
        $region122: #{tpu_custom_call.1} parent=87 // pred_check_branch
          %776 = sbr.rel (%p774) target = $region124
        $region123: #{tpu_custom_call.1} parent=87 // pred_region
          %777 = dma.done %s771, 16
        $region124: #{tpu_custom_call.1} parent=87 // pred_fallthru
          _
        %p778 = pneg %p73
        %p779 = pneg %p70
        %p780 = pneg %p94
        %p781 = pneg %p91
        %p782 = pneg %p120
        %p783 = pneg %p117
        %p784 = scmp.lt.s32.totalorder %s45, 15
        %s785 = scalar_select %p784, %s45, 15
        %s786 = smul.addr %s785, 4
        %s787 = smul.addr %s786, 8
        %s788 = scalar_lea.vmem %s3, %s787
        %p789 = pneg %p146
        %p790 = pneg %p143
        %s791 = sand.u32 %s40, 1
        %s792 = scalar_lea.sflag [#allocation11], %s791
        %s793 = sand.u32 %s159, 1
        %s794 = scalar_lea.vmem [#allocation10], %s793
        %p795 = pneg %p172
        %p796 = pneg %p169
        %p797 = scmp.lt.s32.totalorder %s45, 15
        %s798 = scalar_select %p797, %s45, 15
        %s799 = smul.addr %s798, 4
        %s800 = smul.addr %s799, 8
        %s801 = scalar_lea.vmem %s5, %s800
        %p802 = pneg %p198
        %p803 = pneg %p195
        %p804 = scmp.lt.s32.totalorder %s45, 15
        %s805 = scalar_select %p804, %s45, 15
        %s806 = scalar_lea.vmem %s6, %s805
        %p807 = pneg %p224
        %p808 = pneg %p221
        %s809 = sand.u32 %s40, 1
        %s810 = scalar_lea.sflag [#allocation11], %s809
        %s811 = sand.u32 %s237, 1
        %s812 = scalar_lea.vmem [#allocation12], %s811
        %p813 = pneg %p250
        %p814 = pneg %p247
        %s815 = sand.u32 %s40, 1
        %s816 = scalar_lea.sflag [#allocation14], %s815
        %s817 = sand.u32 %s263, 1
        %s818 = scalar_lea.vmem [#allocation13], %s817
        %p819 = pneg %p276
        %p820 = pneg %p273
        %p821 = scmp.lt.s32.totalorder %s45, 15
        %s822 = scalar_select %p821, %s45, 15
        %s823 = smul.addr %s822, 4
        %s824 = smul.addr %s823, 8
        %s825 = scalar_lea.vmem %s9, %s824
        %p826 = pneg %p302
        %p827 = pneg %p299
        %p828 = scmp.lt.s32.totalorder %s45, 15
        %s829 = scalar_select %p828, %s45, 15
        %s830 = scalar_lea.vmem %s10, %s829
        %p831 = pneg %p328
        %p832 = pneg %p325
        %p833 = scmp.lt.s32.totalorder %s45, 15
        %s834 = scalar_select %p833, %s45, 15
        %s835 = smul.addr %s834, 8
        %s836 = smul.addr %s835, 8
        %s837 = scalar_lea.vmem %s11, %s836
        %p838 = pneg %p354
        %p839 = pneg %p351
        %s840 = sand.u32 %s40, 1
        %s841 = scalar_lea.sflag [#allocation14], %s840
        %s842 = sand.u32 %s367, 1
        %s843 = scalar_lea.vmem [#allocation15], %s842
        %p844 = pneg %p380
        %p845 = pneg %p377
        %s846 = sand.u32 %s40, 1
        %s847 = scalar_lea.sflag [#allocation17], %s846
        %s848 = sand.u32 %s393, 1
        %s849 = scalar_lea.vmem [#allocation16], %s848
        %p850 = pneg %p406
        %p851 = pneg %p403
        %s852 = sand.u32 %s40, 1
        %s853 = scalar_lea.sflag [#allocation17], %s852
        %s854 = sand.u32 %s419, 1
        %s855 = scalar_lea.vmem [#allocation18], %s854
        %p856 = pneg %p432
        %p857 = pneg %p429
        %p858 = pneg %p453
        %p859 = pneg %p450
        %p860 = pneg %p474
        %p861 = pneg %p471
        %p862 = pneg %p500
        %p863 = pneg %p497
        %s864 = smul.u32 2, %s44
        %p865 = scmp.lt.s32.totalorder %s45, 15
        %s866 = scalar_select %p865, %s45, 15
        %s867 = smul.addr %s866, 4
        %s868 = smul.addr %s867, 8
        %s869 = scalar_lea.vmem %s3, %s868
        %p870 = scmp.lt.s32.totalorder %s45, 15
        %s871 = scalar_select %p870, %s45, 15
        %s872 = smul.addr %s871, 4
        %s873 = smul.addr %s872, 8
        %s874 = scalar_lea.vmem %s5, %s873
        %p875 = scmp.lt.s32.totalorder %s45, 15
        %s876 = scalar_select %p875, %s45, 15
        %s877 = scalar_lea.vmem %s6, %s876
        %p878 = scmp.lt.s32.totalorder %s45, 15
        %s879 = scalar_select %p878, %s45, 15
        %s880 = smul.addr %s879, 4
        %s881 = smul.addr %s880, 8
        %s882 = scalar_lea.vmem %s9, %s881
        %p883 = scmp.lt.s32.totalorder %s45, 15
        %s884 = scalar_select %p883, %s45, 15
        %s885 = scalar_lea.vmem %s10, %s884
        %p886 = scmp.lt.s32.totalorder %s45, 15
        %s887 = scalar_select %p886, %s45, 15
        %s888 = smul.addr %s887, 8
        %s889 = smul.addr %s888, 8
        %s890 = scalar_lea.vmem %s11, %s889
        %s891 = smul.u32 2, %s44
        %p892 = scmp.eq.s32.totalorder %s45, 0
        // Predicated region
        $region125: #{tpu_custom_call.1} parent=87 // pred_check
          %p893 = pneg %p892
        $region126: #{tpu_custom_call.1} parent=87 // pred_check_branch
          %895 = sbr.rel (%p893) target = $region128
        $region127: #{tpu_custom_call.1} parent=87 // pred_region
          %v896 = vld [vmem:[#allocation4] sm:$0xff]
          %v897 = vld [vmem:[#allocation4 + $0x8] sm:$0xff]
          %vm898 = vcmask 261120
          %899 = vst.msk [vmem:[#allocation2] sm:$0xff] %vm898, %v896
          %900 = vst.msk [vmem:[#allocation2 + $0x8] sm:$0xff] %vm898, %v897
          %v901 = vld [vmem:[#allocation7] sm:$0xff]
          %v902 = vld [vmem:[#allocation9] sm:$0x3]
          %v905 = vunpack.c.l.s4 1966171168
          %v906 = vunpack.c.0.s8 %v905
          %v907 = vlaneseq
          %v908 = vshrl.u32 %v907, 7
          %v909 = vsub.s32 %v906, %v908
          %v910 = vrot.slane %v902, %v909
          %v911 = vcombine.high %v910, %v910
          %v913 = vunpack.c.l.s4 1966171168
          %v914 = vunpack.c.0.s8 %v913
          %v915 = vlaneseq
          %v916 = vshrl.u32 %v915, 7
          %v917 = vsub.s32 %v914, %v916
          %v918 = vrot.slane %v910, %v917
          %v920 = vunpack.c.l.s4 1966171168
          %v921 = vunpack.c.0.s8 %v920
          %v922 = vlaneseq
          %v923 = vshrl.u32 %v922, 7
          %v924 = vsub.s32 %v921, %v923
          %v925 = vrot.slane %v911, %v924
          %v926 = vlaneseq
          %v927 = vshrl.u32 %v926, 7
          %v928 = vsub.s32 0, %v927
          %v929 = vrot.slane %v918, %v928
          %v930 = vlaneseq
          %v931 = vshrl.u32 %v930, 7
          %v932 = vsub.s32 0, %v931
          %v933 = vrot.slane %v925, %v932
          %v936 = vadd.f32 %v901, %v929
          %v937 = vadd.f32 %v901, %v933
          %vm938 = vcmask 64512
          %939 = vst.msk [vmem:[#allocation3] sm:$0xff] %vm938, %v936
          %940 = vst.msk [vmem:[#allocation3 + $0x8] sm:$0xff] %vm938, %v937
        $region128: #{tpu_custom_call.1} parent=87 // pred_fallthru
          _
        %v941 = vld [vmem:[#allocation2] sm:$0xff]
        %v942 = vld [vmem:[#allocation2 + $0x8] sm:$0xff]
        %v943 = vld [vmem:[%s869] sm:$0xff]
        %v944 = vld [vmem:[%s869 + $0x8] sm:$0xff]
        %v945 = vld [vmem:[%s869 + $0x10] sm:$0xff]
        %v946 = vld [vmem:[%s869 + $0x18] sm:$0xff]
        %v947 = vld [vmem:[%s733] sm:$0x1]
        %v949 = vlaneseq
        %v950 = vshrl.u32 %v949, 7
        %v951 = vsub.s32 0, %v950
        %v952 = vrot.slane %v947, %v951
        %vm954 = vcmask 261120
        %v956 = vsel %vm954, %v941, 0
        %v959 = vsel %vm954, %v942, 0
        %961 = vmatprep.subr.mxu0 0.0
        %962 = vmatpush1.msra.mxu0 %v943
        %963 = vmatprep.subr.mxu0 0.0
        %964 = vmatpush1.msra.mxu0 %v944
        %965 = vmatprep.subr.mxu0 0.0
        %966 = vmatpush1.msra.mxu0 %v945
        %967 = vmatprep.subr.mxu0 0.0
        %968 = vmatpush1.msra.mxu0 %v946
        %969 = vmatprep.subr.mxu0 0.0
        %970 = vmatpush1.msra.mxu0 0.0
        %971 = vmatprep.subr.mxu0 0.0
        %972 = vmatpush1.msra.mxu0 0.0
        %973 = vmatprep.subr.mxu0 0.0
        %974 = vmatpush1.msra.mxu0 0.0
        %975 = vmatprep.subr.mxu0 0.0
        %976 = vmatpush1.msra.mxu0 0.0
        %977 = vmatprep.subr.mxu0 0.0
        %978 = vmatpush1.msra.mxu0 0.0
        %979 = vmatprep.subr.mxu0 0.0
        %980 = vmatpush1.msra.mxu0 0.0
        %981 = vmatprep.subr.mxu0 0.0
        %982 = vmatpush1.msra.mxu0 0.0
        %983 = vmatprep.subr.mxu0 0.0
        %984 = vmatpush1.msra.mxu0 0.0
        %985 = vmatprep.subr.mxu0 0.0
        %986 = vmatpush1.msra.mxu0 0.0
        %987 = vmatprep.subr.mxu0 0.0
        %988 = vmatpush1.msra.mxu0 0.0
        %989 = vmatprep.subr.mxu0 0.0
        %990 = vmatpush1.msra.mxu0 0.0
        %991 = vmatprep.subr.mxu0 0.0
        %992 = vmatpush1.msra.mxu0 0.0
        %993 = vmatprep.subr.mxu0 0.0
        %994 = vmatpush1.msra.mxu0 0.0
        %995 = vmatprep.subr.mxu0 0.0
        %996 = vmatpush1.msra.mxu0 0.0
        %997 = vmatprep.subr.mxu0 0.0
        %998 = vmatpush1.msra.mxu0 0.0
        %999 = vmatprep.subr.mxu0 0.0
        %1000 = vmatpush1.msra.mxu0 0.0
        %1001 = vmatprep.subr.mxu0 0.0
        %1002 = vmatpush1.msra.mxu0 0.0
        %1003 = vmatprep.subr.mxu0 0.0
        %1004 = vmatpush1.msra.mxu0 0.0
        %1005 = vmatprep.subr.mxu0 0.0
        %1006 = vmatpush1.msra.mxu0 0.0
        %1007 = vmatprep.subr.mxu0 0.0
        %1008 = vmatpush1.msra.mxu0 0.0
        %1009 = vmatprep.subr.mxu0 0.0
        %1010 = vmatpush1.msra.mxu0 0.0
        %1011 = vmatprep.subr.mxu0 0.0
        %1012 = vmatpush1.msra.mxu0 0.0
        %1013 = vmatprep.subr.mxu0 0.0
        %1014 = vmatpush1.msra.mxu0 0.0
        %1015 = vmatprep.subr.mxu0 0.0
        %1016 = vmatpush1.msra.mxu0 0.0
        %1017 = vmatprep.subr.mxu0 0.0
        %1018 = vmatpush1.msra.mxu0 0.0
        %1019 = vmatprep.subr.mxu0 0.0
        %1020 = vmatpush1.msra.mxu0 0.0
        %1021 = vmatprep.subr.mxu0 0.0
        %1022 = vmatpush1.msra.mxu0 0.0
        %1023 = vmatprep.subr.mxu0 0.0
        %1024 = vmatpush1.msra.mxu0 0.0
        %1025 = vmatprep.mubr.f32.mxu0 0.0
        %1026 = vmatmul.mubr.f32.gmra.mrb[0].mxu0 %v956
        %v1027 = vpop.f32.mrb[0].mxu0
        %v1028 = vadd.f32 %v952, %v1027
        %v1029 = vpop.f32.mrb[0].mxu0
        %1030 = vmatprep.mubr.f32.mxu0 0.0
        %1031 = vmatmul.mubr.f32.gmra.mrb[0].mxu0 %v959
        %v1032 = vpop.f32.mrb[0].mxu0
        %v1033 = vadd.f32 %v952, %v1032
        %v1034 = vpop.f32.mrb[0].mxu0
        %1035 = vdwg.mxu0
        %v1036 = vld [vmem:[#allocation3] sm:$0xff]
        %v1037 = vld [vmem:[#allocation3 + $0x8] sm:$0xff]
        %1039 = vrot.lane.b32.xlu0 %v1028, 96
        %v1040 = vpop.permute.xlu0 %1039
        %vm1041 = vcmask 64512
        %v1042 = vsel %vm1041, %v1028, 0
        %v1044 = vsel %vm1041, %v1040, 0
        %1046 = vmatprep.subr.mxu0 0.0
        %1047 = vmatpush1.xpose.msra.mxu0 %v1044
        %1048 = vmatprep.subr.mxu0 0.0
        %1049 = vmatpush1.xpose.msra.mxu0 0.0
        %1050 = vmatprep.subr.mxu0 0.0
        %1051 = vmatpush1.xpose.msra.mxu0 0.0
        %1052 = vmatprep.subr.mxu0 0.0
        %1053 = vmatpush1.xpose.msra.mxu0 0.0
        %1054 = vmatprep.subr.mxu0 0.0
        %1055 = vmatpush1.xpose.msra.mxu0 0.0
        %1056 = vmatprep.subr.mxu0 0.0
        %1057 = vmatpush1.xpose.msra.mxu0 0.0
        %1058 = vmatprep.subr.mxu0 0.0
        %1059 = vmatpush1.xpose.msra.mxu0 0.0
        %1060 = vmatprep.subr.mxu0 0.0
        %1061 = vmatpush1.xpose.msra.mxu0 0.0
        %1062 = vmatprep.subr.mxu0 0.0
        %1063 = vmatpush1.xpose.msra.mxu0 0.0
        %1064 = vmatprep.subr.mxu0 0.0
        %1065 = vmatpush1.xpose.msra.mxu0 0.0
        %1066 = vmatprep.subr.mxu0 0.0
        %1067 = vmatpush1.xpose.msra.mxu0 0.0
        %1068 = vmatprep.subr.mxu0 0.0
        %1069 = vmatpush1.xpose.msra.mxu0 0.0
        %1070 = vmatprep.subr.mxu0 0.0
        %1071 = vmatpush1.xpose.msra.mxu0 0.0
        %1072 = vmatprep.subr.mxu0 0.0
        %1073 = vmatpush1.xpose.msra.mxu0 0.0
        %1074 = vmatprep.subr.mxu0 0.0
        %1075 = vmatpush1.xpose.msra.mxu0 0.0
        %1076 = vmatprep.subr.mxu0 0.0
        %1077 = vmatpush1.xpose.msra.mxu0 0.0
        %1078 = vmatprep.subr.mxu0 0.0
        %1079 = vmatpush1.xpose.msra.mxu0 0.0
        %1080 = vmatprep.subr.mxu0 0.0
        %1081 = vmatpush1.xpose.msra.mxu0 0.0
        %1082 = vmatprep.subr.mxu0 0.0
        %1083 = vmatpush1.xpose.msra.mxu0 0.0
        %1084 = vmatprep.subr.mxu0 0.0
        %1085 = vmatpush1.xpose.msra.mxu0 0.0
        %1086 = vmatprep.subr.mxu0 0.0
        %1087 = vmatpush1.xpose.msra.mxu0 0.0
        %1088 = vmatprep.subr.mxu0 0.0
        %1089 = vmatpush1.xpose.msra.mxu0 0.0
        %1090 = vmatprep.subr.mxu0 0.0
        %1091 = vmatpush1.xpose.msra.mxu0 0.0
        %1092 = vmatprep.subr.mxu0 0.0
        %1093 = vmatpush1.xpose.msra.mxu0 0.0
        %1094 = vmatprep.subr.mxu0 0.0
        %1095 = vmatpush1.xpose.msra.mxu0 0.0
        %1096 = vmatprep.subr.mxu0 0.0
        %1097 = vmatpush1.xpose.msra.mxu0 0.0
        %1098 = vmatprep.subr.mxu0 0.0
        %1099 = vmatpush1.xpose.msra.mxu0 0.0
        %1100 = vmatprep.subr.mxu0 0.0
        %1101 = vmatpush1.xpose.msra.mxu0 0.0
        %1102 = vmatprep.subr.mxu0 0.0
        %1103 = vmatpush1.xpose.msra.mxu0 0.0
        %1104 = vmatprep.subr.mxu0 0.0
        %1105 = vmatpush1.xpose.msra.mxu0 0.0
        %1106 = vmatprep.subr.mxu0 0.0
        %1107 = vmatpush1.xpose.msra.mxu0 0.0
        %1108 = vmatprep.subr.mxu0 0.0
        %1109 = vmatpush1.xpose.msra.mxu0 0.0
        %1110 = vmatprep.mubr.f32.mxu0 0.0
        %1111 = vmatmul.mubr.f32.gmra.mrb[0].mxu0 %v1042
        %v1112 = vpop.f32.mrb[0].mxu0
        %v1113 = vadd.f32 0.0, %v1112
        %v1114 = vpop.f32.mrb[0].mxu0
        %1115 = vdwg.mxu0
        %1117 = vrot.lane.b32.xlu0 %v1033, 96
        %v1118 = vpop.permute.xlu0 %1117
        %v1119 = vsel %vm1041, %v1033, 0
        %v1121 = vsel %vm1041, %v1118, 0
        %1123 = vmatprep.subr.mxu0 0.0
        %1124 = vmatpush1.xpose.msra.mxu0 %v1121
        %1125 = vmatprep.subr.mxu0 0.0
        %1126 = vmatpush1.xpose.msra.mxu0 0.0
        %1127 = vmatprep.subr.mxu0 0.0
        %1128 = vmatpush1.xpose.msra.mxu0 0.0
        %1129 = vmatprep.subr.mxu0 0.0
        %1130 = vmatpush1.xpose.msra.mxu0 0.0
        %1131 = vmatprep.subr.mxu0 0.0
        %1132 = vmatpush1.xpose.msra.mxu0 0.0
        %1133 = vmatprep.subr.mxu0 0.0
        %1134 = vmatpush1.xpose.msra.mxu0 0.0
        %1135 = vmatprep.subr.mxu0 0.0
        %1136 = vmatpush1.xpose.msra.mxu0 0.0
        %1137 = vmatprep.subr.mxu0 0.0
        %1138 = vmatpush1.xpose.msra.mxu0 0.0
        %1139 = vmatprep.subr.mxu0 0.0
        %1140 = vmatpush1.xpose.msra.mxu0 0.0
        %1141 = vmatprep.subr.mxu0 0.0
        %1142 = vmatpush1.xpose.msra.mxu0 0.0
        %1143 = vmatprep.subr.mxu0 0.0
        %1144 = vmatpush1.xpose.msra.mxu0 0.0
        %1145 = vmatprep.subr.mxu0 0.0
        %1146 = vmatpush1.xpose.msra.mxu0 0.0
        %1147 = vmatprep.subr.mxu0 0.0
        %1148 = vmatpush1.xpose.msra.mxu0 0.0
        %1149 = vmatprep.subr.mxu0 0.0
        %1150 = vmatpush1.xpose.msra.mxu0 0.0
        %1151 = vmatprep.subr.mxu0 0.0
        %1152 = vmatpush1.xpose.msra.mxu0 0.0
        %1153 = vmatprep.subr.mxu0 0.0
        %1154 = vmatpush1.xpose.msra.mxu0 0.0
        %1155 = vmatprep.subr.mxu0 0.0
        %1156 = vmatpush1.xpose.msra.mxu0 0.0
        %1157 = vmatprep.subr.mxu0 0.0
        %1158 = vmatpush1.xpose.msra.mxu0 0.0
        %1159 = vmatprep.subr.mxu0 0.0
        %1160 = vmatpush1.xpose.msra.mxu0 0.0
        %1161 = vmatprep.subr.mxu0 0.0
        %1162 = vmatpush1.xpose.msra.mxu0 0.0
        %1163 = vmatprep.subr.mxu0 0.0
        %1164 = vmatpush1.xpose.msra.mxu0 0.0
        %1165 = vmatprep.subr.mxu0 0.0
        %1166 = vmatpush1.xpose.msra.mxu0 0.0
        %1167 = vmatprep.subr.mxu0 0.0
        %1168 = vmatpush1.xpose.msra.mxu0 0.0
        %1169 = vmatprep.subr.mxu0 0.0
        %1170 = vmatpush1.xpose.msra.mxu0 0.0
        %1171 = vmatprep.subr.mxu0 0.0
        %1172 = vmatpush1.xpose.msra.mxu0 0.0
        %1173 = vmatprep.subr.mxu0 0.0
        %1174 = vmatpush1.xpose.msra.mxu0 0.0
        %1175 = vmatprep.subr.mxu0 0.0
        %1176 = vmatpush1.xpose.msra.mxu0 0.0
        %1177 = vmatprep.subr.mxu0 0.0
        %1178 = vmatpush1.xpose.msra.mxu0 0.0
        %1179 = vmatprep.subr.mxu0 0.0
        %1180 = vmatpush1.xpose.msra.mxu0 0.0
        %1181 = vmatprep.subr.mxu0 0.0
        %1182 = vmatpush1.xpose.msra.mxu0 0.0
        %1183 = vmatprep.subr.mxu0 0.0
        %1184 = vmatpush1.xpose.msra.mxu0 0.0
        %1185 = vmatprep.subr.mxu0 0.0
        %1186 = vmatpush1.xpose.msra.mxu0 0.0
        %1187 = vmatprep.mubr.f32.mxu0 0.0
        %1188 = vmatmul.mubr.f32.gmra.mrb[0].mxu0 %v1119
        %v1189 = vpop.f32.mrb[0].mxu0
        %v1190 = vadd.f32 0.0, %v1189
        %v1191 = vpop.f32.mrb[0].mxu0
        %1192 = vdwg.mxu0
        %v1193 = vmul.f32 %v1113, 0.35355338
        %v1194 = vmul.f32 %v1190, 0.35355338
        %v1195 = vadd.f32 %v1193, %v1036
        %v1196 = vadd.f32 %v1194, %v1037
        %v1197 = vsel %vm1041, %v1195, -inf
        %1198 = vmax.xlane.f32.xlu0 %v1197
        %v1199 = vpop.xlane.xlu0 %1198
        %v1200 = vsel %vm1041, %v1196, -inf
        %1201 = vmax.xlane.f32.xlu0 %v1200
        %v1202 = vpop.xlane.xlu0 %1201
        %v1203 = vsub.f32 %v1195, %v1199
        %v1204 = vsub.f32 %v1196, %v1202
        %v1205 = vmul.f32 %v1203, 1.442695
        %v1206 = vpow.pop %v1205
        %v1207 = vmul.f32 %v1204, 1.442695
        %v1208 = vpow.pop %v1207
        %v1209 = vsel %vm1041, %v1206, 0.0
        %1210 = vadd.xlane.f32.xlu0 %v1209
        %v1211 = vpop.xlane.xlu0 %1210
        %v1212 = vsel %vm1041, %v1208, 0.0
        %1213 = vadd.xlane.f32.xlu0 %v1212
        %v1214 = vpop.xlane.xlu0 %1213
        %v1215 = vrcp.pop %v1211
        %v1216 = vrcp.pop %v1214
        %v1217 = vmul.f32 %v1206, %v1215
        %v1218 = vmul.f32 %v1208, %v1216
        %1219 = vrot.lane.b32.xlu0 %v1028, 64
        %v1220 = vpop.permute.xlu0 %1219
        %v1223 = vsel %vm1041, %v1217, 0
        %1225 = vmatprep.subr.mxu0 0.0
        %1226 = vmatpush1.msra.mxu0 %v1220
        %1227 = vmatprep.subr.mxu0 0.0
        %1228 = vmatpush1.msra.mxu0 0.0
        %1229 = vmatprep.subr.mxu0 0.0
        %1230 = vmatpush1.msra.mxu0 0.0
        %1231 = vmatprep.subr.mxu0 0.0
        %1232 = vmatpush1.msra.mxu0 0.0
        %1233 = vmatprep.subr.mxu0 0.0
        %1234 = vmatpush1.msra.mxu0 0.0
        %1235 = vmatprep.subr.mxu0 0.0
        %1236 = vmatpush1.msra.mxu0 0.0
        %1237 = vmatprep.subr.mxu0 0.0
        %1238 = vmatpush1.msra.mxu0 0.0
        %1239 = vmatprep.subr.mxu0 0.0
        %1240 = vmatpush1.msra.mxu0 0.0
        %1241 = vmatprep.subr.mxu0 0.0
        %1242 = vmatpush1.msra.mxu0 0.0
        %1243 = vmatprep.subr.mxu0 0.0
        %1244 = vmatpush1.msra.mxu0 0.0
        %1245 = vmatprep.subr.mxu0 0.0
        %1246 = vmatpush1.msra.mxu0 0.0
        %1247 = vmatprep.subr.mxu0 0.0
        %1248 = vmatpush1.msra.mxu0 0.0
        %1249 = vmatprep.subr.mxu0 0.0
        %1250 = vmatpush1.msra.mxu0 0.0
        %1251 = vmatprep.subr.mxu0 0.0
        %1252 = vmatpush1.msra.mxu0 0.0
        %1253 = vmatprep.subr.mxu0 0.0
        %1254 = vmatpush1.msra.mxu0 0.0
        %1255 = vmatprep.subr.mxu0 0.0
        %1256 = vmatpush1.msra.mxu0 0.0
        %1257 = vmatprep.subr.mxu0 0.0
        %1258 = vmatpush1.msra.mxu0 0.0
        %1259 = vmatprep.subr.mxu0 0.0
        %1260 = vmatpush1.msra.mxu0 0.0
        %1261 = vmatprep.subr.mxu0 0.0
        %1262 = vmatpush1.msra.mxu0 0.0
        %1263 = vmatprep.subr.mxu0 0.0
        %1264 = vmatpush1.msra.mxu0 0.0
        %1265 = vmatprep.subr.mxu0 0.0
        %1266 = vmatpush1.msra.mxu0 0.0
        %1267 = vmatprep.subr.mxu0 0.0
        %1268 = vmatpush1.msra.mxu0 0.0
        %1269 = vmatprep.subr.mxu0 0.0
        %1270 = vmatpush1.msra.mxu0 0.0
        %1271 = vmatprep.subr.mxu0 0.0
        %1272 = vmatpush1.msra.mxu0 0.0
        %1273 = vmatprep.subr.mxu0 0.0
        %1274 = vmatpush1.msra.mxu0 0.0
        %1275 = vmatprep.subr.mxu0 0.0
        %1276 = vmatpush1.msra.mxu0 0.0
        %1277 = vmatprep.subr.mxu0 0.0
        %1278 = vmatpush1.msra.mxu0 0.0
        %1279 = vmatprep.subr.mxu0 0.0
        %1280 = vmatpush1.msra.mxu0 0.0
        %1281 = vmatprep.subr.mxu0 0.0
        %1282 = vmatpush1.msra.mxu0 0.0
        %1283 = vmatprep.subr.mxu0 0.0
        %1284 = vmatpush1.msra.mxu0 0.0
        %1285 = vmatprep.subr.mxu0 0.0
        %1286 = vmatpush1.msra.mxu0 0.0
        %1287 = vmatprep.subr.mxu0 0.0
        %1288 = vmatpush1.msra.mxu0 0.0
        %1289 = vmatprep.mubr.f32.mxu0 0.0
        %1290 = vmatmul.mubr.f32.gmra.mrb[0].mxu0 %v1223
        %v1291 = vpop.f32.mrb[0].mxu0
        %v1292 = vadd.f32 0.0, %v1291
        %v1293 = vpop.f32.mrb[0].mxu0
        %1294 = vdwg.mxu0
        %1295 = vrot.lane.b32.xlu0 %v1033, 64
        %v1296 = vpop.permute.xlu0 %1295
        %v1299 = vsel %vm1041, %v1218, 0
        %1301 = vmatprep.subr.mxu0 0.0
        %1302 = vmatpush1.msra.mxu0 %v1296
        %1303 = vmatprep.subr.mxu0 0.0
        %1304 = vmatpush1.msra.mxu0 0.0
        %1305 = vmatprep.subr.mxu0 0.0
        %1306 = vmatpush1.msra.mxu0 0.0
        %1307 = vmatprep.subr.mxu0 0.0
        %1308 = vmatpush1.msra.mxu0 0.0
        %1309 = vmatprep.subr.mxu0 0.0
        %1310 = vmatpush1.msra.mxu0 0.0
        %1311 = vmatprep.subr.mxu0 0.0
        %1312 = vmatpush1.msra.mxu0 0.0
        %1313 = vmatprep.subr.mxu0 0.0
        %1314 = vmatpush1.msra.mxu0 0.0
        %1315 = vmatprep.subr.mxu0 0.0
        %1316 = vmatpush1.msra.mxu0 0.0
        %1317 = vmatprep.subr.mxu0 0.0
        %1318 = vmatpush1.msra.mxu0 0.0
        %1319 = vmatprep.subr.mxu0 0.0
        %1320 = vmatpush1.msra.mxu0 0.0
        %1321 = vmatprep.subr.mxu0 0.0
        %1322 = vmatpush1.msra.mxu0 0.0
        %1323 = vmatprep.subr.mxu0 0.0
        %1324 = vmatpush1.msra.mxu0 0.0
        %1325 = vmatprep.subr.mxu0 0.0
        %1326 = vmatpush1.msra.mxu0 0.0
        %1327 = vmatprep.subr.mxu0 0.0
        %1328 = vmatpush1.msra.mxu0 0.0
        %1329 = vmatprep.subr.mxu0 0.0
        %1330 = vmatpush1.msra.mxu0 0.0
        %1331 = vmatprep.subr.mxu0 0.0
        %1332 = vmatpush1.msra.mxu0 0.0
        %1333 = vmatprep.subr.mxu0 0.0
        %1334 = vmatpush1.msra.mxu0 0.0
        %1335 = vmatprep.subr.mxu0 0.0
        %1336 = vmatpush1.msra.mxu0 0.0
        %1337 = vmatprep.subr.mxu0 0.0
        %1338 = vmatpush1.msra.mxu0 0.0
        %1339 = vmatprep.subr.mxu0 0.0
        %1340 = vmatpush1.msra.mxu0 0.0
        %1341 = vmatprep.subr.mxu0 0.0
        %1342 = vmatpush1.msra.mxu0 0.0
        %1343 = vmatprep.subr.mxu0 0.0
        %1344 = vmatpush1.msra.mxu0 0.0
        %1345 = vmatprep.subr.mxu0 0.0
        %1346 = vmatpush1.msra.mxu0 0.0
        %1347 = vmatprep.subr.mxu0 0.0
        %1348 = vmatpush1.msra.mxu0 0.0
        %1349 = vmatprep.subr.mxu0 0.0
        %1350 = vmatpush1.msra.mxu0 0.0
        %1351 = vmatprep.subr.mxu0 0.0
        %1352 = vmatpush1.msra.mxu0 0.0
        %1353 = vmatprep.subr.mxu0 0.0
        %1354 = vmatpush1.msra.mxu0 0.0
        %1355 = vmatprep.subr.mxu0 0.0
        %1356 = vmatpush1.msra.mxu0 0.0
        %1357 = vmatprep.subr.mxu0 0.0
        %1358 = vmatpush1.msra.mxu0 0.0
        %1359 = vmatprep.subr.mxu0 0.0
        %1360 = vmatpush1.msra.mxu0 0.0
        %1361 = vmatprep.subr.mxu0 0.0
        %1362 = vmatpush1.msra.mxu0 0.0
        %1363 = vmatprep.subr.mxu0 0.0
        %1364 = vmatpush1.msra.mxu0 0.0
        %1365 = vmatprep.mubr.f32.mxu0 0.0
        %1366 = vmatmul.mubr.f32.gmra.mrb[0].mxu0 %v1299
        %v1367 = vpop.f32.mrb[0].mxu0
        %v1368 = vadd.f32 0.0, %v1367
        %v1369 = vpop.f32.mrb[0].mxu0
        %1370 = vdwg.mxu0
        %1371 = vrot.lane.b32.xlu0 %v1028, 120
        %v1372 = vpop.permute.xlu0 %1371
        %1373 = vrot.lane.b32.xlu0 %v1028, 88
        %v1374 = vpop.permute.xlu0 %1373
        %v1375 = vsel %vm1041, %v1372, 0
        %v1377 = vsel %vm1041, %v1374, 0
        %1379 = vmatprep.subr.mxu0 0.0
        %1380 = vmatpush1.xpose.msra.mxu0 %v1377
        %1381 = vmatprep.subr.mxu0 0.0
        %1382 = vmatpush1.xpose.msra.mxu0 0.0
        %1383 = vmatprep.subr.mxu0 0.0
        %1384 = vmatpush1.xpose.msra.mxu0 0.0
        %1385 = vmatprep.subr.mxu0 0.0
        %1386 = vmatpush1.xpose.msra.mxu0 0.0
        %1387 = vmatprep.subr.mxu0 0.0
        %1388 = vmatpush1.xpose.msra.mxu0 0.0
        %1389 = vmatprep.subr.mxu0 0.0
        %1390 = vmatpush1.xpose.msra.mxu0 0.0
        %1391 = vmatprep.subr.mxu0 0.0
        %1392 = vmatpush1.xpose.msra.mxu0 0.0
        %1393 = vmatprep.subr.mxu0 0.0
        %1394 = vmatpush1.xpose.msra.mxu0 0.0
        %1395 = vmatprep.subr.mxu0 0.0
        %1396 = vmatpush1.xpose.msra.mxu0 0.0
        %1397 = vmatprep.subr.mxu0 0.0
        %1398 = vmatpush1.xpose.msra.mxu0 0.0
        %1399 = vmatprep.subr.mxu0 0.0
        %1400 = vmatpush1.xpose.msra.mxu0 0.0
        %1401 = vmatprep.subr.mxu0 0.0
        %1402 = vmatpush1.xpose.msra.mxu0 0.0
        %1403 = vmatprep.subr.mxu0 0.0
        %1404 = vmatpush1.xpose.msra.mxu0 0.0
        %1405 = vmatprep.subr.mxu0 0.0
        %1406 = vmatpush1.xpose.msra.mxu0 0.0
        %1407 = vmatprep.subr.mxu0 0.0
        %1408 = vmatpush1.xpose.msra.mxu0 0.0
        %1409 = vmatprep.subr.mxu0 0.0
        %1410 = vmatpush1.xpose.msra.mxu0 0.0
        %1411 = vmatprep.subr.mxu0 0.0
        %1412 = vmatpush1.xpose.msra.mxu0 0.0
        %1413 = vmatprep.subr.mxu0 0.0
        %1414 = vmatpush1.xpose.msra.mxu0 0.0
        %1415 = vmatprep.subr.mxu0 0.0
        %1416 = vmatpush1.xpose.msra.mxu0 0.0
        %1417 = vmatprep.subr.mxu0 0.0
        %1418 = vmatpush1.xpose.msra.mxu0 0.0
        %1419 = vmatprep.subr.mxu0 0.0
        %1420 = vmatpush1.xpose.msra.mxu0 0.0
        %1421 = vmatprep.subr.mxu0 0.0
        %1422 = vmatpush1.xpose.msra.mxu0 0.0
        %1423 = vmatprep.subr.mxu0 0.0
        %1424 = vmatpush1.xpose.msra.mxu0 0.0
        %1425 = vmatprep.subr.mxu0 0.0
        %1426 = vmatpush1.xpose.msra.mxu0 0.0
        %1427 = vmatprep.subr.mxu0 0.0
        %1428 = vmatpush1.xpose.msra.mxu0 0.0
        %1429 = vmatprep.subr.mxu0 0.0
        %1430 = vmatpush1.xpose.msra.mxu0 0.0
        %1431 = vmatprep.subr.mxu0 0.0
        %1432 = vmatpush1.xpose.msra.mxu0 0.0
        %1433 = vmatprep.subr.mxu0 0.0
        %1434 = vmatpush1.xpose.msra.mxu0 0.0
        %1435 = vmatprep.subr.mxu0 0.0
        %1436 = vmatpush1.xpose.msra.mxu0 0.0
        %1437 = vmatprep.subr.mxu0 0.0
        %1438 = vmatpush1.xpose.msra.mxu0 0.0
        %1439 = vmatprep.subr.mxu0 0.0
        %1440 = vmatpush1.xpose.msra.mxu0 0.0
        %1441 = vmatprep.subr.mxu0 0.0
        %1442 = vmatpush1.xpose.msra.mxu0 0.0
        %1443 = vmatprep.mubr.f32.mxu0 0.0
        %1444 = vmatmul.mubr.f32.gmra.mrb[0].mxu0 %v1375
        %v1445 = vpop.f32.mrb[0].mxu0
        %v1446 = vadd.f32 0.0, %v1445
        %v1447 = vpop.f32.mrb[0].mxu0
        %1448 = vdwg.mxu0
        %1449 = vrot.lane.b32.xlu0 %v1033, 120
        %v1450 = vpop.permute.xlu0 %1449
        %1451 = vrot.lane.b32.xlu0 %v1033, 88
        %v1452 = vpop.permute.xlu0 %1451
        %v1453 = vsel %vm1041, %v1450, 0
        %v1455 = vsel %vm1041, %v1452, 0
        %1457 = vmatprep.subr.mxu0 0.0
        %1458 = vmatpush1.xpose.msra.mxu0 %v1455
        %1459 = vmatprep.subr.mxu0 0.0
        %1460 = vmatpush1.xpose.msra.mxu0 0.0
        %1461 = vmatprep.subr.mxu0 0.0
        %1462 = vmatpush1.xpose.msra.mxu0 0.0
        %1463 = vmatprep.subr.mxu0 0.0
        %1464 = vmatpush1.xpose.msra.mxu0 0.0
        %1465 = vmatprep.subr.mxu0 0.0
        %1466 = vmatpush1.xpose.msra.mxu0 0.0
        %1467 = vmatprep.subr.mxu0 0.0
        %1468 = vmatpush1.xpose.msra.mxu0 0.0
        %1469 = vmatprep.subr.mxu0 0.0
        %1470 = vmatpush1.xpose.msra.mxu0 0.0
        %1471 = vmatprep.subr.mxu0 0.0
        %1472 = vmatpush1.xpose.msra.mxu0 0.0
        %1473 = vmatprep.subr.mxu0 0.0
        %1474 = vmatpush1.xpose.msra.mxu0 0.0
        %1475 = vmatprep.subr.mxu0 0.0
        %1476 = vmatpush1.xpose.msra.mxu0 0.0
        %1477 = vmatprep.subr.mxu0 0.0
        %1478 = vmatpush1.xpose.msra.mxu0 0.0
        %1479 = vmatprep.subr.mxu0 0.0
        %1480 = vmatpush1.xpose.msra.mxu0 0.0
        %1481 = vmatprep.subr.mxu0 0.0
        %1482 = vmatpush1.xpose.msra.mxu0 0.0
        %1483 = vmatprep.subr.mxu0 0.0
        %1484 = vmatpush1.xpose.msra.mxu0 0.0
        %1485 = vmatprep.subr.mxu0 0.0
        %1486 = vmatpush1.xpose.msra.mxu0 0.0
        %1487 = vmatprep.subr.mxu0 0.0
        %1488 = vmatpush1.xpose.msra.mxu0 0.0
        %1489 = vmatprep.subr.mxu0 0.0
        %1490 = vmatpush1.xpose.msra.mxu0 0.0
        %1491 = vmatprep.subr.mxu0 0.0
        %1492 = vmatpush1.xpose.msra.mxu0 0.0
        %1493 = vmatprep.subr.mxu0 0.0
        %1494 = vmatpush1.xpose.msra.mxu0 0.0
        %1495 = vmatprep.subr.mxu0 0.0
        %1496 = vmatpush1.xpose.msra.mxu0 0.0
        %1497 = vmatprep.subr.mxu0 0.0
        %1498 = vmatpush1.xpose.msra.mxu0 0.0
        %1499 = vmatprep.subr.mxu0 0.0
        %1500 = vmatpush1.xpose.msra.mxu0 0.0
        %1501 = vmatprep.subr.mxu0 0.0
        %1502 = vmatpush1.xpose.msra.mxu0 0.0
        %1503 = vmatprep.subr.mxu0 0.0
        %1504 = vmatpush1.xpose.msra.mxu0 0.0
        %1505 = vmatprep.subr.mxu0 0.0
        %1506 = vmatpush1.xpose.msra.mxu0 0.0
        %1507 = vmatprep.subr.mxu0 0.0
        %1508 = vmatpush1.xpose.msra.mxu0 0.0
        %1509 = vmatprep.subr.mxu0 0.0
        %1510 = vmatpush1.xpose.msra.mxu0 0.0
        %1511 = vmatprep.subr.mxu0 0.0
        %1512 = vmatpush1.xpose.msra.mxu0 0.0
        %1513 = vmatprep.subr.mxu0 0.0
        %1514 = vmatpush1.xpose.msra.mxu0 0.0
        %1515 = vmatprep.subr.mxu0 0.0
        %1516 = vmatpush1.xpose.msra.mxu0 0.0
        %1517 = vmatprep.subr.mxu0 0.0
        %1518 = vmatpush1.xpose.msra.mxu0 0.0
        %1519 = vmatprep.subr.mxu0 0.0
        %1520 = vmatpush1.xpose.msra.mxu0 0.0
        %1521 = vmatprep.mubr.f32.mxu0 0.0
        %1522 = vmatmul.mubr.f32.gmra.mrb[0].mxu0 %v1453
        %v1523 = vpop.f32.mrb[0].mxu0
        %v1524 = vadd.f32 0.0, %v1523
        %v1525 = vpop.f32.mrb[0].mxu0
        %1526 = vdwg.mxu0
        %v1527 = vmul.f32 %v1446, 0.35355338
        %v1528 = vmul.f32 %v1524, 0.35355338
        %v1529 = vadd.f32 %v1527, %v1036
        %v1530 = vadd.f32 %v1528, %v1037
        %v1531 = vsel %vm1041, %v1529, -inf
        %1532 = vmax.xlane.f32.xlu0 %v1531
        %v1533 = vpop.xlane.xlu0 %1532
        %v1534 = vsel %vm1041, %v1530, -inf
        %1535 = vmax.xlane.f32.xlu0 %v1534
        %v1536 = vpop.xlane.xlu0 %1535
        %v1537 = vsub.f32 %v1529, %v1533
        %v1538 = vsub.f32 %v1530, %v1536
        %v1539 = vmul.f32 %v1537, 1.442695
        %v1540 = vpow.pop %v1539
        %v1541 = vmul.f32 %v1538, 1.442695
        %v1542 = vpow.pop %v1541
        %v1543 = vsel %vm1041, %v1540, 0.0
        %1544 = vadd.xlane.f32.xlu0 %v1543
        %v1545 = vpop.xlane.xlu0 %1544
        %v1546 = vsel %vm1041, %v1542, 0.0
        %1547 = vadd.xlane.f32.xlu0 %v1546
        %v1548 = vpop.xlane.xlu0 %1547
        %v1549 = vrcp.pop %v1545
        %v1550 = vrcp.pop %v1548
        %v1551 = vmul.f32 %v1540, %v1549
        %v1552 = vmul.f32 %v1542, %v1550
        %1553 = vrot.lane.b32.xlu0 %v1028, 56
        %v1554 = vpop.permute.xlu0 %1553
        %v1557 = vsel %vm1041, %v1551, 0
        %1559 = vmatprep.subr.mxu0 0.0
        %1560 = vmatpush1.msra.mxu0 %v1554
        %1561 = vmatprep.subr.mxu0 0.0
        %1562 = vmatpush1.msra.mxu0 0.0
        %1563 = vmatprep.subr.mxu0 0.0
        %1564 = vmatpush1.msra.mxu0 0.0
        %1565 = vmatprep.subr.mxu0 0.0
        %1566 = vmatpush1.msra.mxu0 0.0
        %1567 = vmatprep.subr.mxu0 0.0
        %1568 = vmatpush1.msra.mxu0 0.0
        %1569 = vmatprep.subr.mxu0 0.0
        %1570 = vmatpush1.msra.mxu0 0.0
        %1571 = vmatprep.subr.mxu0 0.0
        %1572 = vmatpush1.msra.mxu0 0.0
        %1573 = vmatprep.subr.mxu0 0.0
        %1574 = vmatpush1.msra.mxu0 0.0
        %1575 = vmatprep.subr.mxu0 0.0
        %1576 = vmatpush1.msra.mxu0 0.0
        %1577 = vmatprep.subr.mxu0 0.0
        %1578 = vmatpush1.msra.mxu0 0.0
        %1579 = vmatprep.subr.mxu0 0.0
        %1580 = vmatpush1.msra.mxu0 0.0
        %1581 = vmatprep.subr.mxu0 0.0
        %1582 = vmatpush1.msra.mxu0 0.0
        %1583 = vmatprep.subr.mxu0 0.0
        %1584 = vmatpush1.msra.mxu0 0.0
        %1585 = vmatprep.subr.mxu0 0.0
        %1586 = vmatpush1.msra.mxu0 0.0
        %1587 = vmatprep.subr.mxu0 0.0
        %1588 = vmatpush1.msra.mxu0 0.0
        %1589 = vmatprep.subr.mxu0 0.0
        %1590 = vmatpush1.msra.mxu0 0.0
        %1591 = vmatprep.subr.mxu0 0.0
        %1592 = vmatpush1.msra.mxu0 0.0
        %1593 = vmatprep.subr.mxu0 0.0
        %1594 = vmatpush1.msra.mxu0 0.0
        %1595 = vmatprep.subr.mxu0 0.0
        %1596 = vmatpush1.msra.mxu0 0.0
        %1597 = vmatprep.subr.mxu0 0.0
        %1598 = vmatpush1.msra.mxu0 0.0
        %1599 = vmatprep.subr.mxu0 0.0
        %1600 = vmatpush1.msra.mxu0 0.0
        %1601 = vmatprep.subr.mxu0 0.0
        %1602 = vmatpush1.msra.mxu0 0.0
        %1603 = vmatprep.subr.mxu0 0.0
        %1604 = vmatpush1.msra.mxu0 0.0
        %1605 = vmatprep.subr.mxu0 0.0
        %1606 = vmatpush1.msra.mxu0 0.0
        %1607 = vmatprep.subr.mxu0 0.0
        %1608 = vmatpush1.msra.mxu0 0.0
        %1609 = vmatprep.subr.mxu0 0.0
        %1610 = vmatpush1.msra.mxu0 0.0
        %1611 = vmatprep.subr.mxu0 0.0
        %1612 = vmatpush1.msra.mxu0 0.0
        %1613 = vmatprep.subr.mxu0 0.0
        %1614 = vmatpush1.msra.mxu0 0.0
        %1615 = vmatprep.subr.mxu0 0.0
        %1616 = vmatpush1.msra.mxu0 0.0
        %1617 = vmatprep.subr.mxu0 0.0
        %1618 = vmatpush1.msra.mxu0 0.0
        %1619 = vmatprep.subr.mxu0 0.0
        %1620 = vmatpush1.msra.mxu0 0.0
        %1621 = vmatprep.subr.mxu0 0.0
        %1622 = vmatpush1.msra.mxu0 0.0
        %1623 = vmatprep.mubr.f32.mxu0 0.0
        %1624 = vmatmul.mubr.f32.gmra.mrb[0].mxu0 %v1557
        %v1625 = vpop.f32.mrb[0].mxu0
        %v1626 = vadd.f32 0.0, %v1625
        %v1627 = vpop.f32.mrb[0].mxu0
        %1628 = vdwg.mxu0
        %1629 = vrot.lane.b32.xlu0 %v1033, 56
        %v1630 = vpop.permute.xlu0 %1629
        %v1633 = vsel %vm1041, %v1552, 0
        %1635 = vmatprep.subr.mxu0 0.0
        %1636 = vmatpush1.msra.mxu0 %v1630
        %1637 = vmatprep.subr.mxu0 0.0
        %1638 = vmatpush1.msra.mxu0 0.0
        %1639 = vmatprep.subr.mxu0 0.0
        %1640 = vmatpush1.msra.mxu0 0.0
        %1641 = vmatprep.subr.mxu0 0.0
        %1642 = vmatpush1.msra.mxu0 0.0
        %1643 = vmatprep.subr.mxu0 0.0
        %1644 = vmatpush1.msra.mxu0 0.0
        %1645 = vmatprep.subr.mxu0 0.0
        %1646 = vmatpush1.msra.mxu0 0.0
        %1647 = vmatprep.subr.mxu0 0.0
        %1648 = vmatpush1.msra.mxu0 0.0
        %1649 = vmatprep.subr.mxu0 0.0
        %1650 = vmatpush1.msra.mxu0 0.0
        %1651 = vmatprep.subr.mxu0 0.0
        %1652 = vmatpush1.msra.mxu0 0.0
        %1653 = vmatprep.subr.mxu0 0.0
        %1654 = vmatpush1.msra.mxu0 0.0
        %1655 = vmatprep.subr.mxu0 0.0
        %1656 = vmatpush1.msra.mxu0 0.0
        %1657 = vmatprep.subr.mxu0 0.0
        %1658 = vmatpush1.msra.mxu0 0.0
        %1659 = vmatprep.subr.mxu0 0.0
        %1660 = vmatpush1.msra.mxu0 0.0
        %1661 = vmatprep.subr.mxu0 0.0
        %1662 = vmatpush1.msra.mxu0 0.0
        %1663 = vmatprep.subr.mxu0 0.0
        %1664 = vmatpush1.msra.mxu0 0.0
        %1665 = vmatprep.subr.mxu0 0.0
        %1666 = vmatpush1.msra.mxu0 0.0
        %1667 = vmatprep.subr.mxu0 0.0
        %1668 = vmatpush1.msra.mxu0 0.0
        %1669 = vmatprep.subr.mxu0 0.0
        %1670 = vmatpush1.msra.mxu0 0.0
        %1671 = vmatprep.subr.mxu0 0.0
        %1672 = vmatpush1.msra.mxu0 0.0
        %1673 = vmatprep.subr.mxu0 0.0
        %1674 = vmatpush1.msra.mxu0 0.0
        %1675 = vmatprep.subr.mxu0 0.0
        %1676 = vmatpush1.msra.mxu0 0.0
        %1677 = vmatprep.subr.mxu0 0.0
        %1678 = vmatpush1.msra.mxu0 0.0
        %1679 = vmatprep.subr.mxu0 0.0
        %1680 = vmatpush1.msra.mxu0 0.0
        %1681 = vmatprep.subr.mxu0 0.0
        %1682 = vmatpush1.msra.mxu0 0.0
        %1683 = vmatprep.subr.mxu0 0.0
        %1684 = vmatpush1.msra.mxu0 0.0
        %1685 = vmatprep.subr.mxu0 0.0
        %1686 = vmatpush1.msra.mxu0 0.0
        %1687 = vmatprep.subr.mxu0 0.0
        %1688 = vmatpush1.msra.mxu0 0.0
        %1689 = vmatprep.subr.mxu0 0.0
        %1690 = vmatpush1.msra.mxu0 0.0
        %1691 = vmatprep.subr.mxu0 0.0
        %1692 = vmatpush1.msra.mxu0 0.0
        %1693 = vmatprep.subr.mxu0 0.0
        %1694 = vmatpush1.msra.mxu0 0.0
        %1695 = vmatprep.subr.mxu0 0.0
        %1696 = vmatpush1.msra.mxu0 0.0
        %1697 = vmatprep.subr.mxu0 0.0
        %1698 = vmatpush1.msra.mxu0 0.0
        %1699 = vmatprep.mubr.f32.mxu0 0.0
        %1700 = vmatmul.mubr.f32.gmra.mrb[0].mxu0 %v1633
        %v1701 = vpop.f32.mrb[0].mxu0
        %v1702 = vadd.f32 0.0, %v1701
        %v1703 = vpop.f32.mrb[0].mxu0
        %1704 = vdwg.mxu0
        %1705 = vrot.lane.b32.xlu0 %v1028, 112
        %v1706 = vpop.permute.xlu0 %1705
        %1707 = vrot.lane.b32.xlu0 %v1028, 80
        %v1708 = vpop.permute.xlu0 %1707
        %v1709 = vsel %vm1041, %v1706, 0
        %v1711 = vsel %vm1041, %v1708, 0
        %1713 = vmatprep.subr.mxu0 0.0
        %1714 = vmatpush1.xpose.msra.mxu0 %v1711
        %1715 = vmatprep.subr.mxu0 0.0
        %1716 = vmatpush1.xpose.msra.mxu0 0.0
        %1717 = vmatprep.subr.mxu0 0.0
        %1718 = vmatpush1.xpose.msra.mxu0 0.0
        %1719 = vmatprep.subr.mxu0 0.0
        %1720 = vmatpush1.xpose.msra.mxu0 0.0
        %1721 = vmatprep.subr.mxu0 0.0
        %1722 = vmatpush1.xpose.msra.mxu0 0.0
        %1723 = vmatprep.subr.mxu0 0.0
        %1724 = vmatpush1.xpose.msra.mxu0 0.0
        %1725 = vmatprep.subr.mxu0 0.0
        %1726 = vmatpush1.xpose.msra.mxu0 0.0
        %1727 = vmatprep.subr.mxu0 0.0
        %1728 = vmatpush1.xpose.msra.mxu0 0.0
        %1729 = vmatprep.subr.mxu0 0.0
        %1730 = vmatpush1.xpose.msra.mxu0 0.0
        %1731 = vmatprep.subr.mxu0 0.0
        %1732 = vmatpush1.xpose.msra.mxu0 0.0
        %1733 = vmatprep.subr.mxu0 0.0
        %1734 = vmatpush1.xpose.msra.mxu0 0.0
        %1735 = vmatprep.subr.mxu0 0.0
        %1736 = vmatpush1.xpose.msra.mxu0 0.0
        %1737 = vmatprep.subr.mxu0 0.0
        %1738 = vmatpush1.xpose.msra.mxu0 0.0
        %1739 = vmatprep.subr.mxu0 0.0
        %1740 = vmatpush1.xpose.msra.mxu0 0.0
        %1741 = vmatprep.subr.mxu0 0.0
        %1742 = vmatpush1.xpose.msra.mxu0 0.0
        %1743 = vmatprep.subr.mxu0 0.0
        %1744 = vmatpush1.xpose.msra.mxu0 0.0
        %1745 = vmatprep.subr.mxu0 0.0
        %1746 = vmatpush1.xpose.msra.mxu0 0.0
        %1747 = vmatprep.subr.mxu0 0.0
        %1748 = vmatpush1.xpose.msra.mxu0 0.0
        %1749 = vmatprep.subr.mxu0 0.0
        %1750 = vmatpush1.xpose.msra.mxu0 0.0
        %1751 = vmatprep.subr.mxu0 0.0
        %1752 = vmatpush1.xpose.msra.mxu0 0.0
        %1753 = vmatprep.subr.mxu0 0.0
        %1754 = vmatpush1.xpose.msra.mxu0 0.0
        %1755 = vmatprep.subr.mxu0 0.0
        %1756 = vmatpush1.xpose.msra.mxu0 0.0
        %1757 = vmatprep.subr.mxu0 0.0
        %1758 = vmatpush1.xpose.msra.mxu0 0.0
        %1759 = vmatprep.subr.mxu0 0.0
        %1760 = vmatpush1.xpose.msra.mxu0 0.0
        %1761 = vmatprep.subr.mxu0 0.0
        %1762 = vmatpush1.xpose.msra.mxu0 0.0
        %1763 = vmatprep.subr.mxu0 0.0
        %1764 = vmatpush1.xpose.msra.mxu0 0.0
        %1765 = vmatprep.subr.mxu0 0.0
        %1766 = vmatpush1.xpose.msra.mxu0 0.0
        %1767 = vmatprep.subr.mxu0 0.0
        %1768 = vmatpush1.xpose.msra.mxu0 0.0
        %1769 = vmatprep.subr.mxu0 0.0
        %1770 = vmatpush1.xpose.msra.mxu0 0.0
        %1771 = vmatprep.subr.mxu0 0.0
        %1772 = vmatpush1.xpose.msra.mxu0 0.0
        %1773 = vmatprep.subr.mxu0 0.0
        %1774 = vmatpush1.xpose.msra.mxu0 0.0
        %1775 = vmatprep.subr.mxu0 0.0
        %1776 = vmatpush1.xpose.msra.mxu0 0.0
        %1777 = vmatprep.mubr.f32.mxu0 0.0
        %1778 = vmatmul.mubr.f32.gmra.mrb[0].mxu0 %v1709
        %v1779 = vpop.f32.mrb[0].mxu0
        %v1780 = vadd.f32 0.0, %v1779
        %v1781 = vpop.f32.mrb[0].mxu0
        %1782 = vdwg.mxu0
        %1783 = vrot.lane.b32.xlu0 %v1033, 112
        %v1784 = vpop.permute.xlu0 %1783
        %1785 = vrot.lane.b32.xlu0 %v1033, 80
        %v1786 = vpop.permute.xlu0 %1785
        %v1787 = vsel %vm1041, %v1784, 0
        %v1789 = vsel %vm1041, %v1786, 0
        %1791 = vmatprep.subr.mxu0 0.0
        %1792 = vmatpush1.xpose.msra.mxu0 %v1789
        %1793 = vmatprep.subr.mxu0 0.0
        %1794 = vmatpush1.xpose.msra.mxu0 0.0
        %1795 = vmatprep.subr.mxu0 0.0
        %1796 = vmatpush1.xpose.msra.mxu0 0.0
        %1797 = vmatprep.subr.mxu0 0.0
        %1798 = vmatpush1.xpose.msra.mxu0 0.0
        %1799 = vmatprep.subr.mxu0 0.0
        %1800 = vmatpush1.xpose.msra.mxu0 0.0
        %1801 = vmatprep.subr.mxu0 0.0
        %1802 = vmatpush1.xpose.msra.mxu0 0.0
        %1803 = vmatprep.subr.mxu0 0.0
        %1804 = vmatpush1.xpose.msra.mxu0 0.0
        %1805 = vmatprep.subr.mxu0 0.0
        %1806 = vmatpush1.xpose.msra.mxu0 0.0
        %1807 = vmatprep.subr.mxu0 0.0
        %1808 = vmatpush1.xpose.msra.mxu0 0.0
        %1809 = vmatprep.subr.mxu0 0.0
        %1810 = vmatpush1.xpose.msra.mxu0 0.0
        %1811 = vmatprep.subr.mxu0 0.0
        %1812 = vmatpush1.xpose.msra.mxu0 0.0
        %1813 = vmatprep.subr.mxu0 0.0
        %1814 = vmatpush1.xpose.msra.mxu0 0.0
        %1815 = vmatprep.subr.mxu0 0.0
        %1816 = vmatpush1.xpose.msra.mxu0 0.0
        %1817 = vmatprep.subr.mxu0 0.0
        %1818 = vmatpush1.xpose.msra.mxu0 0.0
        %1819 = vmatprep.subr.mxu0 0.0
        %1820 = vmatpush1.xpose.msra.mxu0 0.0
        %1821 = vmatprep.subr.mxu0 0.0
        %1822 = vmatpush1.xpose.msra.mxu0 0.0
        %1823 = vmatprep.subr.mxu0 0.0
        %1824 = vmatpush1.xpose.msra.mxu0 0.0
        %1825 = vmatprep.subr.mxu0 0.0
        %1826 = vmatpush1.xpose.msra.mxu0 0.0
        %1827 = vmatprep.subr.mxu0 0.0
        %1828 = vmatpush1.xpose.msra.mxu0 0.0
        %1829 = vmatprep.subr.mxu0 0.0
        %1830 = vmatpush1.xpose.msra.mxu0 0.0
        %1831 = vmatprep.subr.mxu0 0.0
        %1832 = vmatpush1.xpose.msra.mxu0 0.0
        %1833 = vmatprep.subr.mxu0 0.0
        %1834 = vmatpush1.xpose.msra.mxu0 0.0
        %1835 = vmatprep.subr.mxu0 0.0
        %1836 = vmatpush1.xpose.msra.mxu0 0.0
        %1837 = vmatprep.subr.mxu0 0.0
        %1838 = vmatpush1.xpose.msra.mxu0 0.0
        %1839 = vmatprep.subr.mxu0 0.0
        %1840 = vmatpush1.xpose.msra.mxu0 0.0
        %1841 = vmatprep.subr.mxu0 0.0
        %1842 = vmatpush1.xpose.msra.mxu0 0.0
        %1843 = vmatprep.subr.mxu0 0.0
        %1844 = vmatpush1.xpose.msra.mxu0 0.0
        %1845 = vmatprep.subr.mxu0 0.0
        %1846 = vmatpush1.xpose.msra.mxu0 0.0
        %1847 = vmatprep.subr.mxu0 0.0
        %1848 = vmatpush1.xpose.msra.mxu0 0.0
        %1849 = vmatprep.subr.mxu0 0.0
        %1850 = vmatpush1.xpose.msra.mxu0 0.0
        %1851 = vmatprep.subr.mxu0 0.0
        %1852 = vmatpush1.xpose.msra.mxu0 0.0
        %1853 = vmatprep.subr.mxu0 0.0
        %1854 = vmatpush1.xpose.msra.mxu0 0.0
        %1855 = vmatprep.mubr.f32.mxu0 0.0
        %1856 = vmatmul.mubr.f32.gmra.mrb[0].mxu0 %v1787
        %v1857 = vpop.f32.mrb[0].mxu0
        %v1858 = vadd.f32 0.0, %v1857
        %v1859 = vpop.f32.mrb[0].mxu0
        %1860 = vdwg.mxu0
        %v1861 = vmul.f32 %v1780, 0.35355338
        %v1862 = vmul.f32 %v1858, 0.35355338
        %v1863 = vadd.f32 %v1861, %v1036
        %v1864 = vadd.f32 %v1862, %v1037
        %v1865 = vsel %vm1041, %v1863, -inf
        %1866 = vmax.xlane.f32.xlu0 %v1865
        %v1867 = vpop.xlane.xlu0 %1866
        %v1868 = vsel %vm1041, %v1864, -inf
        %1869 = vmax.xlane.f32.xlu0 %v1868
        %v1870 = vpop.xlane.xlu0 %1869
        %v1871 = vsub.f32 %v1863, %v1867
        %v1872 = vsub.f32 %v1864, %v1870
        %v1873 = vmul.f32 %v1871, 1.442695
        %v1874 = vpow.pop %v1873
        %v1875 = vmul.f32 %v1872, 1.442695
        %v1876 = vpow.pop %v1875
        %v1877 = vsel %vm1041, %v1874, 0.0
        %1878 = vadd.xlane.f32.xlu0 %v1877
        %v1879 = vpop.xlane.xlu0 %1878
        %v1880 = vsel %vm1041, %v1876, 0.0
        %1881 = vadd.xlane.f32.xlu0 %v1880
        %v1882 = vpop.xlane.xlu0 %1881
        %v1883 = vrcp.pop %v1879
        %v1884 = vrcp.pop %v1882
        %v1885 = vmul.f32 %v1874, %v1883
        %v1886 = vmul.f32 %v1876, %v1884
        %1887 = vrot.lane.b32.xlu0 %v1028, 48
        %v1888 = vpop.permute.xlu0 %1887
        %v1891 = vsel %vm1041, %v1885, 0
        %1893 = vmatprep.subr.mxu0 0.0
        %1894 = vmatpush1.msra.mxu0 %v1888
        %1895 = vmatprep.subr.mxu0 0.0
        %1896 = vmatpush1.msra.mxu0 0.0
        %1897 = vmatprep.subr.mxu0 0.0
        %1898 = vmatpush1.msra.mxu0 0.0
        %1899 = vmatprep.subr.mxu0 0.0
        %1900 = vmatpush1.msra.mxu0 0.0
        %1901 = vmatprep.subr.mxu0 0.0
        %1902 = vmatpush1.msra.mxu0 0.0
        %1903 = vmatprep.subr.mxu0 0.0
        %1904 = vmatpush1.msra.mxu0 0.0
        %1905 = vmatprep.subr.mxu0 0.0
        %1906 = vmatpush1.msra.mxu0 0.0
        %1907 = vmatprep.subr.mxu0 0.0
        %1908 = vmatpush1.msra.mxu0 0.0
        %1909 = vmatprep.subr.mxu0 0.0
        %1910 = vmatpush1.msra.mxu0 0.0
        %1911 = vmatprep.subr.mxu0 0.0
        %1912 = vmatpush1.msra.mxu0 0.0
        %1913 = vmatprep.subr.mxu0 0.0
        %1914 = vmatpush1.msra.mxu0 0.0
        %1915 = vmatprep.subr.mxu0 0.0
        %1916 = vmatpush1.msra.mxu0 0.0
        %1917 = vmatprep.subr.mxu0 0.0
        %1918 = vmatpush1.msra.mxu0 0.0
        %1919 = vmatprep.subr.mxu0 0.0
        %1920 = vmatpush1.msra.mxu0 0.0
        %1921 = vmatprep.subr.mxu0 0.0
        %1922 = vmatpush1.msra.mxu0 0.0
        %1923 = vmatprep.subr.mxu0 0.0
        %1924 = vmatpush1.msra.mxu0 0.0
        %1925 = vmatprep.subr.mxu0 0.0
        %1926 = vmatpush1.msra.mxu0 0.0
        %1927 = vmatprep.subr.mxu0 0.0
        %1928 = vmatpush1.msra.mxu0 0.0
        %1929 = vmatprep.subr.mxu0 0.0
        %1930 = vmatpush1.msra.mxu0 0.0
        %1931 = vmatprep.subr.mxu0 0.0
        %1932 = vmatpush1.msra.mxu0 0.0
        %1933 = vmatprep.subr.mxu0 0.0
        %1934 = vmatpush1.msra.mxu0 0.0
        %1935 = vmatprep.subr.mxu0 0.0
        %1936 = vmatpush1.msra.mxu0 0.0
        %1937 = vmatprep.subr.mxu0 0.0
        %1938 = vmatpush1.msra.mxu0 0.0
        %1939 = vmatprep.subr.mxu0 0.0
        %1940 = vmatpush1.msra.mxu0 0.0
        %1941 = vmatprep.subr.mxu0 0.0
        %1942 = vmatpush1.msra.mxu0 0.0
        %1943 = vmatprep.subr.mxu0 0.0
        %1944 = vmatpush1.msra.mxu0 0.0
        %1945 = vmatprep.subr.mxu0 0.0
        %1946 = vmatpush1.msra.mxu0 0.0
        %1947 = vmatprep.subr.mxu0 0.0
        %1948 = vmatpush1.msra.mxu0 0.0
        %1949 = vmatprep.subr.mxu0 0.0
        %1950 = vmatpush1.msra.mxu0 0.0
        %1951 = vmatprep.subr.mxu0 0.0
        %1952 = vmatpush1.msra.mxu0 0.0
        %1953 = vmatprep.subr.mxu0 0.0
        %1954 = vmatpush1.msra.mxu0 0.0
        %1955 = vmatprep.subr.mxu0 0.0
        %1956 = vmatpush1.msra.mxu0 0.0
        %1957 = vmatprep.mubr.f32.mxu0 0.0
        %1958 = vmatmul.mubr.f32.gmra.mrb[0].mxu0 %v1891
        %v1959 = vpop.f32.mrb[0].mxu0
        %v1960 = vadd.f32 0.0, %v1959
        %v1961 = vpop.f32.mrb[0].mxu0
        %1962 = vdwg.mxu0
        %1963 = vrot.lane.b32.xlu0 %v1033, 48
        %v1964 = vpop.permute.xlu0 %1963
        %v1967 = vsel %vm1041, %v1886, 0
        %1969 = vmatprep.subr.mxu0 0.0
        %1970 = vmatpush1.msra.mxu0 %v1964
        %1971 = vmatprep.subr.mxu0 0.0
        %1972 = vmatpush1.msra.mxu0 0.0
        %1973 = vmatprep.subr.mxu0 0.0
        %1974 = vmatpush1.msra.mxu0 0.0
        %1975 = vmatprep.subr.mxu0 0.0
        %1976 = vmatpush1.msra.mxu0 0.0
        %1977 = vmatprep.subr.mxu0 0.0
        %1978 = vmatpush1.msra.mxu0 0.0
        %1979 = vmatprep.subr.mxu0 0.0
        %1980 = vmatpush1.msra.mxu0 0.0
        %1981 = vmatprep.subr.mxu0 0.0
        %1982 = vmatpush1.msra.mxu0 0.0
        %1983 = vmatprep.subr.mxu0 0.0
        %1984 = vmatpush1.msra.mxu0 0.0
        %1985 = vmatprep.subr.mxu0 0.0
        %1986 = vmatpush1.msra.mxu0 0.0
        %1987 = vmatprep.subr.mxu0 0.0
        %1988 = vmatpush1.msra.mxu0 0.0
        %1989 = vmatprep.subr.mxu0 0.0
        %1990 = vmatpush1.msra.mxu0 0.0
        %1991 = vmatprep.subr.mxu0 0.0
        %1992 = vmatpush1.msra.mxu0 0.0
        %1993 = vmatprep.subr.mxu0 0.0
        %1994 = vmatpush1.msra.mxu0 0.0
        %1995 = vmatprep.subr.mxu0 0.0
        %1996 = vmatpush1.msra.mxu0 0.0
        %1997 = vmatprep.subr.mxu0 0.0
        %1998 = vmatpush1.msra.mxu0 0.0
        %1999 = vmatprep.subr.mxu0 0.0
        %2000 = vmatpush1.msra.mxu0 0.0
        %2001 = vmatprep.subr.mxu0 0.0
        %2002 = vmatpush1.msra.mxu0 0.0
        %2003 = vmatprep.subr.mxu0 0.0
        %2004 = vmatpush1.msra.mxu0 0.0
        %2005 = vmatprep.subr.mxu0 0.0
        %2006 = vmatpush1.msra.mxu0 0.0
        %2007 = vmatprep.subr.mxu0 0.0
        %2008 = vmatpush1.msra.mxu0 0.0
        %2009 = vmatprep.subr.mxu0 0.0
        %2010 = vmatpush1.msra.mxu0 0.0
        %2011 = vmatprep.subr.mxu0 0.0
        %2012 = vmatpush1.msra.mxu0 0.0
        %2013 = vmatprep.subr.mxu0 0.0
        %2014 = vmatpush1.msra.mxu0 0.0
        %2015 = vmatprep.subr.mxu0 0.0
        %2016 = vmatpush1.msra.mxu0 0.0
        %2017 = vmatprep.subr.mxu0 0.0
        %2018 = vmatpush1.msra.mxu0 0.0
        %2019 = vmatprep.subr.mxu0 0.0
        %2020 = vmatpush1.msra.mxu0 0.0
        %2021 = vmatprep.subr.mxu0 0.0
        %2022 = vmatpush1.msra.mxu0 0.0
        %2023 = vmatprep.subr.mxu0 0.0
        %2024 = vmatpush1.msra.mxu0 0.0
        %2025 = vmatprep.subr.mxu0 0.0
        %2026 = vmatpush1.msra.mxu0 0.0
        %2027 = vmatprep.subr.mxu0 0.0
        %2028 = vmatpush1.msra.mxu0 0.0
        %2029 = vmatprep.subr.mxu0 0.0
        %2030 = vmatpush1.msra.mxu0 0.0
        %2031 = vmatprep.subr.mxu0 0.0
        %2032 = vmatpush1.msra.mxu0 0.0
        %2033 = vmatprep.mubr.f32.mxu0 0.0
        %2034 = vmatmul.mubr.f32.gmra.mrb[0].mxu0 %v1967
        %v2035 = vpop.f32.mrb[0].mxu0
        %v2036 = vadd.f32 0.0, %v2035
        %v2037 = vpop.f32.mrb[0].mxu0
        %2038 = vdwg.mxu0
        %2039 = vrot.lane.b32.xlu0 %v1028, 104
        %v2040 = vpop.permute.xlu0 %2039
        %2041 = vrot.lane.b32.xlu0 %v1028, 72
        %v2042 = vpop.permute.xlu0 %2041
        %v2043 = vsel %vm1041, %v2040, 0
        %v2045 = vsel %vm1041, %v2042, 0
        %2047 = vmatprep.subr.mxu0 0.0
        %2048 = vmatpush1.xpose.msra.mxu0 %v2045
        %2049 = vmatprep.subr.mxu0 0.0
        %2050 = vmatpush1.xpose.msra.mxu0 0.0
        %2051 = vmatprep.subr.mxu0 0.0
        %2052 = vmatpush1.xpose.msra.mxu0 0.0
        %2053 = vmatprep.subr.mxu0 0.0
        %2054 = vmatpush1.xpose.msra.mxu0 0.0
        %2055 = vmatprep.subr.mxu0 0.0
        %2056 = vmatpush1.xpose.msra.mxu0 0.0
        %2057 = vmatprep.subr.mxu0 0.0
        %2058 = vmatpush1.xpose.msra.mxu0 0.0
        %2059 = vmatprep.subr.mxu0 0.0
        %2060 = vmatpush1.xpose.msra.mxu0 0.0
        %2061 = vmatprep.subr.mxu0 0.0
        %2062 = vmatpush1.xpose.msra.mxu0 0.0
        %2063 = vmatprep.subr.mxu0 0.0
        %2064 = vmatpush1.xpose.msra.mxu0 0.0
        %2065 = vmatprep.subr.mxu0 0.0
        %2066 = vmatpush1.xpose.msra.mxu0 0.0
        %2067 = vmatprep.subr.mxu0 0.0
        %2068 = vmatpush1.xpose.msra.mxu0 0.0
        %2069 = vmatprep.subr.mxu0 0.0
        %2070 = vmatpush1.xpose.msra.mxu0 0.0
        %2071 = vmatprep.subr.mxu0 0.0
        %2072 = vmatpush1.xpose.msra.mxu0 0.0
        %2073 = vmatprep.subr.mxu0 0.0
        %2074 = vmatpush1.xpose.msra.mxu0 0.0
        %2075 = vmatprep.subr.mxu0 0.0
        %2076 = vmatpush1.xpose.msra.mxu0 0.0
        %2077 = vmatprep.subr.mxu0 0.0
        %2078 = vmatpush1.xpose.msra.mxu0 0.0
        %2079 = vmatprep.subr.mxu0 0.0
        %2080 = vmatpush1.xpose.msra.mxu0 0.0
        %2081 = vmatprep.subr.mxu0 0.0
        %2082 = vmatpush1.xpose.msra.mxu0 0.0
        %2083 = vmatprep.subr.mxu0 0.0
        %2084 = vmatpush1.xpose.msra.mxu0 0.0
        %2085 = vmatprep.subr.mxu0 0.0
        %2086 = vmatpush1.xpose.msra.mxu0 0.0
        %2087 = vmatprep.subr.mxu0 0.0
        %2088 = vmatpush1.xpose.msra.mxu0 0.0
        %2089 = vmatprep.subr.mxu0 0.0
        %2090 = vmatpush1.xpose.msra.mxu0 0.0
        %2091 = vmatprep.subr.mxu0 0.0
        %2092 = vmatpush1.xpose.msra.mxu0 0.0
        %2093 = vmatprep.subr.mxu0 0.0
        %2094 = vmatpush1.xpose.msra.mxu0 0.0
        %2095 = vmatprep.subr.mxu0 0.0
        %2096 = vmatpush1.xpose.msra.mxu0 0.0
        %2097 = vmatprep.subr.mxu0 0.0
        %2098 = vmatpush1.xpose.msra.mxu0 0.0
        %2099 = vmatprep.subr.mxu0 0.0
        %2100 = vmatpush1.xpose.msra.mxu0 0.0
        %2101 = vmatprep.subr.mxu0 0.0
        %2102 = vmatpush1.xpose.msra.mxu0 0.0
        %2103 = vmatprep.subr.mxu0 0.0
        %2104 = vmatpush1.xpose.msra.mxu0 0.0
        %2105 = vmatprep.subr.mxu0 0.0
        %2106 = vmatpush1.xpose.msra.mxu0 0.0
        %2107 = vmatprep.subr.mxu0 0.0
        %2108 = vmatpush1.xpose.msra.mxu0 0.0
        %2109 = vmatprep.subr.mxu0 0.0
        %2110 = vmatpush1.xpose.msra.mxu0 0.0
        %2111 = vmatprep.mubr.f32.mxu0 0.0
        %2112 = vmatmul.mubr.f32.gmra.mrb[0].mxu0 %v2043
        %v2113 = vpop.f32.mrb[0].mxu0
        %v2114 = vadd.f32 0.0, %v2113
        %v2115 = vpop.f32.mrb[0].mxu0
        %2116 = vdwg.mxu0
        %2117 = vrot.lane.b32.xlu0 %v1033, 104
        %v2118 = vpop.permute.xlu0 %2117
        %2119 = vrot.lane.b32.xlu0 %v1033, 72
        %v2120 = vpop.permute.xlu0 %2119
        %v2121 = vsel %vm1041, %v2118, 0
        %v2123 = vsel %vm1041, %v2120, 0
        %2125 = vmatprep.subr.mxu0 0.0
        %2126 = vmatpush1.xpose.msra.mxu0 %v2123
        %2127 = vmatprep.subr.mxu0 0.0
        %2128 = vmatpush1.xpose.msra.mxu0 0.0
        %2129 = vmatprep.subr.mxu0 0.0
        %2130 = vmatpush1.xpose.msra.mxu0 0.0
        %2131 = vmatprep.subr.mxu0 0.0
        %2132 = vmatpush1.xpose.msra.mxu0 0.0
        %2133 = vmatprep.subr.mxu0 0.0
        %2134 = vmatpush1.xpose.msra.mxu0 0.0
        %2135 = vmatprep.subr.mxu0 0.0
        %2136 = vmatpush1.xpose.msra.mxu0 0.0
        %2137 = vmatprep.subr.mxu0 0.0
        %2138 = vmatpush1.xpose.msra.mxu0 0.0
        %2139 = vmatprep.subr.mxu0 0.0
        %2140 = vmatpush1.xpose.msra.mxu0 0.0
        %2141 = vmatprep.subr.mxu0 0.0
        %2142 = vmatpush1.xpose.msra.mxu0 0.0
        %2143 = vmatprep.subr.mxu0 0.0
        %2144 = vmatpush1.xpose.msra.mxu0 0.0
        %2145 = vmatprep.subr.mxu0 0.0
        %2146 = vmatpush1.xpose.msra.mxu0 0.0
        %2147 = vmatprep.subr.mxu0 0.0
        %2148 = vmatpush1.xpose.msra.mxu0 0.0
        %2149 = vmatprep.subr.mxu0 0.0
        %2150 = vmatpush1.xpose.msra.mxu0 0.0
        %2151 = vmatprep.subr.mxu0 0.0
        %2152 = vmatpush1.xpose.msra.mxu0 0.0
        %2153 = vmatprep.subr.mxu0 0.0
        %2154 = vmatpush1.xpose.msra.mxu0 0.0
        %2155 = vmatprep.subr.mxu0 0.0
        %2156 = vmatpush1.xpose.msra.mxu0 0.0
        %2157 = vmatprep.subr.mxu0 0.0
        %2158 = vmatpush1.xpose.msra.mxu0 0.0
        %2159 = vmatprep.subr.mxu0 0.0
        %2160 = vmatpush1.xpose.msra.mxu0 0.0
        %2161 = vmatprep.subr.mxu0 0.0
        %2162 = vmatpush1.xpose.msra.mxu0 0.0
        %2163 = vmatprep.subr.mxu0 0.0
        %2164 = vmatpush1.xpose.msra.mxu0 0.0
        %2165 = vmatprep.subr.mxu0 0.0
        %2166 = vmatpush1.xpose.msra.mxu0 0.0
        %2167 = vmatprep.subr.mxu0 0.0
        %2168 = vmatpush1.xpose.msra.mxu0 0.0
        %2169 = vmatprep.subr.mxu0 0.0
        %2170 = vmatpush1.xpose.msra.mxu0 0.0
        %2171 = vmatprep.subr.mxu0 0.0
        %2172 = vmatpush1.xpose.msra.mxu0 0.0
        %2173 = vmatprep.subr.mxu0 0.0
        %2174 = vmatpush1.xpose.msra.mxu0 0.0
        %2175 = vmatprep.subr.mxu0 0.0
        %2176 = vmatpush1.xpose.msra.mxu0 0.0
        %2177 = vmatprep.subr.mxu0 0.0
        %2178 = vmatpush1.xpose.msra.mxu0 0.0
        %2179 = vmatprep.subr.mxu0 0.0
        %2180 = vmatpush1.xpose.msra.mxu0 0.0
        %2181 = vmatprep.subr.mxu0 0.0
        %2182 = vmatpush1.xpose.msra.mxu0 0.0
        %2183 = vmatprep.subr.mxu0 0.0
        %2184 = vmatpush1.xpose.msra.mxu0 0.0
        %2185 = vmatprep.subr.mxu0 0.0
        %2186 = vmatpush1.xpose.msra.mxu0 0.0
        %2187 = vmatprep.subr.mxu0 0.0
        %2188 = vmatpush1.xpose.msra.mxu0 0.0
        %2189 = vmatprep.mubr.f32.mxu0 0.0
        %2190 = vmatmul.mubr.f32.gmra.mrb[0].mxu0 %v2121
        %v2191 = vpop.f32.mrb[0].mxu0
        %v2192 = vadd.f32 0.0, %v2191
        %v2193 = vpop.f32.mrb[0].mxu0
        %2194 = vdwg.mxu0
        %v2195 = vmul.f32 %v2114, 0.35355338
        %v2196 = vmul.f32 %v2192, 0.35355338
        %v2197 = vadd.f32 %v2195, %v1036
        %v2198 = vadd.f32 %v2196, %v1037
        %v2199 = vsel %vm1041, %v2197, -inf
        %2200 = vmax.xlane.f32.xlu0 %v2199
        %v2201 = vpop.xlane.xlu0 %2200
        %v2202 = vsel %vm1041, %v2198, -inf
        %2203 = vmax.xlane.f32.xlu0 %v2202
        %v2204 = vpop.xlane.xlu0 %2203
        %v2205 = vsub.f32 %v2197, %v2201
        %v2206 = vsub.f32 %v2198, %v2204
        %v2207 = vmul.f32 %v2205, 1.442695
        %v2208 = vpow.pop %v2207
        %v2209 = vmul.f32 %v2206, 1.442695
        %v2210 = vpow.pop %v2209
        %v2211 = vsel %vm1041, %v2208, 0.0
        %2212 = vadd.xlane.f32.xlu0 %v2211
        %v2213 = vpop.xlane.xlu0 %2212
        %v2214 = vsel %vm1041, %v2210, 0.0
        %2215 = vadd.xlane.f32.xlu0 %v2214
        %v2216 = vpop.xlane.xlu0 %2215
        %v2217 = vrcp.pop %v2213
        %v2218 = vrcp.pop %v2216
        %v2219 = vmul.f32 %v2208, %v2217
        %v2220 = vmul.f32 %v2210, %v2218
        %2221 = vrot.lane.b32.xlu0 %v1028, 40
        %v2222 = vpop.permute.xlu0 %2221
        %v2225 = vsel %vm1041, %v2219, 0
        %2227 = vmatprep.subr.mxu0 0.0
        %2228 = vmatpush1.msra.mxu0 %v2222
        %2229 = vmatprep.subr.mxu0 0.0
        %2230 = vmatpush1.msra.mxu0 0.0
        %2231 = vmatprep.subr.mxu0 0.0
        %2232 = vmatpush1.msra.mxu0 0.0
        %2233 = vmatprep.subr.mxu0 0.0
        %2234 = vmatpush1.msra.mxu0 0.0
        %2235 = vmatprep.subr.mxu0 0.0
        %2236 = vmatpush1.msra.mxu0 0.0
        %2237 = vmatprep.subr.mxu0 0.0
        %2238 = vmatpush1.msra.mxu0 0.0
        %2239 = vmatprep.subr.mxu0 0.0
        %2240 = vmatpush1.msra.mxu0 0.0
        %2241 = vmatprep.subr.mxu0 0.0
        %2242 = vmatpush1.msra.mxu0 0.0
        %2243 = vmatprep.subr.mxu0 0.0
        %2244 = vmatpush1.msra.mxu0 0.0
        %2245 = vmatprep.subr.mxu0 0.0
        %2246 = vmatpush1.msra.mxu0 0.0
        %2247 = vmatprep.subr.mxu0 0.0
        %2248 = vmatpush1.msra.mxu0 0.0
        %2249 = vmatprep.subr.mxu0 0.0
        %2250 = vmatpush1.msra.mxu0 0.0
        %2251 = vmatprep.subr.mxu0 0.0
        %2252 = vmatpush1.msra.mxu0 0.0
        %2253 = vmatprep.subr.mxu0 0.0
        %2254 = vmatpush1.msra.mxu0 0.0
        %2255 = vmatprep.subr.mxu0 0.0
        %2256 = vmatpush1.msra.mxu0 0.0
        %2257 = vmatprep.subr.mxu0 0.0
        %2258 = vmatpush1.msra.mxu0 0.0
        %2259 = vmatprep.subr.mxu0 0.0
        %2260 = vmatpush1.msra.mxu0 0.0
        %2261 = vmatprep.subr.mxu0 0.0
        %2262 = vmatpush1.msra.mxu0 0.0
        %2263 = vmatprep.subr.mxu0 0.0
        %2264 = vmatpush1.msra.mxu0 0.0
        %2265 = vmatprep.subr.mxu0 0.0
        %2266 = vmatpush1.msra.mxu0 0.0
        %2267 = vmatprep.subr.mxu0 0.0
        %2268 = vmatpush1.msra.mxu0 0.0
        %2269 = vmatprep.subr.mxu0 0.0
        %2270 = vmatpush1.msra.mxu0 0.0
        %2271 = vmatprep.subr.mxu0 0.0
        %2272 = vmatpush1.msra.mxu0 0.0
        %2273 = vmatprep.subr.mxu0 0.0
        %2274 = vmatpush1.msra.mxu0 0.0
        %2275 = vmatprep.subr.mxu0 0.0
        %2276 = vmatpush1.msra.mxu0 0.0
        %2277 = vmatprep.subr.mxu0 0.0
        %2278 = vmatpush1.msra.mxu0 0.0
        %2279 = vmatprep.subr.mxu0 0.0
        %2280 = vmatpush1.msra.mxu0 0.0
        %2281 = vmatprep.subr.mxu0 0.0
        %2282 = vmatpush1.msra.mxu0 0.0
        %2283 = vmatprep.subr.mxu0 0.0
        %2284 = vmatpush1.msra.mxu0 0.0
        %2285 = vmatprep.subr.mxu0 0.0
        %2286 = vmatpush1.msra.mxu0 0.0
        %2287 = vmatprep.subr.mxu0 0.0
        %2288 = vmatpush1.msra.mxu0 0.0
        %2289 = vmatprep.subr.mxu0 0.0
        %2290 = vmatpush1.msra.mxu0 0.0
        %2291 = vmatprep.mubr.f32.mxu0 0.0
        %2292 = vmatmul.mubr.f32.gmra.mrb[0].mxu0 %v2225
        %v2293 = vpop.f32.mrb[0].mxu0
        %v2294 = vadd.f32 0.0, %v2293
        %v2295 = vpop.f32.mrb[0].mxu0
        %2296 = vdwg.mxu0
        %2297 = vrot.lane.b32.xlu0 %v1033, 40
        %v2298 = vpop.permute.xlu0 %2297
        %v2301 = vsel %vm1041, %v2220, 0
        %2303 = vmatprep.subr.mxu0 0.0
        %2304 = vmatpush1.msra.mxu0 %v2298
        %2305 = vmatprep.subr.mxu0 0.0
        %2306 = vmatpush1.msra.mxu0 0.0
        %2307 = vmatprep.subr.mxu0 0.0
        %2308 = vmatpush1.msra.mxu0 0.0
        %2309 = vmatprep.subr.mxu0 0.0
        %2310 = vmatpush1.msra.mxu0 0.0
        %2311 = vmatprep.subr.mxu0 0.0
        %2312 = vmatpush1.msra.mxu0 0.0
        %2313 = vmatprep.subr.mxu0 0.0
        %2314 = vmatpush1.msra.mxu0 0.0
        %2315 = vmatprep.subr.mxu0 0.0
        %2316 = vmatpush1.msra.mxu0 0.0
        %2317 = vmatprep.subr.mxu0 0.0
        %2318 = vmatpush1.msra.mxu0 0.0
        %2319 = vmatprep.subr.mxu0 0.0
        %2320 = vmatpush1.msra.mxu0 0.0
        %2321 = vmatprep.subr.mxu0 0.0
        %2322 = vmatpush1.msra.mxu0 0.0
        %2323 = vmatprep.subr.mxu0 0.0
        %2324 = vmatpush1.msra.mxu0 0.0
        %2325 = vmatprep.subr.mxu0 0.0
        %2326 = vmatpush1.msra.mxu0 0.0
        %2327 = vmatprep.subr.mxu0 0.0
        %2328 = vmatpush1.msra.mxu0 0.0
        %2329 = vmatprep.subr.mxu0 0.0
        %2330 = vmatpush1.msra.mxu0 0.0
        %2331 = vmatprep.subr.mxu0 0.0
        %2332 = vmatpush1.msra.mxu0 0.0
        %2333 = vmatprep.subr.mxu0 0.0
        %2334 = vmatpush1.msra.mxu0 0.0
        %2335 = vmatprep.subr.mxu0 0.0
        %2336 = vmatpush1.msra.mxu0 0.0
        %2337 = vmatprep.subr.mxu0 0.0
        %2338 = vmatpush1.msra.mxu0 0.0
        %2339 = vmatprep.subr.mxu0 0.0
        %2340 = vmatpush1.msra.mxu0 0.0
        %2341 = vmatprep.subr.mxu0 0.0
        %2342 = vmatpush1.msra.mxu0 0.0
        %2343 = vmatprep.subr.mxu0 0.0
        %2344 = vmatpush1.msra.mxu0 0.0
        %2345 = vmatprep.subr.mxu0 0.0
        %2346 = vmatpush1.msra.mxu0 0.0
        %2347 = vmatprep.subr.mxu0 0.0
        %2348 = vmatpush1.msra.mxu0 0.0
        %2349 = vmatprep.subr.mxu0 0.0
        %2350 = vmatpush1.msra.mxu0 0.0
        %2351 = vmatprep.subr.mxu0 0.0
        %2352 = vmatpush1.msra.mxu0 0.0
        %2353 = vmatprep.subr.mxu0 0.0
        %2354 = vmatpush1.msra.mxu0 0.0
        %2355 = vmatprep.subr.mxu0 0.0
        %2356 = vmatpush1.msra.mxu0 0.0
        %2357 = vmatprep.subr.mxu0 0.0
        %2358 = vmatpush1.msra.mxu0 0.0
        %2359 = vmatprep.subr.mxu0 0.0
        %2360 = vmatpush1.msra.mxu0 0.0
        %2361 = vmatprep.subr.mxu0 0.0
        %2362 = vmatpush1.msra.mxu0 0.0
        %2363 = vmatprep.subr.mxu0 0.0
        %2364 = vmatpush1.msra.mxu0 0.0
        %2365 = vmatprep.subr.mxu0 0.0
        %2366 = vmatpush1.msra.mxu0 0.0
        %2367 = vmatprep.mubr.f32.mxu0 0.0
        %2368 = vmatmul.mubr.f32.gmra.mrb[0].mxu0 %v2301
        %v2369 = vpop.f32.mrb[0].mxu0
        %v2370 = vadd.f32 0.0, %v2369
        %v2371 = vpop.f32.mrb[0].mxu0
        %2372 = vdwg.mxu0
        %2375 = vrot.lane.b32.xlu0 %v1626, 8
        %v2376 = vpop.permute.xlu0 %2375
        %2377 = vrot.lane.b32.xlu0 %v1702, 8
        %v2378 = vpop.permute.xlu0 %2377
        %2383 = vrot.lane.b32.xlu0 %v1960, 16
        %v2384 = vpop.permute.xlu0 %2383
        %2385 = vrot.lane.b32.xlu0 %v2036, 16
        %v2386 = vpop.permute.xlu0 %2385
        %2391 = vrot.lane.b32.xlu0 %v2294, 24
        %v2392 = vpop.permute.xlu0 %2391
        %2393 = vrot.lane.b32.xlu0 %v2370, 24
        %v2394 = vpop.permute.xlu0 %2393
        %v2397 = vsel %vm1041, %v1292, %v2376
        %v2398 = vsel %vm1041, %v1368, %v2378
        %vm2399 = vcmask 130048
        %v2400 = vsel %vm2399, %v2397, %v2384
        %v2401 = vsel %vm2399, %v2398, %v2386
        %vm2402 = vcmask 195584
        %v2403 = vsel %vm2402, %v2400, %v2392
        %v2404 = vsel %vm2402, %v2401, %v2394
        %v2405 = vld [vmem:[%s874] sm:$0xff]
        %v2406 = vld [vmem:[%s874 + $0x8] sm:$0xff]
        %v2407 = vld [vmem:[%s874 + $0x10] sm:$0xff]
        %v2408 = vld [vmem:[%s874 + $0x18] sm:$0xff]
        %v2409 = vld [vmem:[%s877] sm:$0x1]
        %v2411 = vlaneseq
        %v2412 = vshrl.u32 %v2411, 7
        %v2413 = vsub.s32 0, %v2412
        %v2414 = vrot.slane %v2409, %v2413
        %v2417 = vsel %vm954, %v2403, 0
        %v2420 = vsel %vm954, %v2404, 0
        %2422 = vmatprep.subr.mxu0 0.0
        %2423 = vmatpush1.msra.mxu0 %v2405
        %2424 = vmatprep.subr.mxu0 0.0
        %2425 = vmatpush1.msra.mxu0 %v2406
        %2426 = vmatprep.subr.mxu0 0.0
        %2427 = vmatpush1.msra.mxu0 %v2407
        %2428 = vmatprep.subr.mxu0 0.0
        %2429 = vmatpush1.msra.mxu0 %v2408
        %2430 = vmatprep.subr.mxu0 0.0
        %2431 = vmatpush1.msra.mxu0 0.0
        %2432 = vmatprep.subr.mxu0 0.0
        %2433 = vmatpush1.msra.mxu0 0.0
        %2434 = vmatprep.subr.mxu0 0.0
        %2435 = vmatpush1.msra.mxu0 0.0
        %2436 = vmatprep.subr.mxu0 0.0
        %2437 = vmatpush1.msra.mxu0 0.0
        %2438 = vmatprep.subr.mxu0 0.0
        %2439 = vmatpush1.msra.mxu0 0.0
        %2440 = vmatprep.subr.mxu0 0.0
        %2441 = vmatpush1.msra.mxu0 0.0
        %2442 = vmatprep.subr.mxu0 0.0
        %2443 = vmatpush1.msra.mxu0 0.0
        %2444 = vmatprep.subr.mxu0 0.0
        %2445 = vmatpush1.msra.mxu0 0.0
        %2446 = vmatprep.subr.mxu0 0.0
        %2447 = vmatpush1.msra.mxu0 0.0
        %2448 = vmatprep.subr.mxu0 0.0
        %2449 = vmatpush1.msra.mxu0 0.0
        %2450 = vmatprep.subr.mxu0 0.0
        %2451 = vmatpush1.msra.mxu0 0.0
        %2452 = vmatprep.subr.mxu0 0.0
        %2453 = vmatpush1.msra.mxu0 0.0
        %2454 = vmatprep.subr.mxu0 0.0
        %2455 = vmatpush1.msra.mxu0 0.0
        %2456 = vmatprep.subr.mxu0 0.0
        %2457 = vmatpush1.msra.mxu0 0.0
        %2458 = vmatprep.subr.mxu0 0.0
        %2459 = vmatpush1.msra.mxu0 0.0
        %2460 = vmatprep.subr.mxu0 0.0
        %2461 = vmatpush1.msra.mxu0 0.0
        %2462 = vmatprep.subr.mxu0 0.0
        %2463 = vmatpush1.msra.mxu0 0.0
        %2464 = vmatprep.subr.mxu0 0.0
        %2465 = vmatpush1.msra.mxu0 0.0
        %2466 = vmatprep.subr.mxu0 0.0
        %2467 = vmatpush1.msra.mxu0 0.0
        %2468 = vmatprep.subr.mxu0 0.0
        %2469 = vmatpush1.msra.mxu0 0.0
        %2470 = vmatprep.subr.mxu0 0.0
        %2471 = vmatpush1.msra.mxu0 0.0
        %2472 = vmatprep.subr.mxu0 0.0
        %2473 = vmatpush1.msra.mxu0 0.0
        %2474 = vmatprep.subr.mxu0 0.0
        %2475 = vmatpush1.msra.mxu0 0.0
        %2476 = vmatprep.subr.mxu0 0.0
        %2477 = vmatpush1.msra.mxu0 0.0
        %2478 = vmatprep.subr.mxu0 0.0
        %2479 = vmatpush1.msra.mxu0 0.0
        %2480 = vmatprep.subr.mxu0 0.0
        %2481 = vmatpush1.msra.mxu0 0.0
        %2482 = vmatprep.subr.mxu0 0.0
        %2483 = vmatpush1.msra.mxu0 0.0
        %2484 = vmatprep.subr.mxu0 0.0
        %2485 = vmatpush1.msra.mxu0 0.0
        %2486 = vmatprep.mubr.f32.mxu0 0.0
        %2487 = vmatmul.mubr.f32.gmra.mrb[0].mxu0 %v2417
        %v2488 = vpop.f32.mrb[0].mxu0
        %v2489 = vadd.f32 %v2414, %v2488
        %v2490 = vpop.f32.mrb[0].mxu0
        %2491 = vmatprep.mubr.f32.mxu0 0.0
        %2492 = vmatmul.mubr.f32.gmra.mrb[0].mxu0 %v2420
        %v2493 = vpop.f32.mrb[0].mxu0
        %v2494 = vadd.f32 %v2414, %v2493
        %v2495 = vpop.f32.mrb[0].mxu0
        %2496 = vdwg.mxu0
        %v2497 = vadd.f32 %v941, %v2489
        %v2498 = vadd.f32 %v942, %v2494
        %v2499 = vld [vmem:[%s741] sm:$0x1]
        %v2500 = vld [vmem:[%s749] sm:$0x1]
        %v2501 = vsel %vm954, %v2497, 0.0
        %2502 = vadd.xlane.f32.xlu0 %v2501
        %v2503 = vpop.xlane.xlu0 %2502
        %v2504 = vsel %vm954, %v2498, 0.0
        %2505 = vadd.xlane.f32.xlu0 %v2504
        %v2506 = vpop.xlane.xlu0 %2505
        %v2507 = vrcp.pop 32.0
        %v2508 = vmul.f32 %v2503, %v2507
        %v2509 = vmul.f32 %v2506, %v2507
        %v2510 = vsub.f32 %v2497, %v2508
        %v2511 = vsub.f32 %v2498, %v2509
        %v2512 = vmul.f32 %v2510, %v2510
        %v2513 = vmul.f32 %v2511, %v2511
        %v2514 = vsel %vm954, %v2512, 0.0
        %2515 = vadd.xlane.f32.xlu0 %v2514
        %v2516 = vpop.xlane.xlu0 %2515
        %v2517 = vsel %vm954, %v2513, 0.0
        %2518 = vadd.xlane.f32.xlu0 %v2517
        %v2519 = vpop.xlane.xlu0 %2518
        %v2520 = vmul.f32 %v2516, %v2507
        %v2521 = vmul.f32 %v2519, %v2507
        %v2522 = vadd.f32 %v2520, 1e-05
        %v2523 = vadd.f32 %v2521, 1e-05
        %v2524 = vrsqrt.pop %v2522
        %v2525 = vrsqrt.pop %v2523
        %v2526 = vmul.f32 %v2510, %v2524
        %v2527 = vmul.f32 %v2511, %v2525
        %v2529 = vlaneseq
        %v2530 = vshrl.u32 %v2529, 7
        %v2531 = vsub.s32 0, %v2530
        %v2532 = vrot.slane %v2499, %v2531
        %v2534 = vmul.f32 %v2526, %v2532
        %v2535 = vmul.f32 %v2527, %v2532
        %v2537 = vlaneseq
        %v2538 = vshrl.u32 %v2537, 7
        %v2539 = vsub.s32 0, %v2538
        %v2540 = vrot.slane %v2500, %v2539
        %v2542 = vadd.f32 %v2534, %v2540
        %v2543 = vadd.f32 %v2535, %v2540
        %v2544 = vld [vmem:[%s882] sm:$0xff]
        %v2545 = vld [vmem:[%s882 + $0x8] sm:$0xff]
        %v2546 = vld [vmem:[%s882 + $0x10] sm:$0xff]
        %v2547 = vld [vmem:[%s882 + $0x18] sm:$0xff]
        %v2548 = vld [vmem:[%s885] sm:$0x1]
        %v2550 = vlaneseq
        %v2551 = vshrl.u32 %v2550, 7
        %v2552 = vsub.s32 0, %v2551
        %v2553 = vrot.slane %v2548, %v2552
        %v2556 = vsel %vm954, %v2542, 0
        %v2559 = vsel %vm954, %v2543, 0
        %2561 = vmatprep.subr.mxu0 0.0
        %2562 = vmatpush1.msra.mxu0 %v2544
        %2563 = vmatprep.subr.mxu0 0.0
        %2564 = vmatpush1.msra.mxu0 %v2545
        %2565 = vmatprep.subr.mxu0 0.0
        %2566 = vmatpush1.msra.mxu0 %v2546
        %2567 = vmatprep.subr.mxu0 0.0
        %2568 = vmatpush1.msra.mxu0 %v2547
        %2569 = vmatprep.subr.mxu0 0.0
        %2570 = vmatpush1.msra.mxu0 0.0
        %2571 = vmatprep.subr.mxu0 0.0
        %2572 = vmatpush1.msra.mxu0 0.0
        %2573 = vmatprep.subr.mxu0 0.0
        %2574 = vmatpush1.msra.mxu0 0.0
        %2575 = vmatprep.subr.mxu0 0.0
        %2576 = vmatpush1.msra.mxu0 0.0
        %2577 = vmatprep.subr.mxu0 0.0
        %2578 = vmatpush1.msra.mxu0 0.0
        %2579 = vmatprep.subr.mxu0 0.0
        %2580 = vmatpush1.msra.mxu0 0.0
        %2581 = vmatprep.subr.mxu0 0.0
        %2582 = vmatpush1.msra.mxu0 0.0
        %2583 = vmatprep.subr.mxu0 0.0
        %2584 = vmatpush1.msra.mxu0 0.0
        %2585 = vmatprep.subr.mxu0 0.0
        %2586 = vmatpush1.msra.mxu0 0.0
        %2587 = vmatprep.subr.mxu0 0.0
        %2588 = vmatpush1.msra.mxu0 0.0
        %2589 = vmatprep.subr.mxu0 0.0
        %2590 = vmatpush1.msra.mxu0 0.0
        %2591 = vmatprep.subr.mxu0 0.0
        %2592 = vmatpush1.msra.mxu0 0.0
        %2593 = vmatprep.subr.mxu0 0.0
        %2594 = vmatpush1.msra.mxu0 0.0
        %2595 = vmatprep.subr.mxu0 0.0
        %2596 = vmatpush1.msra.mxu0 0.0
        %2597 = vmatprep.subr.mxu0 0.0
        %2598 = vmatpush1.msra.mxu0 0.0
        %2599 = vmatprep.subr.mxu0 0.0
        %2600 = vmatpush1.msra.mxu0 0.0
        %2601 = vmatprep.subr.mxu0 0.0
        %2602 = vmatpush1.msra.mxu0 0.0
        %2603 = vmatprep.subr.mxu0 0.0
        %2604 = vmatpush1.msra.mxu0 0.0
        %2605 = vmatprep.subr.mxu0 0.0
        %2606 = vmatpush1.msra.mxu0 0.0
        %2607 = vmatprep.subr.mxu0 0.0
        %2608 = vmatpush1.msra.mxu0 0.0
        %2609 = vmatprep.subr.mxu0 0.0
        %2610 = vmatpush1.msra.mxu0 0.0
        %2611 = vmatprep.subr.mxu0 0.0
        %2612 = vmatpush1.msra.mxu0 0.0
        %2613 = vmatprep.subr.mxu0 0.0
        %2614 = vmatpush1.msra.mxu0 0.0
        %2615 = vmatprep.subr.mxu0 0.0
        %2616 = vmatpush1.msra.mxu0 0.0
        %2617 = vmatprep.subr.mxu0 0.0
        %2618 = vmatpush1.msra.mxu0 0.0
        %2619 = vmatprep.subr.mxu0 0.0
        %2620 = vmatpush1.msra.mxu0 0.0
        %2621 = vmatprep.subr.mxu0 0.0
        %2622 = vmatpush1.msra.mxu0 0.0
        %2623 = vmatprep.subr.mxu0 0.0
        %2624 = vmatpush1.msra.mxu0 0.0
        %2625 = vmatprep.mubr.f32.mxu0 0.0
        %2626 = vmatmul.mubr.f32.gmra.mrb[0].mxu0 %v2556
        %v2627 = vpop.f32.mrb[0].mxu0
        %v2628 = vadd.f32 %v2553, %v2627
        %v2629 = vpop.f32.mrb[0].mxu0
        %2630 = vmatprep.mubr.f32.mxu0 0.0
        %2631 = vmatmul.mubr.f32.gmra.mrb[0].mxu0 %v2559
        %v2632 = vpop.f32.mrb[0].mxu0
        %v2633 = vadd.f32 %v2553, %v2632
        %v2634 = vpop.f32.mrb[0].mxu0
        %2635 = vdwg.mxu0
        %v2636 = vmax.f32 %v2628, 0.0
        %v2637 = vmax.f32 %v2633, 0.0
        %v2638 = vld [vmem:[%s890] sm:$0xff]
        %v2639 = vld [vmem:[%s890 + $0x8] sm:$0xff]
        %v2640 = vld [vmem:[%s890 + $0x10] sm:$0xff]
        %v2641 = vld [vmem:[%s890 + $0x18] sm:$0xff]
        %v2642 = vld [vmem:[%s890 + $0x20] sm:$0xff]
        %v2643 = vld [vmem:[%s890 + $0x28] sm:$0xff]
        %v2644 = vld [vmem:[%s890 + $0x30] sm:$0xff]
        %v2645 = vld [vmem:[%s890 + $0x38] sm:$0xff]
        %v2646 = vld [vmem:[%s757] sm:$0x1]
        %v2648 = vlaneseq
        %v2649 = vshrl.u32 %v2648, 7
        %v2650 = vsub.s32 0, %v2649
        %v2651 = vrot.slane %v2646, %v2650
        %vm2653 = vcmask 523264
        %v2655 = vsel %vm2653, %v2636, 0
        %v2658 = vsel %vm2653, %v2637, 0
        %2660 = vmatprep.subr.mxu0 0.0
        %2661 = vmatpush1.msra.mxu0 %v2638
        %2662 = vmatprep.subr.mxu0 0.0
        %2663 = vmatpush1.msra.mxu0 %v2639
        %2664 = vmatprep.subr.mxu0 0.0
        %2665 = vmatpush1.msra.mxu0 %v2640
        %2666 = vmatprep.subr.mxu0 0.0
        %2667 = vmatpush1.msra.mxu0 %v2641
        %2668 = vmatprep.subr.mxu0 0.0
        %2669 = vmatpush1.msra.mxu0 %v2642
        %2670 = vmatprep.subr.mxu0 0.0
        %2671 = vmatpush1.msra.mxu0 %v2643
        %2672 = vmatprep.subr.mxu0 0.0
        %2673 = vmatpush1.msra.mxu0 %v2644
        %2674 = vmatprep.subr.mxu0 0.0
        %2675 = vmatpush1.msra.mxu0 %v2645
        %2676 = vmatprep.subr.mxu0 0.0
        %2677 = vmatpush1.msra.mxu0 0.0
        %2678 = vmatprep.subr.mxu0 0.0
        %2679 = vmatpush1.msra.mxu0 0.0
        %2680 = vmatprep.subr.mxu0 0.0
        %2681 = vmatpush1.msra.mxu0 0.0
        %2682 = vmatprep.subr.mxu0 0.0
        %2683 = vmatpush1.msra.mxu0 0.0
        %2684 = vmatprep.subr.mxu0 0.0
        %2685 = vmatpush1.msra.mxu0 0.0
        %2686 = vmatprep.subr.mxu0 0.0
        %2687 = vmatpush1.msra.mxu0 0.0
        %2688 = vmatprep.subr.mxu0 0.0
        %2689 = vmatpush1.msra.mxu0 0.0
        %2690 = vmatprep.subr.mxu0 0.0
        %2691 = vmatpush1.msra.mxu0 0.0
        %2692 = vmatprep.subr.mxu0 0.0
        %2693 = vmatpush1.msra.mxu0 0.0
        %2694 = vmatprep.subr.mxu0 0.0
        %2695 = vmatpush1.msra.mxu0 0.0
        %2696 = vmatprep.subr.mxu0 0.0
        %2697 = vmatpush1.msra.mxu0 0.0
        %2698 = vmatprep.subr.mxu0 0.0
        %2699 = vmatpush1.msra.mxu0 0.0
        %2700 = vmatprep.subr.mxu0 0.0
        %2701 = vmatpush1.msra.mxu0 0.0
        %2702 = vmatprep.subr.mxu0 0.0
        %2703 = vmatpush1.msra.mxu0 0.0
        %2704 = vmatprep.subr.mxu0 0.0
        %2705 = vmatpush1.msra.mxu0 0.0
        %2706 = vmatprep.subr.mxu0 0.0
        %2707 = vmatpush1.msra.mxu0 0.0
        %2708 = vmatprep.subr.mxu0 0.0
        %2709 = vmatpush1.msra.mxu0 0.0
        %2710 = vmatprep.subr.mxu0 0.0
        %2711 = vmatpush1.msra.mxu0 0.0
        %2712 = vmatprep.subr.mxu0 0.0
        %2713 = vmatpush1.msra.mxu0 0.0
        %2714 = vmatprep.subr.mxu0 0.0
        %2715 = vmatpush1.msra.mxu0 0.0
        %2716 = vmatprep.subr.mxu0 0.0
        %2717 = vmatpush1.msra.mxu0 0.0
        %2718 = vmatprep.subr.mxu0 0.0
        %2719 = vmatpush1.msra.mxu0 0.0
        %2720 = vmatprep.subr.mxu0 0.0
        %2721 = vmatpush1.msra.mxu0 0.0
        %2722 = vmatprep.subr.mxu0 0.0
        %2723 = vmatpush1.msra.mxu0 0.0
        %2724 = vmatprep.mubr.f32.mxu0 0.0
        %2725 = vmatmul.mubr.f32.gmra.mrb[0].mxu0 %v2655
        %v2726 = vpop.f32.mrb[0].mxu0
        %v2727 = vadd.f32 %v2651, %v2726
        %v2728 = vpop.f32.mrb[0].mxu0
        %2729 = vmatprep.mubr.f32.mxu0 0.0
        %2730 = vmatmul.mubr.f32.gmra.mrb[0].mxu0 %v2658
        %v2731 = vpop.f32.mrb[0].mxu0
        %v2732 = vadd.f32 %v2651, %v2731
        %v2733 = vpop.f32.mrb[0].mxu0
        %2734 = vdwg.mxu0
        %v2735 = vadd.f32 %v2542, %v2727
        %v2736 = vadd.f32 %v2543, %v2732
        %v2737 = vld [vmem:[%s765] sm:$0x1]
        %v2738 = vld [vmem:[%s773] sm:$0x1]
        %v2739 = vsel %vm954, %v2735, 0.0
        %2740 = vadd.xlane.f32.xlu0 %v2739
        %v2741 = vpop.xlane.xlu0 %2740
        %v2742 = vsel %vm954, %v2736, 0.0
        %2743 = vadd.xlane.f32.xlu0 %v2742
        %v2744 = vpop.xlane.xlu0 %2743
        %v2745 = vmul.f32 %v2741, %v2507
        %v2746 = vmul.f32 %v2744, %v2507
        %v2747 = vsub.f32 %v2735, %v2745
        %v2748 = vsub.f32 %v2736, %v2746
        %v2749 = vmul.f32 %v2747, %v2747
        %v2750 = vmul.f32 %v2748, %v2748
        %v2751 = vsel %vm954, %v2749, 0.0
        %2752 = vadd.xlane.f32.xlu0 %v2751
        %v2753 = vpop.xlane.xlu0 %2752
        %v2754 = vsel %vm954, %v2750, 0.0
        %2755 = vadd.xlane.f32.xlu0 %v2754
        %v2756 = vpop.xlane.xlu0 %2755
        %v2757 = vmul.f32 %v2753, %v2507
        %v2758 = vmul.f32 %v2756, %v2507
        %v2759 = vadd.f32 %v2757, 1e-05
        %v2760 = vadd.f32 %v2758, 1e-05
        %v2761 = vrsqrt.pop %v2759
        %v2762 = vrsqrt.pop %v2760
        %v2763 = vmul.f32 %v2747, %v2761
        %v2764 = vmul.f32 %v2748, %v2762
        %v2766 = vlaneseq
        %v2767 = vshrl.u32 %v2766, 7
        %v2768 = vsub.s32 0, %v2767
        %v2769 = vrot.slane %v2737, %v2768
        %v2771 = vmul.f32 %v2763, %v2769
        %v2772 = vmul.f32 %v2764, %v2769
        %v2774 = vlaneseq
        %v2775 = vshrl.u32 %v2774, 7
        %v2776 = vsub.s32 0, %v2775
        %v2777 = vrot.slane %v2738, %v2776
        %v2779 = vadd.f32 %v2771, %v2777
        %v2780 = vadd.f32 %v2772, %v2777
        %2781 = vst.msk [vmem:[#allocation2] sm:$0xff] %vm954, %v2779
        %2782 = vst.msk [vmem:[#allocation2 + $0x8] sm:$0xff] %vm954, %v2780
        %p2783 = scmp.eq.s32.totalorder %s45, 15
        // Predicated region
        $region129: #{tpu_custom_call.1} parent=87 // pred_check
          %p2784 = pneg %p2783
        $region130: #{tpu_custom_call.1} parent=87 // pred_check_branch
          %2786 = sbr.rel (%p2784) target = $region132
        $region131: #{tpu_custom_call.1} parent=87 // pred_region
          %v2787 = vld [vmem:[%s15] sm:$0x1]
          %v2788 = vld [vmem:[%s16] sm:$0x1]
          %v2789 = vsel %vm954, %v2779, 0.0
          %2790 = vadd.xlane.f32.xlu0 %v2789
          %v2791 = vpop.xlane.xlu0 %2790
          %v2792 = vsel %vm954, %v2780, 0.0
          %2793 = vadd.xlane.f32.xlu0 %v2792
          %v2794 = vpop.xlane.xlu0 %2793
          %v2795 = vmul.f32 %v2791, %v2507
          %v2796 = vmul.f32 %v2794, %v2507
          %v2797 = vsub.f32 %v2779, %v2795
          %v2798 = vsub.f32 %v2780, %v2796
          %v2799 = vmul.f32 %v2797, %v2797
          %v2800 = vmul.f32 %v2798, %v2798
          %v2801 = vsel %vm954, %v2799, 0.0
          %2802 = vadd.xlane.f32.xlu0 %v2801
          %v2803 = vpop.xlane.xlu0 %2802
          %v2804 = vsel %vm954, %v2800, 0.0
          %2805 = vadd.xlane.f32.xlu0 %v2804
          %v2806 = vpop.xlane.xlu0 %2805
          %v2807 = vmul.f32 %v2803, %v2507
          %v2808 = vmul.f32 %v2806, %v2507
          %v2809 = vadd.f32 %v2807, 1e-05
          %v2810 = vadd.f32 %v2808, 1e-05
          %v2811 = vrsqrt.pop %v2809
          %v2812 = vrsqrt.pop %v2810
          %v2813 = vmul.f32 %v2797, %v2811
          %v2814 = vmul.f32 %v2798, %v2812
          %v2816 = vlaneseq
          %v2817 = vshrl.u32 %v2816, 7
          %v2818 = vsub.s32 0, %v2817
          %v2819 = vrot.slane %v2787, %v2818
          %v2821 = vmul.f32 %v2813, %v2819
          %v2822 = vmul.f32 %v2814, %v2819
          %v2824 = vlaneseq
          %v2825 = vshrl.u32 %v2824, 7
          %v2826 = vsub.s32 0, %v2825
          %v2827 = vrot.slane %v2788, %v2826
          %v2829 = vadd.f32 %v2821, %v2827
          %v2830 = vadd.f32 %v2822, %v2827
          %2831 = vst.msk [vmem:[#allocation19] sm:$0xff] %vm954, %v2829
          %2832 = vst.msk [vmem:[#allocation19 + $0x8] sm:$0xff] %vm954, %v2830
        $region132: #{tpu_custom_call.1} parent=87 // pred_fallthru
          _
        // Predicated region
        $region133: #{tpu_custom_call.1} parent=87 // pred_check
          %p2833 = pneg %p497
        $region134: #{tpu_custom_call.1} parent=87 // pred_check_branch
          %2835 = sbr.rel (%p2833) target = $region136
        $region135: #{tpu_custom_call.1} parent=87 // pred_region
          %s2836 = smul.u32 2, %s44
          %s2838 = ssub.s32 256, 256
          %2839 = vsyncadd [#allocation6], %s2838
          %s2840 = smul.addr %s2836, 128
          %s2841 = scalar_lea.hbm %s17, %s2840
          %s2842 = sshll.u32 [#allocation19], 4
          %s2843 = int_to_ptr.vmem [resolvable:$true] %s2842
          %2848 = dma.vmem_to_hbm [thread:$0]  %s2843, 256, %s2841, [#allocation6], 128, 128, 8
        $region136: #{tpu_custom_call.1} parent=87 // pred_fallthru
          _
        // Predicated region
        $region137: #{tpu_custom_call.1} parent=87 // pred_check
          %p2849 = pneg %p497
        $region138: #{tpu_custom_call.1} parent=87 // pred_check_branch
          %2851 = sbr.rel (%p2849) target = $region140
        $region139: #{tpu_custom_call.1} parent=87 // pred_region
          %2852 = dma.done [#allocation6], 256
        $region140: #{tpu_custom_call.1} parent=87 // pred_fallthru
          _
      $region88: #{tpu_custom_call.1} parent=5 // pred_fallthru
        _
      %p2853 = scmp.le.s32.totalorder 2, %s35
      // Predicated region
      $region141: #{tpu_custom_call.1} parent=5 // pred_check
        %p2854 = pneg %p2853
      $region142: #{tpu_custom_call.1} parent=5 // pred_check_branch
        %2856 = sbr.rel (%p2854) target = $region144
      $region143: #{tpu_custom_call.1} parent=5 // pred_region
        %s2857 = ssub.s32 %s35, 2
      $region144: #{tpu_custom_call.1} parent=5 // pred_fallthru
        _
    $region6: #{tpu_custom_call.1} parent=1 // loop_footer
      %s39 = sadd.s32 1, %s35
    $region7: #{tpu_custom_call.1} parent=1 // loop_footer_branch
      %34 = sbr.rel target = $region3
    $region8: #{tpu_custom_call.1} parent=1 // loop_exit
      _
    %2858 = vsyncpa [#allocation5], 1
    %s2859 = scalar_lea.sflag [#allocation5], 1
    %2860 = vsyncpa %s2859, 1
    %2861 = vsyncpa [#allocation8], 1
    %2862 = vsyncpa [#allocation11], 1
    %s2863 = scalar_lea.sflag [#allocation11], 1
    %2864 = vsyncpa %s2863, 1
    %2865 = vsyncpa [#allocation14], 1
    %s2866 = scalar_lea.sflag [#allocation14], 1
    %2867 = vsyncpa %s2866, 1
    %2868 = vsyncpa [#allocation17], 1
    %s2869 = scalar_lea.sflag [#allocation17], 1
    %2870 = vsyncpa %s2869, 1
    %2871 = vsyncpa [#allocation6], 1
    %s2872 = scalar_lea.sflag [#allocation6], 1
    %2873 = vsyncpa %s2872, 1

</llo_original>
